<compile_context>
chip_gen: v7x
topology: tpu7x:2x2x1
jax: 0.10.0
libtpu: 0.0.40
codegen_flags: <defaults>
</compile_context>

<pallas_src>
import functools

import jax
import jax.numpy as jnp
import numpy as np
from jax.experimental import pallas as pl
from jax.experimental.pallas import tpu as pltpu


def _attn_block_kernel(x_ref, gamma_ref, beta_ref, mask_cg_ref, mask_gc_ref,
                       wqkv_ref, bqkv_ref, wp_ref, bp_ref,
                       o_ref, qkv_ref, *, tq):
    i = pl.program_id(1)
    n_tiles = pl.num_programs(1)
    C, N = x_ref.shape
    G = mask_gc_ref.shape[0]
    cg = C // G
    cnt = float(N * cg)

    # ---------------- per-batch prologue (query tile 0 only) ----------------
    @pl.when(i == 0)
    def _prologue():
        x = x_ref[...]                                             # (C, N) f32

        # GroupNorm(32, eps=1e-6), two-pass statistics via one-hot group masks
        sum_c = jnp.sum(x, axis=1, keepdims=True)                  # (C, 1)
        mean_g = jnp.dot(mask_gc_ref[...], sum_c,
                         preferred_element_type=jnp.float32) / cnt  # (G, 1)
        mean_c = jnp.dot(mask_cg_ref[...], mean_g,
                         preferred_element_type=jnp.float32)        # (C, 1)
        d = x - mean_c
        ssq_c = jnp.sum(d * d, axis=1, keepdims=True)              # (C, 1)
        var_g = jnp.dot(mask_gc_ref[...], ssq_c,
                        preferred_element_type=jnp.float32) / cnt   # (G, 1)
        var_c = jnp.dot(mask_cg_ref[...], var_g,
                        preferred_element_type=jnp.float32)         # (C, 1)
        h = d * jax.lax.rsqrt(var_c + 1e-6) * gamma_ref[...] + beta_ref[...]

        # Fused q/k/v 1x1 convs: single (3C, C) @ (C, N) bf16 matmul, f32 acc.
        qkv = jnp.dot(wqkv_ref[...], h.astype(jnp.bfloat16),
                      preferred_element_type=jnp.float32) + bqkv_ref[...]
        qkv_ref[...] = qkv.astype(jnp.bfloat16)

        # The resident output block doubles as the f32 attention accumulator.
        o_ref[...] = jnp.zeros_like(o_ref)

    # -------- attention for this query-row tile (no (N,N) intermediate) -----
    i0 = pl.multiple_of(i * tq, tq)
    q_t = qkv_ref[0:C, pl.ds(i0, tq)]              # (C, tq) bf16 (scale folded)
    k = qkv_ref[C:2 * C, :]                        # (C, N)  bf16
    v_t = qkv_ref[2 * C:3 * C, pl.ds(i0, tq)]      # (C, tq) bf16

    # s[i, j] = (q_i . k_j) / sqrt(C)   (scale pre-folded into Wq, bq)
    s = jax.lax.dot_general(q_t, k, (((0,), (0,)), ((), ())),
                            preferred_element_type=jnp.float32)     # (tq, N)
    m = jnp.max(s, axis=1, keepdims=True)
    p = jnp.exp(s - m)
    p = p * pl.reciprocal(jnp.sum(p, axis=1, keepdims=True), approx=True)

    # h_[c, j] += sum_i v[c, i] * p[i, j]     (exactly the module's einsum)
    o_ref[...] += jnp.dot(v_t, p.astype(jnp.bfloat16),
                          preferred_element_type=jnp.float32)

    # ---------------- per-batch epilogue (last query tile) ------------------
    @pl.when(i == n_tiles - 1)
    def _epilogue():
        acc = o_ref[...]                                           # (C, N) f32
        proj = jnp.dot(wp_ref[...], acc.astype(jnp.bfloat16),
                       preferred_element_type=jnp.float32) + bp_ref[...]
        o_ref[...] = (x_ref[...] + proj).astype(o_ref.dtype)


def _pick_tq(n):
    # Prefer >=2 tiles of a lane-aligned size; tiny N falls back to one tile.
    for t in (256, 128):
        if n % t == 0 and n // t >= 2:
            return t
    return n


def _vmem_limit_bytes(C, N, tq, G):
    f32, bf16 = 4, 2
    est = 0
    est += 2 * C * N * f32                     # x block (double-buffered)
    est += 2 * C * N * f32                     # output block (double-buffered)
    est += 3 * C * N * bf16                    # fused qkv scratch
    est += 2 * (3 * C * C + C * C) * bf16      # weights (double-buffered)
    est += 3 * tq * N * f32                    # score / prob temporaries
    est += 2 * C * N * f32                     # GroupNorm temporaries headroom
    est += 2 * C * G * f32 + 16 * C * f32      # masks / small vectors
    est = int(est * 1.25) + (4 << 20)
    return min(max(est, 32 << 20), 100 << 20)


def attn_block(x_nchw, params, num_groups=32):
    """Fused AttnBlock forward. x_nchw: (B, C, H, W) float32 -> (B, C, H, W)."""
    B, C, H, W = x_nchw.shape
    N = H * W
    G = num_groups
    assert C % G == 0, "GroupNorm requires channels divisible by num_groups"
    cg = C // G
    tq = _pick_tq(N)
    n_tiles = N // tq

    f32 = jnp.float32
    # NCHW -> (B, C, N) is a free reshape (no transpose round trips).
    x = x_nchw.reshape(B, C, N).astype(f32)

    scale = C ** (-0.5)
    # Fused qkv weight (3C, C); attention scale folded into the q slice.
    wq = params["wq"].reshape(C, C).astype(f32) * scale
    wk = params["wk"].reshape(C, C).astype(f32)
    wv = params["wv"].reshape(C, C).astype(f32)
    w_qkv = jnp.concatenate([wq, wk, wv], axis=0).astype(jnp.bfloat16)   # (3C, C)
    b_qkv = jnp.concatenate([params["bq"].astype(f32) * scale,
                             params["bk"].astype(f32),
                             params["bv"].astype(f32)]).reshape(3 * C, 1)
    w_p = params["wp"].reshape(C, C).astype(jnp.bfloat16)
    b_p = params["bp"].reshape(C, 1).astype(f32)
    gamma = params["gamma"].reshape(C, 1).astype(f32)
    beta = params["beta"].reshape(C, 1).astype(f32)

    ch = jnp.arange(C, dtype=jnp.int32)
    gr = jnp.arange(G, dtype=jnp.int32)
    mask_cg = (ch[:, None] // cg == gr[None, :]).astype(f32)     # (C, G)
    mask_gc = mask_cg.T                                          # (G, C)

    full = lambda shape: pl.BlockSpec(shape, lambda b, i: (0,) * len(shape))
    kernel = functools.partial(_attn_block_kernel, tq=tq)

    out = pl.pallas_call(
        kernel,
        out_shape=jax.ShapeDtypeStruct((B, C, N), f32),
        grid_spec=pltpu.PrefetchScalarGridSpec(
            num_scalar_prefetch=0,
            grid=(B, n_tiles),
            in_specs=[
                pl.BlockSpec((None, C, N), lambda b, i: (b, 0, 0)),  # x, resident/batch
                full((C, 1)),        # gamma
                full((C, 1)),        # beta
                full((C, G)),        # channel -> group one-hot
                full((G, C)),        # group -> channel one-hot
                full((3 * C, C)),    # fused qkv weight (bf16)
                full((3 * C, 1)),    # fused qkv bias (f32)
                full((C, C)),        # proj weight (bf16)
                full((C, 1)),        # proj bias (f32)
            ],
            out_specs=pl.BlockSpec((None, C, N), lambda b, i: (b, 0, 0)),
            scratch_shapes=[pltpu.VMEM((3 * C, N), jnp.bfloat16)],
        ),
        compiler_params=pltpu.CompilerParams(
            # batch axis across TensorCores; the query-tile axis accumulates
            # into the resident output block so it must stay "arbitrary".
            dimension_semantics=("parallel", "arbitrary"),
            vmem_limit_bytes=_vmem_limit_bytes(C, N, tq, G),
        ),
    )(x, gamma, beta, mask_cg, mask_gc, w_qkv, b_qkv, w_p, b_p)

    return out.reshape(B, C, H, W)


def reference_forward(x, params, num_groups=32):
    """Pure-JAX f32 transcription of the given PyTorch AttnBlock.forward."""
    B, C, H, W = x.shape
    N = H * W
    G = num_groups
    x = x.astype(jnp.float32)
    xg = x.reshape(B, G, C // G, H, W)
    mean = jnp.mean(xg, axis=(2, 3, 4), keepdims=True)
    var = jnp.mean((xg - mean) ** 2, axis=(2, 3, 4), keepdims=True)
    h = ((xg - mean) / jnp.sqrt(var + 1e-6)).reshape(B, C, H, W)
    h = h * params["gamma"][None, :, None, None] + params["beta"][None, :, None, None]

    def conv1x1(t, w, b):
        return jnp.einsum("oc,bchw->bohw", w.reshape(C, C), t) + b[None, :, None, None]

    q = conv1x1(h, params["wq"], params["bq"])
    k = conv1x1(h, params["wk"], params["bk"])
    v = conv1x1(h, params["wv"], params["bv"])
    q = q.reshape(B, C, N).transpose(0, 2, 1)          # b (h w) c
    k = k.reshape(B, C, N)                             # b c (h w)
    v = v.reshape(B, C, N)                             # b c (h w)
    w_ = jnp.einsum("bic,bcj->bij", q, k) * (C ** (-0.5))
    w_ = jax.nn.softmax(w_, axis=-1)
    # Exactly the module's einsum ('b c i, b i j -> b c j'): the attention
    # matrix is NOT permuted before aggregating the values.
    h_ = jnp.einsum("bci,bij->bcj", v, w_).reshape(B, C, H, W)
    h_ = conv1x1(h_, params["wp"], params["bp"])
    return x + h_


if __name__ == "__main__":
    # C must be divisible by 32 (GroupNorm groups); N=256 gives 2 query tiles.
    B, C, H, W = 2, 128, 16, 16
    key = jax.random.PRNGKey(0)
    keys = jax.random.split(key, 10)

    x = jax.random.normal(keys[0], (B, C, H, W), dtype=jnp.float32)
    params = {
        "gamma": 1.0 + 0.1 * jax.random.normal(keys[1], (C,), dtype=jnp.float32),
        "beta": 0.1 * jax.random.normal(keys[2], (C,), dtype=jnp.float32),
        "wq": 0.05 * jax.random.normal(keys[3], (C, C, 1, 1), dtype=jnp.float32),
        "bq": 0.01 * jax.random.normal(keys[4], (C,), dtype=jnp.float32),
        "wk": 0.05 * jax.random.normal(keys[5], (C, C, 1, 1), dtype=jnp.float32),
        "bk": 0.01 * jax.random.normal(keys[6], (C,), dtype=jnp.float32),
        "wv": 0.05 * jax.random.normal(keys[7], (C, C, 1, 1), dtype=jnp.float32),
        "bv": 0.01 * jax.random.normal(keys[8], (C,), dtype=jnp.float32),
        "wp": 0.05 * jax.random.normal(keys[9], (C, C, 1, 1), dtype=jnp.float32),
        "bp": jnp.zeros((C,), dtype=jnp.float32),
    }

    y = jax.block_until_ready(attn_block(x, params))
    y_ref = jax.block_until_ready(reference_forward(x, params))

    # bf16 MXU operands (with f32 accumulation) => relaxed tolerance vs the
    # pure-f32 reference; observed error is O(1e-3).
    np.testing.assert_allclose(np.asarray(y), np.asarray(y_ref), rtol=2e-2, atol=2e-2)
    print("KERNEL_OK")
</pallas_src>

<mosaic_0001>
module attributes {stable_mosaic.version = 11 : i64} {
  func.func @_attn_block_kernel(%arg0: i32, %arg1: i32, %arg2: memref<1x128x256xf32, #tpu.memory_space<vmem>>, %arg3: memref<128x1xf32, #tpu.memory_space<vmem>>, %arg4: memref<128x1xf32, #tpu.memory_space<vmem>>, %arg5: memref<128x32xf32, #tpu.memory_space<vmem>>, %arg6: memref<32x128xf32, #tpu.memory_space<vmem>>, %arg7: memref<384x128xbf16, #tpu.memory_space<vmem>>, %arg8: memref<384x1xf32, #tpu.memory_space<vmem>>, %arg9: memref<128x128xbf16, #tpu.memory_space<vmem>>, %arg10: memref<128x1xf32, #tpu.memory_space<vmem>>, %arg11: memref<1x128x256xf32, #tpu.memory_space<vmem>>, %arg12: memref<384x256xbf16, #tpu.memory_space<vmem>>) attributes {dimension_semantics = [#tpu.dimension_semantics<parallel>, #tpu.dimension_semantics<arbitrary>], iteration_bounds = array<i64: 2, 2>, scalar_prefetch = 0 : i64, scratch_operands = 1 : i64, tpu.core_type = #tpu.core_type<tc>, window_params = [{transform_indices = @transform_0, window_bounds = array<i64: 1, 128, 256>}, {pipeline_mode = #tpu.pipeline_mode<synchronous>, transform_indices = @transform_1, window_bounds = array<i64: 128, 1>}, {pipeline_mode = #tpu.pipeline_mode<synchronous>, transform_indices = @transform_2, window_bounds = array<i64: 128, 1>}, {pipeline_mode = #tpu.pipeline_mode<synchronous>, transform_indices = @transform_3, window_bounds = array<i64: 128, 32>}, {pipeline_mode = #tpu.pipeline_mode<synchronous>, transform_indices = @transform_4, window_bounds = array<i64: 32, 128>}, {pipeline_mode = #tpu.pipeline_mode<synchronous>, transform_indices = @transform_5, window_bounds = array<i64: 384, 128>}, {pipeline_mode = #tpu.pipeline_mode<synchronous>, transform_indices = @transform_6, window_bounds = array<i64: 384, 1>}, {pipeline_mode = #tpu.pipeline_mode<synchronous>, transform_indices = @transform_7, window_bounds = array<i64: 128, 128>}, {pipeline_mode = #tpu.pipeline_mode<synchronous>, transform_indices = @transform_8, window_bounds = array<i64: 128, 1>}, {transform_indices = @transform_9, window_bounds = array<i64: 1, 128, 256>}]} {
    %c0_i32 = arith.constant 0 : i32
    %0 = arith.cmpi eq, %arg1, %c0_i32 : i32
    %1 = arith.extui %0 : i1 to i32
    %c0_i32_0 = arith.constant 0 : i32
    %2 = arith.cmpi ne, %1, %c0_i32_0 : i32
    scf.if %2 {
      %c0_12 = arith.constant 0 : index
      %c0_13 = arith.constant 0 : index
      %c0_14 = arith.constant 0 : index
      %32 = vector.load %arg2[%c0_12, %c0_13, %c0_14] : memref<1x128x256xf32, #tpu.memory_space<vmem>>, vector<1x128x256xf32>
      %33 = vector.shape_cast %32 : vector<1x128x256xf32> to vector<128x256xf32>
      %cst_15 = arith.constant dense<0.000000e+00> : vector<128xf32>
      %34 = vector.multi_reduction <add>, %33, %cst_15 [1] : vector<128x256xf32> to vector<128xf32>
      %35 = vector.shape_cast %34 : vector<128xf32> to vector<128x1xf32>
      %c0_16 = arith.constant 0 : index
      %c0_17 = arith.constant 0 : index
      %36 = vector.load %arg6[%c0_16, %c0_17] : memref<32x128xf32, #tpu.memory_space<vmem>>, vector<32x128xf32>
      %cst_18 = arith.constant dense<0.000000e+00> : vector<32x1xf32>
      %37 = tpu.matmul %36, %35, %cst_18 {dimension_numbers = #tpu.dot_dimension_numbers<[1], [0], [0], [1], [0, 0, 1, 1], [], []>} : vector<32x128xf32>, vector<128x1xf32>, vector<32x1xf32> -> vector<32x1xf32>
      %cst_19 = arith.constant 1.024000e+03 : f32
      %38 = vector.broadcast %cst_19 : f32 to vector<32x1xf32>
      %39 = arith.divf %37, %38 : vector<32x1xf32>
      %c0_20 = arith.constant 0 : index
      %c0_21 = arith.constant 0 : index
      %40 = vector.load %arg5[%c0_20, %c0_21] : memref<128x32xf32, #tpu.memory_space<vmem>>, vector<128x32xf32>
      %cst_22 = arith.constant dense<0.000000e+00> : vector<128x1xf32>
      %41 = tpu.matmul %40, %39, %cst_22 {dimension_numbers = #tpu.dot_dimension_numbers<[1], [0], [0], [1], [0, 0, 1, 1], [], []>} : vector<128x32xf32>, vector<32x1xf32>, vector<128x1xf32> -> vector<128x1xf32>
      %42 = vector.broadcast %41 : vector<128x1xf32> to vector<128x256xf32>
      %43 = arith.subf %33, %42 : vector<128x256xf32>
      %44 = arith.mulf %43, %43 : vector<128x256xf32>
      %cst_23 = arith.constant dense<0.000000e+00> : vector<128xf32>
      %45 = vector.multi_reduction <add>, %44, %cst_23 [1] : vector<128x256xf32> to vector<128xf32>
      %46 = vector.shape_cast %45 : vector<128xf32> to vector<128x1xf32>
      %c0_24 = arith.constant 0 : index
      %c0_25 = arith.constant 0 : index
      %47 = vector.load %arg6[%c0_24, %c0_25] : memref<32x128xf32, #tpu.memory_space<vmem>>, vector<32x128xf32>
      %cst_26 = arith.constant dense<0.000000e+00> : vector<32x1xf32>
      %48 = tpu.matmul %47, %46, %cst_26 {dimension_numbers = #tpu.dot_dimension_numbers<[1], [0], [0], [1], [0, 0, 1, 1], [], []>} : vector<32x128xf32>, vector<128x1xf32>, vector<32x1xf32> -> vector<32x1xf32>
      %cst_27 = arith.constant 1.024000e+03 : f32
      %49 = vector.broadcast %cst_27 : f32 to vector<32x1xf32>
      %50 = arith.divf %48, %49 : vector<32x1xf32>
      %c0_28 = arith.constant 0 : index
      %c0_29 = arith.constant 0 : index
      %51 = vector.load %arg5[%c0_28, %c0_29] : memref<128x32xf32, #tpu.memory_space<vmem>>, vector<128x32xf32>
      %cst_30 = arith.constant dense<0.000000e+00> : vector<128x1xf32>
      %52 = tpu.matmul %51, %50, %cst_30 {dimension_numbers = #tpu.dot_dimension_numbers<[1], [0], [0], [1], [0, 0, 1, 1], [], []>} : vector<128x32xf32>, vector<32x1xf32>, vector<128x1xf32> -> vector<128x1xf32>
      %cst_31 = arith.constant 9.99999997E-7 : f32
      %53 = vector.broadcast %cst_31 : f32 to vector<128x1xf32>
      %54 = arith.addf %52, %53 : vector<128x1xf32>
      %55 = math.rsqrt %54 : vector<128x1xf32>
      %56 = vector.broadcast %55 : vector<128x1xf32> to vector<128x256xf32>
      %57 = arith.mulf %43, %56 : vector<128x256xf32>
      %c0_32 = arith.constant 0 : index
      %c0_33 = arith.constant 0 : index
      %58 = vector.load %arg3[%c0_32, %c0_33] : memref<128x1xf32, #tpu.memory_space<vmem>>, vector<128x1xf32>
      %59 = vector.broadcast %58 : vector<128x1xf32> to vector<128x256xf32>
      %60 = arith.mulf %57, %59 : vector<128x256xf32>
      %c0_34 = arith.constant 0 : index
      %c0_35 = arith.constant 0 : index
      %61 = vector.load %arg4[%c0_34, %c0_35] : memref<128x1xf32, #tpu.memory_space<vmem>>, vector<128x1xf32>
      %62 = vector.broadcast %61 : vector<128x1xf32> to vector<128x256xf32>
      %63 = arith.addf %60, %62 : vector<128x256xf32>
      %c0_36 = arith.constant 0 : index
      %c0_37 = arith.constant 0 : index
      %64 = vector.load %arg7[%c0_36, %c0_37] : memref<384x128xbf16, #tpu.memory_space<vmem>>, vector<384x128xbf16>
      %65 = arith.truncf %63 : vector<128x256xf32> to vector<128x256xbf16>
      %cst_38 = arith.constant dense<0.000000e+00> : vector<384x256xf32>
      %66 = tpu.matmul %64, %65, %cst_38 {dimension_numbers = #tpu.dot_dimension_numbers<[1], [0], [0], [1], [0, 0, 1, 1], [], []>} : vector<384x128xbf16>, vector<128x256xbf16>, vector<384x256xf32> -> vector<384x256xf32>
      %c0_39 = arith.constant 0 : index
      %c0_40 = arith.constant 0 : index
      %67 = vector.load %arg8[%c0_39, %c0_40] : memref<384x1xf32, #tpu.memory_space<vmem>>, vector<384x1xf32>
      %68 = vector.broadcast %67 : vector<384x1xf32> to vector<384x256xf32>
      %69 = arith.addf %66, %68 : vector<384x256xf32>
      %70 = arith.truncf %69 : vector<384x256xf32> to vector<384x256xbf16>
      %c0_41 = arith.constant 0 : index
      %c0_42 = arith.constant 0 : index
      %71 = vector.load %arg12[%c0_41, %c0_42] : memref<384x256xbf16, #tpu.memory_space<vmem>>, vector<384x256xbf16>
      tpu.vector_store %arg12[%c0_41, %c0_42], %70 {strides = array<i32>} : memref<384x256xbf16, #tpu.memory_space<vmem>>, vector<384x256xbf16>,
      %cst_43 = arith.constant 0.000000e+00 : f32
      %72 = vector.broadcast %cst_43 : f32 to vector<128x256xf32>
      %c0_44 = arith.constant 0 : index
      %c0_45 = arith.constant 0 : index
      %c0_46 = arith.constant 0 : index
      %73 = vector.load %arg11[%c0_44, %c0_45, %c0_46] : memref<1x128x256xf32, #tpu.memory_space<vmem>>, vector<1x128x256xf32>
      %74 = vector.shape_cast %73 : vector<1x128x256xf32> to vector<128x256xf32>
      %75 = vector.shape_cast %72 : vector<128x256xf32> to vector<1x128x256xf32>
      tpu.vector_store %arg11[%c0_44, %c0_45, %c0_46], %75 {strides = array<i32>} : memref<1x128x256xf32, #tpu.memory_space<vmem>>, vector<1x128x256xf32>,
    } else {
    }
    %c128_i32 = arith.constant 128 : i32
    %3 = arith.muli %arg1, %c128_i32 : i32
    %4 = tpu.assume_multiple %3, 128 : i32
    %c0 = arith.constant 0 : index
    %5 = arith.index_cast %4 : i32 to index
    %6 = vector.load %arg12[%c0, %5] : memref<384x256xbf16, #tpu.memory_space<vmem>>, vector<128x128xbf16>
    %c128 = arith.constant 128 : index
    %c0_1 = arith.constant 0 : index
    %7 = vector.load %arg12[%c128, %c0_1] : memref<384x256xbf16, #tpu.memory_space<vmem>>, vector<128x256xbf16>
    %c256 = arith.constant 256 : index
    %8 = arith.index_cast %4 : i32 to index
    %9 = vector.load %arg12[%c256, %8] : memref<384x256xbf16, #tpu.memory_space<vmem>>, vector<128x128xbf16>
    %cst = arith.constant dense<0.000000e+00> : vector<128x256xf32>
    %10 = tpu.matmul %6, %7, %cst {dimension_numbers = #tpu.dot_dimension_numbers<[0], [0], [1], [1], [0, 1, 1, 1], [], []>} : vector<128x128xbf16>, vector<128x256xbf16>, vector<128x256xf32> -> vector<128x256xf32>
    %cst_2 = arith.constant dense<0xFF800000> : vector<128xf32>
    %11 = vector.multi_reduction <maximumf>, %10, %cst_2 [1] : vector<128x256xf32> to vector<128xf32>
    %12 = vector.shape_cast %11 : vector<128xf32> to vector<128x1xf32>
    %13 = vector.broadcast %12 : vector<128x1xf32> to vector<128x256xf32>
    %14 = arith.subf %10, %13 : vector<128x256xf32>
    %15 = math.exp %14 : vector<128x256xf32>
    %cst_3 = arith.constant dense<0.000000e+00> : vector<128xf32>
    %16 = vector.multi_reduction <add>, %15, %cst_3 [1] : vector<128x256xf32> to vector<128xf32>
    %17 = vector.shape_cast %16 : vector<128xf32> to vector<128x1xf32>
    %18 = tpu.reciprocal %17 {approx = true} : vector<128x1xf32> -> vector<128x1xf32>
    %19 = vector.broadcast %18 : vector<128x1xf32> to vector<128x256xf32>
    %20 = arith.mulf %15, %19 : vector<128x256xf32>
    %c0_4 = arith.constant 0 : index
    %c0_5 = arith.constant 0 : index
    %c0_6 = arith.constant 0 : index
    %21 = vector.load %arg11[%c0_4, %c0_5, %c0_6] : memref<1x128x256xf32, #tpu.memory_space<vmem>>, vector<1x128x256xf32>
    %22 = vector.shape_cast %21 : vector<1x128x256xf32> to vector<128x256xf32>
    %23 = arith.truncf %20 : vector<128x256xf32> to vector<128x256xbf16>
    %cst_7 = arith.constant dense<0.000000e+00> : vector<128x256xf32>
    %24 = tpu.matmul %9, %23, %cst_7 {dimension_numbers = #tpu.dot_dimension_numbers<[1], [0], [0], [1], [0, 0, 1, 1], [], []>} : vector<128x128xbf16>, vector<128x256xbf16>, vector<128x256xf32> -> vector<128x256xf32>
    %25 = arith.addf %22, %24 : vector<128x256xf32>
    %c0_8 = arith.constant 0 : index
    %c0_9 = arith.constant 0 : index
    %c0_10 = arith.constant 0 : index
    %26 = vector.load %arg11[%c0_8, %c0_9, %c0_10] : memref<1x128x256xf32, #tpu.memory_space<vmem>>, vector<1x128x256xf32>
    %27 = vector.shape_cast %26 : vector<1x128x256xf32> to vector<128x256xf32>
    %28 = vector.shape_cast %25 : vector<128x256xf32> to vector<1x128x256xf32>
    tpu.vector_store %arg11[%c0_8, %c0_9, %c0_10], %28 {strides = array<i32>} : memref<1x128x256xf32, #tpu.memory_space<vmem>>, vector<1x128x256xf32>,
    %c1_i32 = arith.constant 1 : i32
    %29 = arith.cmpi eq, %arg1, %c1_i32 : i32
    %30 = arith.extui %29 : i1 to i32
    %c0_i32_11 = arith.constant 0 : i32
    %31 = arith.cmpi ne, %30, %c0_i32_11 : i32
    scf.if %31 {
      %c0_12 = arith.constant 0 : index
      %c0_13 = arith.constant 0 : index
      %c0_14 = arith.constant 0 : index
      %32 = vector.load %arg11[%c0_12, %c0_13, %c0_14] : memref<1x128x256xf32, #tpu.memory_space<vmem>>, vector<1x128x256xf32>
      %33 = vector.shape_cast %32 : vector<1x128x256xf32> to vector<128x256xf32>
      %c0_15 = arith.constant 0 : index
      %c0_16 = arith.constant 0 : index
      %34 = vector.load %arg9[%c0_15, %c0_16] : memref<128x128xbf16, #tpu.memory_space<vmem>>, vector<128x128xbf16>
      %35 = arith.truncf %33 : vector<128x256xf32> to vector<128x256xbf16>
      %cst_17 = arith.constant dense<0.000000e+00> : vector<128x256xf32>
      %36 = tpu.matmul %34, %35, %cst_17 {dimension_numbers = #tpu.dot_dimension_numbers<[1], [0], [0], [1], [0, 0, 1, 1], [], []>} : vector<128x128xbf16>, vector<128x256xbf16>, vector<128x256xf32> -> vector<128x256xf32>
      %c0_18 = arith.constant 0 : index
      %c0_19 = arith.constant 0 : index
      %37 = vector.load %arg10[%c0_18, %c0_19] : memref<128x1xf32, #tpu.memory_space<vmem>>, vector<128x1xf32>
      %38 = vector.broadcast %37 : vector<128x1xf32> to vector<128x256xf32>
      %39 = arith.addf %36, %38 : vector<128x256xf32>
      %c0_20 = arith.constant 0 : index
      %c0_21 = arith.constant 0 : index
      %c0_22 = arith.constant 0 : index
      %40 = vector.load %arg2[%c0_20, %c0_21, %c0_22] : memref<1x128x256xf32, #tpu.memory_space<vmem>>, vector<1x128x256xf32>
      %41 = vector.shape_cast %40 : vector<1x128x256xf32> to vector<128x256xf32>
      %42 = arith.addf %41, %39 : vector<128x256xf32>
      %c0_23 = arith.constant 0 : index
      %c0_24 = arith.constant 0 : index
      %c0_25 = arith.constant 0 : index
      %43 = vector.load %arg11[%c0_23, %c0_24, %c0_25] : memref<1x128x256xf32, #tpu.memory_space<vmem>>, vector<1x128x256xf32>
      %44 = vector.shape_cast %43 : vector<1x128x256xf32> to vector<128x256xf32>
      %45 = vector.shape_cast %42 : vector<128x256xf32> to vector<1x128x256xf32>
      tpu.vector_store %arg11[%c0_23, %c0_24, %c0_25], %45 {strides = array<i32>} : memref<1x128x256xf32, #tpu.memory_space<vmem>>, vector<1x128x256xf32>,
    } else {
    }
    return
  }
  func.func @transform_0(%arg0: i32, %arg1: i32) -> (i32, i32, i32) {
    %c0_i32 = arith.constant 0 : i32
    %c0_i32_0 = arith.constant 0 : i32
    %c0_i32_1 = arith.constant 0 : i32
    return %arg0, %c0_i32, %c0_i32_0 : i32, i32, i32
  }
  func.func @transform_1(%arg0: i32, %arg1: i32) -> (i32, i32) {
    %c0_i32 = arith.constant 0 : i32
    %c0_i32_0 = arith.constant 0 : i32
    %c0_i32_1 = arith.constant 0 : i32
    return %c0_i32, %c0_i32_0 : i32, i32
  }
  func.func @transform_2(%arg0: i32, %arg1: i32) -> (i32, i32) {
    %c0_i32 = arith.constant 0 : i32
    %c0_i32_0 = arith.constant 0 : i32
    %c0_i32_1 = arith.constant 0 : i32
    return %c0_i32, %c0_i32_0 : i32, i32
  }
  func.func @transform_3(%arg0: i32, %arg1: i32) -> (i32, i32) {
    %c0_i32 = arith.constant 0 : i32
    %c0_i32_0 = arith.constant 0 : i32
    %c0_i32_1 = arith.constant 0 : i32
    return %c0_i32, %c0_i32_0 : i32, i32
  }
  func.func @transform_4(%arg0: i32, %arg1: i32) -> (i32, i32) {
    %c0_i32 = arith.constant 0 : i32
    %c0_i32_0 = arith.constant 0 : i32
    %c0_i32_1 = arith.constant 0 : i32
    return %c0_i32, %c0_i32_0 : i32, i32
  }
  func.func @transform_5(%arg0: i32, %arg1: i32) -> (i32, i32) {
    %c0_i32 = arith.constant 0 : i32
    %c0_i32_0 = arith.constant 0 : i32
    %c0_i32_1 = arith.constant 0 : i32
    return %c0_i32, %c0_i32_0 : i32, i32
  }
  func.func @transform_6(%arg0: i32, %arg1: i32) -> (i32, i32) {
    %c0_i32 = arith.constant 0 : i32
    %c0_i32_0 = arith.constant 0 : i32
    %c0_i32_1 = arith.constant 0 : i32
    return %c0_i32, %c0_i32_0 : i32, i32
  }
  func.func @transform_7(%arg0: i32, %arg1: i32) -> (i32, i32) {
    %c0_i32 = arith.constant 0 : i32
    %c0_i32_0 = arith.constant 0 : i32
    %c0_i32_1 = arith.constant 0 : i32
    return %c0_i32, %c0_i32_0 : i32, i32
  }
  func.func @transform_8(%arg0: i32, %arg1: i32) -> (i32, i32) {
    %c0_i32 = arith.constant 0 : i32
    %c0_i32_0 = arith.constant 0 : i32
    %c0_i32_1 = arith.constant 0 : i32
    return %c0_i32, %c0_i32_0 : i32, i32
  }
  func.func @transform_9(%arg0: i32, %arg1: i32) -> (i32, i32, i32) {
    %c0_i32 = arith.constant 0 : i32
    %c0_i32_0 = arith.constant 0 : i32
    %c0_i32_1 = arith.constant 0 : i32
    return %arg0, %c0_i32, %c0_i32_0 : i32, i32, i32
  }
}

</mosaic_0001>

<llo_original>
// kernel: tpu_custom_call.1
$region0: #{tpu_custom_call.1}
  #allocation0 [shape = 'u32[]', space=smem, size = 0x4, offset = 0x4, fixed_abs, tag = 'smem constant byte address 0x4 - core index']
  #allocation1 [shape = 'u32[144,128]{1,0:T(1,128)}', space=vmem, size = 0x12000, scoped, tag = 'internal scratch']
  #allocation2 [shape = 'bf16[384,256]{1,0:T(16,128)(2,1)}', space=vmem, size = 0x30000, scoped, tag = 'scratch operand']
  %s0 = inlined_call_operand.vmem [shape: f32[2,128,256], index: 0, kind: input, shape index: {}]
  %s1 = inlined_call_operand.vmem [shape: f32[128,1], index: 1, kind: input, shape index: {}]
  %s2 = inlined_call_operand.vmem [shape: f32[128,1], index: 2, kind: input, shape index: {}]
  %s3 = inlined_call_operand.vmem [shape: f32[128,32], index: 3, kind: input, shape index: {}]
  %s4 = inlined_call_operand.vmem [shape: f32[32,128], index: 4, kind: input, shape index: {}]
  %s5 = inlined_call_operand.vmem [shape: bf16[384,128], index: 5, kind: input, shape index: {}]
  %s6 = inlined_call_operand.vmem [shape: f32[384,1], index: 6, kind: input, shape index: {}]
  %s7 = inlined_call_operand.vmem [shape: bf16[128,128], index: 7, kind: input, shape index: {}]
  %s8 = inlined_call_operand.vmem [shape: f32[128,1], index: 8, kind: input, shape index: {}]
  %s9 = inlined_call_operand.hbm [shape: f32[2,128,256], index: 9, kind: output, shape index: {}]
  %s10 = sld [smem:[#allocation0]]
  $region77: #{tpu_custom_call.1} parent=0
    _
  %s12 = ssub.s32 1, %s10
  %s13 = scalar_select 0, %s12, %s10
  $region1: #{tpu_custom_call.1} parent=0
    #allocation3 [shape = 'u8[262144]{0}', space=vmem, size = 0x40000, scoped, tag = 'output window, operand 0']
    #allocation4 [shape = 's32[2]{0}', space=sflag, size = 0x8, scoped, tag = 'scoped memory for tpu_custom_call.1']
    %14 = vsyncpa [#allocation4], 0
    %s15 = scalar_lea.sflag [#allocation4], 1
    %16 = vsyncpa %s15, 0
    loop: start=0, step=1, limit=6
    $region2: #{tpu_custom_call.1} parent=1 // loop_pre_header
      _
    $region3: #{tpu_custom_call.1} parent=1 // loop_header
      %s18 = sphi 0, %s22
      %p19 = scmp.ge.s32.totalorder %s18, 6
      %s25 = sphi 0, %s37
      %s26 = sphi 0, %s33
      %s27 = sphi 0, %s25
      %s28 = sphi 0, %s26
      %s29 = sphi 0, %s27
      %s30 = sphi 0, %s28
      %s40 = sphi 0, %s42
      %s43 = sphi 0, %s40
      %s44 = sphi 0, %s43
      %s60 = sphi 0, %s44
      %s64 = sphi 0, %s64
      %s66 = sphi 0, %s64
      %s67 = sphi 0, %s66
      %s81 = sphi 0, %s67
      %s85 = sphi 0, %s85
      %s87 = sphi 0, %s85
      %s88 = sphi 0, %s87
      %s102 = sphi 0, %s88
      %s106 = sphi 0, %s106
      %s108 = sphi 0, %s106
      %s109 = sphi 0, %s108
      %s123 = sphi 0, %s109
      %s127 = sphi 0, %s127
      %s129 = sphi 0, %s127
      %s130 = sphi 0, %s129
      %s144 = sphi 0, %s130
      %s148 = sphi 0, %s148
      %s150 = sphi 0, %s148
      %s151 = sphi 0, %s150
      %s165 = sphi 0, %s151
      %s169 = sphi 0, %s169
      %s171 = sphi 0, %s169
      %s172 = sphi 0, %s171
      %s186 = sphi 0, %s172
      %s190 = sphi 0, %s190
      %s192 = sphi 0, %s190
      %s193 = sphi 0, %s192
      %s207 = sphi 0, %s193
      %s211 = sphi 0, %s211
      %s213 = sphi 0, %s211
      %s214 = sphi 0, %s213
      %s228 = sphi 0, %s214
      %s234 = sphi 0, %s236
      %s237 = sphi 0, %s234
      %s238 = sphi 0, %s237
      %s254 = sphi 0, %s238
    $region4: #{tpu_custom_call.1} parent=1 // loop_header_branch
      %21 = sbr.rel (%p19) target = $region8
    $region5: #{tpu_custom_call.1} parent=1 // loop_body
      %s23 = ssub.s32 %s18, 1
      %s24 = ssub.s32 %s18, 2
      %s31 = sadd.s32 1, %s26
      %p32 = scmp.ge.s32.totalorder %s31, 2
      %s33 = scalar_select %p32, 0, %s31
      %s34 = sadd.s32 1, %s25
      %s35 = scalar_select %p32, %s34, %s25
      %p36 = scmp.ge.s32.totalorder %s35, 2
      %s37 = scalar_select %p36, 0, %s35
      %s38 = ssub.s32 %s25, %s37
      %p39 = scmp.eq.s32.totalorder %s38, 0
      %s41 = sadd.s32 %s40, 1
      %s42 = scalar_select %p39, %s40, %s41
      %p45 = pneg %p39
      %p46 = scmp.eq.s32.totalorder %s18, 3
      %p47 = por %p45, %p46
      %p48 = scmp.ne.s32.totalorder %s40, %s43
      %p49 = scmp.eq.s32.totalorder %s18, 0
      %p50 = por %p48, %p49
      %p51 = scmp.ne.s32.totalorder %s40, %s43
      %p52 = scmp.eq.s32.totalorder %s23, 3
      %p53 = por %p51, %p52
      %p54 = scmp.ne.s32.totalorder %s43, %s44
      %p55 = scmp.eq.s32.totalorder %s23, 0
      %p56 = por %p54, %p55
      %p57 = scmp.ne.s32.totalorder %s43, %s44
      %p58 = scmp.eq.s32.totalorder %s24, 3
      %p59 = por %p57, %p58
      %p61 = scmp.ne.s32.totalorder %s44, %s60
      %p62 = scmp.eq.s32.totalorder %s24, 0
      %p63 = por %p61, %p62
      %s65 = sadd.s32 %s64, 1
      %p68 = scmp.eq.s32.totalorder %s18, 3
      %p69 = scmp.ne.s32.totalorder %s64, %s66
      %p70 = scmp.eq.s32.totalorder %s18, 0
      %p71 = por %p69, %p70
      %p72 = scmp.ne.s32.totalorder %s64, %s66
      %p73 = scmp.eq.s32.totalorder %s23, 3
      %p74 = por %p72, %p73
      %p75 = scmp.ne.s32.totalorder %s66, %s67
      %p76 = scmp.eq.s32.totalorder %s23, 0
      %p77 = por %p75, %p76
      %p78 = scmp.ne.s32.totalorder %s66, %s67
      %p79 = scmp.eq.s32.totalorder %s24, 3
      %p80 = por %p78, %p79
      %p82 = scmp.ne.s32.totalorder %s67, %s81
      %p83 = scmp.eq.s32.totalorder %s24, 0
      %p84 = por %p82, %p83
      %s86 = sadd.s32 %s85, 1
      %p89 = scmp.eq.s32.totalorder %s18, 3
      %p90 = scmp.ne.s32.totalorder %s85, %s87
      %p91 = scmp.eq.s32.totalorder %s18, 0
      %p92 = por %p90, %p91
      %p93 = scmp.ne.s32.totalorder %s85, %s87
      %p94 = scmp.eq.s32.totalorder %s23, 3
      %p95 = por %p93, %p94
      %p96 = scmp.ne.s32.totalorder %s87, %s88
      %p97 = scmp.eq.s32.totalorder %s23, 0
      %p98 = por %p96, %p97
      %p99 = scmp.ne.s32.totalorder %s87, %s88
      %p100 = scmp.eq.s32.totalorder %s24, 3
      %p101 = por %p99, %p100
      %p103 = scmp.ne.s32.totalorder %s88, %s102
      %p104 = scmp.eq.s32.totalorder %s24, 0
      %p105 = por %p103, %p104
      %s107 = sadd.s32 %s106, 1
      %p110 = scmp.eq.s32.totalorder %s18, 3
      %p111 = scmp.ne.s32.totalorder %s106, %s108
      %p112 = scmp.eq.s32.totalorder %s18, 0
      %p113 = por %p111, %p112
      %p114 = scmp.ne.s32.totalorder %s106, %s108
      %p115 = scmp.eq.s32.totalorder %s23, 3
      %p116 = por %p114, %p115
      %p117 = scmp.ne.s32.totalorder %s108, %s109
      %p118 = scmp.eq.s32.totalorder %s23, 0
      %p119 = por %p117, %p118
      %p120 = scmp.ne.s32.totalorder %s108, %s109
      %p121 = scmp.eq.s32.totalorder %s24, 3
      %p122 = por %p120, %p121
      %p124 = scmp.ne.s32.totalorder %s109, %s123
      %p125 = scmp.eq.s32.totalorder %s24, 0
      %p126 = por %p124, %p125
      %s128 = sadd.s32 %s127, 1
      %p131 = scmp.eq.s32.totalorder %s18, 3
      %p132 = scmp.ne.s32.totalorder %s127, %s129
      %p133 = scmp.eq.s32.totalorder %s18, 0
      %p134 = por %p132, %p133
      %p135 = scmp.ne.s32.totalorder %s127, %s129
      %p136 = scmp.eq.s32.totalorder %s23, 3
      %p137 = por %p135, %p136
      %p138 = scmp.ne.s32.totalorder %s129, %s130
      %p139 = scmp.eq.s32.totalorder %s23, 0
      %p140 = por %p138, %p139
      %p141 = scmp.ne.s32.totalorder %s129, %s130
      %p142 = scmp.eq.s32.totalorder %s24, 3
      %p143 = por %p141, %p142
      %p145 = scmp.ne.s32.totalorder %s130, %s144
      %p146 = scmp.eq.s32.totalorder %s24, 0
      %p147 = por %p145, %p146
      %s149 = sadd.s32 %s148, 1
      %p152 = scmp.eq.s32.totalorder %s18, 3
      %p153 = scmp.ne.s32.totalorder %s148, %s150
      %p154 = scmp.eq.s32.totalorder %s18, 0
      %p155 = por %p153, %p154
      %p156 = scmp.ne.s32.totalorder %s148, %s150
      %p157 = scmp.eq.s32.totalorder %s23, 3
      %p158 = por %p156, %p157
      %p159 = scmp.ne.s32.totalorder %s150, %s151
      %p160 = scmp.eq.s32.totalorder %s23, 0
      %p161 = por %p159, %p160
      %p162 = scmp.ne.s32.totalorder %s150, %s151
      %p163 = scmp.eq.s32.totalorder %s24, 3
      %p164 = por %p162, %p163
      %p166 = scmp.ne.s32.totalorder %s151, %s165
      %p167 = scmp.eq.s32.totalorder %s24, 0
      %p168 = por %p166, %p167
      %s170 = sadd.s32 %s169, 1
      %p173 = scmp.eq.s32.totalorder %s18, 3
      %p174 = scmp.ne.s32.totalorder %s169, %s171
      %p175 = scmp.eq.s32.totalorder %s18, 0
      %p176 = por %p174, %p175
      %p177 = scmp.ne.s32.totalorder %s169, %s171
      %p178 = scmp.eq.s32.totalorder %s23, 3
      %p179 = por %p177, %p178
      %p180 = scmp.ne.s32.totalorder %s171, %s172
      %p181 = scmp.eq.s32.totalorder %s23, 0
      %p182 = por %p180, %p181
      %p183 = scmp.ne.s32.totalorder %s171, %s172
      %p184 = scmp.eq.s32.totalorder %s24, 3
      %p185 = por %p183, %p184
      %p187 = scmp.ne.s32.totalorder %s172, %s186
      %p188 = scmp.eq.s32.totalorder %s24, 0
      %p189 = por %p187, %p188
      %s191 = sadd.s32 %s190, 1
      %p194 = scmp.eq.s32.totalorder %s18, 3
      %p195 = scmp.ne.s32.totalorder %s190, %s192
      %p196 = scmp.eq.s32.totalorder %s18, 0
      %p197 = por %p195, %p196
      %p198 = scmp.ne.s32.totalorder %s190, %s192
      %p199 = scmp.eq.s32.totalorder %s23, 3
      %p200 = por %p198, %p199
      %p201 = scmp.ne.s32.totalorder %s192, %s193
      %p202 = scmp.eq.s32.totalorder %s23, 0
      %p203 = por %p201, %p202
      %p204 = scmp.ne.s32.totalorder %s192, %s193
      %p205 = scmp.eq.s32.totalorder %s24, 3
      %p206 = por %p204, %p205
      %p208 = scmp.ne.s32.totalorder %s193, %s207
      %p209 = scmp.eq.s32.totalorder %s24, 0
      %p210 = por %p208, %p209
      %s212 = sadd.s32 %s211, 1
      %p215 = scmp.eq.s32.totalorder %s18, 3
      %p216 = scmp.ne.s32.totalorder %s211, %s213
      %p217 = scmp.eq.s32.totalorder %s18, 0
      %p218 = por %p216, %p217
      %p219 = scmp.ne.s32.totalorder %s211, %s213
      %p220 = scmp.eq.s32.totalorder %s23, 3
      %p221 = por %p219, %p220
      %p222 = scmp.ne.s32.totalorder %s213, %s214
      %p223 = scmp.eq.s32.totalorder %s23, 0
      %p224 = por %p222, %p223
      %p225 = scmp.ne.s32.totalorder %s213, %s214
      %p226 = scmp.eq.s32.totalorder %s24, 3
      %p227 = por %p225, %p226
      %p229 = scmp.ne.s32.totalorder %s214, %s228
      %p230 = scmp.eq.s32.totalorder %s24, 0
      %p231 = por %p229, %p230
      %s232 = ssub.s32 %s25, %s37
      %p233 = scmp.eq.s32.totalorder %s232, 0
      %s235 = sadd.s32 %s234, 1
      %s236 = scalar_select %p233, %s234, %s235
      %p239 = pneg %p233
      %p240 = scmp.eq.s32.totalorder %s18, 3
      %p241 = por %p239, %p240
      %p242 = scmp.ne.s32.totalorder %s234, %s237
      %p243 = scmp.eq.s32.totalorder %s18, 0
      %p244 = por %p242, %p243
      %p245 = scmp.ne.s32.totalorder %s234, %s237
      %p246 = scmp.eq.s32.totalorder %s23, 3
      %p247 = por %p245, %p246
      %p248 = scmp.ne.s32.totalorder %s237, %s238
      %p249 = scmp.eq.s32.totalorder %s23, 0
      %p250 = por %p248, %p249
      %p251 = scmp.ne.s32.totalorder %s237, %s238
      %p252 = scmp.eq.s32.totalorder %s24, 3
      %p253 = por %p251, %p252
      %p255 = scmp.ne.s32.totalorder %s238, %s254
      %p256 = scmp.eq.s32.totalorder %s24, 0
      %p257 = por %p255, %p256
      %p258 = scmp.le.s32.totalorder 1, %s18
      %p259 = scmp.lt.s32.totalorder %s18, 5
      %p260 = pnand %p258, %p259
      %p261 = pneg %p260
      // Predicated region
      $region9: #{tpu_custom_call.1} parent=5 // pred_check
        _
      $region10: #{tpu_custom_call.1} parent=5 // pred_check_branch
        %263 = sbr.rel (%p260) target = $region12
      $region11: #{tpu_custom_call.1} parent=5 // pred_region
        %s264 = ssub.s32 %s18, 1
        // Predicated region
        $region13: #{tpu_custom_call.1} parent=11 // pred_check
          %p265 = pneg %p77
        $region14: #{tpu_custom_call.1} parent=11 // pred_check_branch
          %267 = sbr.rel (%p265) target = $region16
        $region15: #{tpu_custom_call.1} parent=11 // pred_region
          _
        $region16: #{tpu_custom_call.1} parent=11 // pred_fallthru
          _
        // Predicated region
        $region17: #{tpu_custom_call.1} parent=11 // pred_check
          %p268 = pneg %p98
        $region18: #{tpu_custom_call.1} parent=11 // pred_check_branch
          %270 = sbr.rel (%p268) target = $region20
        $region19: #{tpu_custom_call.1} parent=11 // pred_region
          _
        $region20: #{tpu_custom_call.1} parent=11 // pred_fallthru
          _
        // Predicated region
        $region21: #{tpu_custom_call.1} parent=11 // pred_check
          %p271 = pneg %p119
        $region22: #{tpu_custom_call.1} parent=11 // pred_check_branch
          %273 = sbr.rel (%p271) target = $region24
        $region23: #{tpu_custom_call.1} parent=11 // pred_region
          _
        $region24: #{tpu_custom_call.1} parent=11 // pred_fallthru
          _
        // Predicated region
        $region25: #{tpu_custom_call.1} parent=11 // pred_check
          %p274 = pneg %p140
        $region26: #{tpu_custom_call.1} parent=11 // pred_check_branch
          %276 = sbr.rel (%p274) target = $region28
        $region27: #{tpu_custom_call.1} parent=11 // pred_region
          _
        $region28: #{tpu_custom_call.1} parent=11 // pred_fallthru
          _
        // Predicated region
        $region29: #{tpu_custom_call.1} parent=11 // pred_check
          %p277 = pneg %p161
        $region30: #{tpu_custom_call.1} parent=11 // pred_check_branch
          %279 = sbr.rel (%p277) target = $region32
        $region31: #{tpu_custom_call.1} parent=11 // pred_region
          _
        $region32: #{tpu_custom_call.1} parent=11 // pred_fallthru
          _
        // Predicated region
        $region33: #{tpu_custom_call.1} parent=11 // pred_check
          %p280 = pneg %p182
        $region34: #{tpu_custom_call.1} parent=11 // pred_check_branch
          %282 = sbr.rel (%p280) target = $region36
        $region35: #{tpu_custom_call.1} parent=11 // pred_region
          _
        $region36: #{tpu_custom_call.1} parent=11 // pred_fallthru
          _
        // Predicated region
        $region37: #{tpu_custom_call.1} parent=11 // pred_check
          %p283 = pneg %p203
        $region38: #{tpu_custom_call.1} parent=11 // pred_check_branch
          %285 = sbr.rel (%p283) target = $region40
        $region39: #{tpu_custom_call.1} parent=11 // pred_region
          _
        $region40: #{tpu_custom_call.1} parent=11 // pred_fallthru
          _
        // Predicated region
        $region41: #{tpu_custom_call.1} parent=11 // pred_check
          %p286 = pneg %p224
        $region42: #{tpu_custom_call.1} parent=11 // pred_check_branch
          %288 = sbr.rel (%p286) target = $region44
        $region43: #{tpu_custom_call.1} parent=11 // pred_region
          _
        $region44: #{tpu_custom_call.1} parent=11 // pred_fallthru
          _
      $region12: #{tpu_custom_call.1} parent=5 // pred_fallthru
        _
      %p289 = scmp.lt.s32.totalorder %s18, 4
      // Predicated region
      $region45: #{tpu_custom_call.1} parent=5 // pred_check
        %p290 = pneg %p289
      $region46: #{tpu_custom_call.1} parent=5 // pred_check_branch
        %292 = sbr.rel (%p290) target = $region48
      $region47: #{tpu_custom_call.1} parent=5 // pred_region
        // Predicated region
        $region49: #{tpu_custom_call.1} parent=47 // pred_check
          %p293 = pneg %p50
        $region50: #{tpu_custom_call.1} parent=47 // pred_check_branch
          %295 = sbr.rel (%p293) target = $region52
        $region51: #{tpu_custom_call.1} parent=47 // pred_region
          %p296 = scmp.lt.s32.totalorder %s25, 1
          %s297 = scalar_select %p296, %s25, 1
          %s298 = smul.addr %s297, 32
          %s299 = smul.addr %s298, 8
          %s300 = scalar_lea.vmem %s0, %s299
        $region52: #{tpu_custom_call.1} parent=47 // pred_fallthru
          _
      $region48: #{tpu_custom_call.1} parent=5 // pred_fallthru
        _
      %p301 = scmp.le.s32.totalorder 1, %s18
      %p302 = scmp.lt.s32.totalorder %s18, 5
      %p303 = pnand %p301, %p302
      %p304 = pneg %p303
      // Predicated region
      $region53: #{tpu_custom_call.1} parent=5 // pred_check
        _
      $region54: #{tpu_custom_call.1} parent=5 // pred_check_branch
        %306 = sbr.rel (%p303) target = $region56
      $region55: #{tpu_custom_call.1} parent=5 // pred_region
        %s307 = ssub.s32 %s18, 1
        %p308 = scmp.lt.s32.totalorder %s27, 1
        %s309 = scalar_select %p308, %s27, 1
        %s310 = smul.addr %s309, 32
        %s311 = smul.addr %s310, 8
        %s312 = scalar_lea.vmem %s0, %s311
        %p313 = pneg %p56
        %p314 = pneg %p53
        %p315 = pneg %p77
        %p316 = pneg %p74
        %p317 = pneg %p98
        %p318 = pneg %p95
        %p319 = pneg %p119
        %p320 = pneg %p116
        %p321 = pneg %p140
        %p322 = pneg %p137
        %p323 = pneg %p161
        %p324 = pneg %p158
        %p325 = pneg %p182
        %p326 = pneg %p179
        %p327 = pneg %p203
        %p328 = pneg %p200
        %p329 = pneg %p224
        %p330 = pneg %p221
        %p331 = pneg %p250
        %p332 = pneg %p247
        %s333 = sand.u32 %s237, 1
        %s334 = scalar_lea.sflag [#allocation4], %s333
        %s335 = sand.u32 %s237, 1
        %s336 = smul.addr %s335, 256
        %s337 = scalar_lea.vmem [#allocation3], %s336
        %p338 = scmp.lt.s32.totalorder %s27, 1
        %s339 = scalar_select %p338, %s27, 1
        %s340 = smul.addr %s339, 32
        %s341 = smul.addr %s340, 8
        %s342 = scalar_lea.vmem %s0, %s341
        %p344 = scmp.eq.s32.totalorder %s28, 0
        // Predicated region
        $region57: #{tpu_custom_call.1} parent=55 // pred_check
          %p345 = pneg %p344
        $region58: #{tpu_custom_call.1} parent=55 // pred_check_branch
          %347 = sbr.rel (%p345) target = $region60
        $region59: #{tpu_custom_call.1} parent=55 // pred_region
          %v348 = vld [vmem:[%s342] sm:$0xff]
          %v349 = vld [vmem:[%s342 + $0x8] sm:$0xff]
          %v350 = vld [vmem:[%s342 + $0x10] sm:$0xff]
          %v351 = vld [vmem:[%s342 + $0x18] sm:$0xff]
          %v352 = vld [vmem:[%s342 + $0x20] sm:$0xff]
          %v353 = vld [vmem:[%s342 + $0x28] sm:$0xff]
          %v354 = vld [vmem:[%s342 + $0x30] sm:$0xff]
          %v355 = vld [vmem:[%s342 + $0x38] sm:$0xff]
          %v356 = vld [vmem:[%s342 + $0x40] sm:$0xff]
          %v357 = vld [vmem:[%s342 + $0x48] sm:$0xff]
          %v358 = vld [vmem:[%s342 + $0x50] sm:$0xff]
          %v359 = vld [vmem:[%s342 + $0x58] sm:$0xff]
          %v360 = vld [vmem:[%s342 + $0x60] sm:$0xff]
          %v361 = vld [vmem:[%s342 + $0x68] sm:$0xff]
          %v362 = vld [vmem:[%s342 + $0x70] sm:$0xff]
          %v363 = vld [vmem:[%s342 + $0x78] sm:$0xff]
          %v364 = vld [vmem:[%s342 + $0x80] sm:$0xff]
          %v365 = vld [vmem:[%s342 + $0x88] sm:$0xff]
          %v366 = vld [vmem:[%s342 + $0x90] sm:$0xff]
          %v367 = vld [vmem:[%s342 + $0x98] sm:$0xff]
          %v368 = vld [vmem:[%s342 + $0xa0] sm:$0xff]
          %v369 = vld [vmem:[%s342 + $0xa8] sm:$0xff]
          %v370 = vld [vmem:[%s342 + $0xb0] sm:$0xff]
          %v371 = vld [vmem:[%s342 + $0xb8] sm:$0xff]
          %v372 = vld [vmem:[%s342 + $0xc0] sm:$0xff]
          %v373 = vld [vmem:[%s342 + $0xc8] sm:$0xff]
          %v374 = vld [vmem:[%s342 + $0xd0] sm:$0xff]
          %v375 = vld [vmem:[%s342 + $0xd8] sm:$0xff]
          %v376 = vld [vmem:[%s342 + $0xe0] sm:$0xff]
          %v377 = vld [vmem:[%s342 + $0xe8] sm:$0xff]
          %v378 = vld [vmem:[%s342 + $0xf0] sm:$0xff]
          %v379 = vld [vmem:[%s342 + $0xf8] sm:$0xff]
          %v380 = vadd.f32 %v348, %v349
          %381 = vadd.xlane.f32.xlu0 %v380
          %v382 = vpop.xlane.xlu0 %381
          %v383 = vadd.f32 %v350, %v351
          %384 = vadd.xlane.f32.xlu0 %v383
          %v385 = vpop.xlane.xlu0 %384
          %v386 = vadd.f32 %v352, %v353
          %387 = vadd.xlane.f32.xlu0 %v386
          %v388 = vpop.xlane.xlu0 %387
          %v389 = vadd.f32 %v354, %v355
          %390 = vadd.xlane.f32.xlu0 %v389
          %v391 = vpop.xlane.xlu0 %390
          %v392 = vadd.f32 %v356, %v357
          %393 = vadd.xlane.f32.xlu0 %v392
          %v394 = vpop.xlane.xlu0 %393
          %v395 = vadd.f32 %v358, %v359
          %396 = vadd.xlane.f32.xlu0 %v395
          %v397 = vpop.xlane.xlu0 %396
          %v398 = vadd.f32 %v360, %v361
          %399 = vadd.xlane.f32.xlu0 %v398
          %v400 = vpop.xlane.xlu0 %399
          %v401 = vadd.f32 %v362, %v363
          %402 = vadd.xlane.f32.xlu0 %v401
          %v403 = vpop.xlane.xlu0 %402
          %v404 = vadd.f32 %v364, %v365
          %405 = vadd.xlane.f32.xlu0 %v404
          %v406 = vpop.xlane.xlu0 %405
          %v407 = vadd.f32 %v366, %v367
          %408 = vadd.xlane.f32.xlu0 %v407
          %v409 = vpop.xlane.xlu0 %408
          %v410 = vadd.f32 %v368, %v369
          %411 = vadd.xlane.f32.xlu0 %v410
          %v412 = vpop.xlane.xlu0 %411
          %v413 = vadd.f32 %v370, %v371
          %414 = vadd.xlane.f32.xlu0 %v413
          %v415 = vpop.xlane.xlu0 %414
          %v416 = vadd.f32 %v372, %v373
          %417 = vadd.xlane.f32.xlu0 %v416
          %v418 = vpop.xlane.xlu0 %417
          %v419 = vadd.f32 %v374, %v375
          %420 = vadd.xlane.f32.xlu0 %v419
          %v421 = vpop.xlane.xlu0 %420
          %v422 = vadd.f32 %v376, %v377
          %423 = vadd.xlane.f32.xlu0 %v422
          %v424 = vpop.xlane.xlu0 %423
          %v425 = vadd.f32 %v378, %v379
          %426 = vadd.xlane.f32.xlu0 %v425
          %v427 = vpop.xlane.xlu0 %426
          %v428 = vld [vmem:[%s4] sm:$0xff]
          %v429 = vld [vmem:[%s4 + $0x8] sm:$0xff]
          %v430 = vld [vmem:[%s4 + $0x10] sm:$0xff]
          %v431 = vld [vmem:[%s4 + $0x18] sm:$0xff]
          %432 = vmatprep.subr.mxu0 0.0
          %433 = vmatpush1.msra.mxu0 %v382
          %434 = vmatprep.subr.mxu0 0.0
          %435 = vmatpush1.msra.mxu0 %v385
          %436 = vmatprep.subr.mxu0 0.0
          %437 = vmatpush1.msra.mxu0 %v388
          %438 = vmatprep.subr.mxu0 0.0
          %439 = vmatpush1.msra.mxu0 %v391
          %440 = vmatprep.subr.mxu0 0.0
          %441 = vmatpush1.msra.mxu0 %v394
          %442 = vmatprep.subr.mxu0 0.0
          %443 = vmatpush1.msra.mxu0 %v397
          %444 = vmatprep.subr.mxu0 0.0
          %445 = vmatpush1.msra.mxu0 %v400
          %446 = vmatprep.subr.mxu0 0.0
          %447 = vmatpush1.msra.mxu0 %v403
          %448 = vmatprep.subr.mxu0 0.0
          %449 = vmatpush1.msra.mxu0 %v406
          %450 = vmatprep.subr.mxu0 0.0
          %451 = vmatpush1.msra.mxu0 %v409
          %452 = vmatprep.subr.mxu0 0.0
          %453 = vmatpush1.msra.mxu0 %v412
          %454 = vmatprep.subr.mxu0 0.0
          %455 = vmatpush1.msra.mxu0 %v415
          %456 = vmatprep.subr.mxu0 0.0
          %457 = vmatpush1.msra.mxu0 %v418
          %458 = vmatprep.subr.mxu0 0.0
          %459 = vmatpush1.msra.mxu0 %v421
          %460 = vmatprep.subr.mxu0 0.0
          %461 = vmatpush1.msra.mxu0 %v424
          %462 = vmatprep.subr.mxu0 0.0
          %463 = vmatpush1.msra.mxu0 %v427
          %464 = vmatprep.subr.mxu0 0.0
          %465 = vmatpush1.msra.mxu0 0.0
          %466 = vmatprep.subr.mxu0 0.0
          %467 = vmatpush1.msra.mxu0 0.0
          %468 = vmatprep.subr.mxu0 0.0
          %469 = vmatpush1.msra.mxu0 0.0
          %470 = vmatprep.subr.mxu0 0.0
          %471 = vmatpush1.msra.mxu0 0.0
          %472 = vmatprep.subr.mxu0 0.0
          %473 = vmatpush1.msra.mxu0 0.0
          %474 = vmatprep.subr.mxu0 0.0
          %475 = vmatpush1.msra.mxu0 0.0
          %476 = vmatprep.subr.mxu0 0.0
          %477 = vmatpush1.msra.mxu0 0.0
          %478 = vmatprep.subr.mxu0 0.0
          %479 = vmatpush1.msra.mxu0 0.0
          %480 = vmatprep.subr.mxu0 0.0
          %481 = vmatpush1.msra.mxu0 0.0
          %482 = vmatprep.subr.mxu0 0.0
          %483 = vmatpush1.msra.mxu0 0.0
          %484 = vmatprep.subr.mxu0 0.0
          %485 = vmatpush1.msra.mxu0 0.0
          %486 = vmatprep.subr.mxu0 0.0
          %487 = vmatpush1.msra.mxu0 0.0
          %488 = vmatprep.subr.mxu0 0.0
          %489 = vmatpush1.msra.mxu0 0.0
          %490 = vmatprep.subr.mxu0 0.0
          %491 = vmatpush1.msra.mxu0 0.0
          %492 = vmatprep.subr.mxu0 0.0
          %493 = vmatpush1.msra.mxu0 0.0
          %494 = vmatprep.subr.mxu0 0.0
          %495 = vmatpush1.msra.mxu0 0.0
          %496 = vmatprep.mubr.f32.mxu0 0.0
          %497 = vmatmul.mubr.f32.gmra.mrb[0].mxu0 %v428
          %v498 = vpop.f32.mrb[0].mxu0
          %v499 = vadd.f32 0.0, %v498
          %v500 = vpop.f32.mrb[0].mxu0
          %501 = vmatprep.mubr.f32.mxu0 0.0
          %502 = vmatmul.mubr.f32.gmra.mrb[0].mxu0 %v429
          %v503 = vpop.f32.mrb[0].mxu0
          %v504 = vadd.f32 0.0, %v503
          %v505 = vpop.f32.mrb[0].mxu0
          %506 = vmatprep.mubr.f32.mxu0 0.0
          %507 = vmatmul.mubr.f32.gmra.mrb[0].mxu0 %v430
          %v508 = vpop.f32.mrb[0].mxu0
          %v509 = vadd.f32 0.0, %v508
          %v510 = vpop.f32.mrb[0].mxu0
          %511 = vmatprep.mubr.f32.mxu0 0.0
          %512 = vmatmul.mubr.f32.gmra.mrb[0].mxu0 %v431
          %v513 = vpop.f32.mrb[0].mxu0
          %v514 = vadd.f32 0.0, %v513
          %v515 = vpop.f32.mrb[0].mxu0
          %516 = vdwg.mxu0
          %v517 = vrcp.pop 1024.0
          %v518 = vmul.f32 %v499, %v517
          %v519 = vmul.f32 %v504, %v517
          %v520 = vmul.f32 %v509, %v517
          %v521 = vmul.f32 %v514, %v517
          %v522 = vld [vmem:[%s3] sm:$0xff]
          %v523 = vld [vmem:[%s3 + $0x8] sm:$0xff]
          %v524 = vld [vmem:[%s3 + $0x10] sm:$0xff]
          %v525 = vld [vmem:[%s3 + $0x18] sm:$0xff]
          %v526 = vld [vmem:[%s3 + $0x20] sm:$0xff]
          %v527 = vld [vmem:[%s3 + $0x28] sm:$0xff]
          %v528 = vld [vmem:[%s3 + $0x30] sm:$0xff]
          %v529 = vld [vmem:[%s3 + $0x38] sm:$0xff]
          %v530 = vld [vmem:[%s3 + $0x40] sm:$0xff]
          %v531 = vld [vmem:[%s3 + $0x48] sm:$0xff]
          %v532 = vld [vmem:[%s3 + $0x50] sm:$0xff]
          %v533 = vld [vmem:[%s3 + $0x58] sm:$0xff]
          %v534 = vld [vmem:[%s3 + $0x60] sm:$0xff]
          %v535 = vld [vmem:[%s3 + $0x68] sm:$0xff]
          %v536 = vld [vmem:[%s3 + $0x70] sm:$0xff]
          %v537 = vld [vmem:[%s3 + $0x78] sm:$0xff]
          %vm538 = vcmask 261120
          %v540 = vsel %vm538, %v522, 0
          %v543 = vsel %vm538, %v523, 0
          %v546 = vsel %vm538, %v524, 0
          %v549 = vsel %vm538, %v525, 0
          %v552 = vsel %vm538, %v526, 0
          %v555 = vsel %vm538, %v527, 0
          %v558 = vsel %vm538, %v528, 0
          %v561 = vsel %vm538, %v529, 0
          %v564 = vsel %vm538, %v530, 0
          %v567 = vsel %vm538, %v531, 0
          %v570 = vsel %vm538, %v532, 0
          %v573 = vsel %vm538, %v533, 0
          %v576 = vsel %vm538, %v534, 0
          %v579 = vsel %vm538, %v535, 0
          %v582 = vsel %vm538, %v536, 0
          %v585 = vsel %vm538, %v537, 0
          %587 = vmatprep.subr.mxu0 0.0
          %588 = vmatpush1.msra.mxu0 %v518
          %589 = vmatprep.subr.mxu0 0.0
          %590 = vmatpush1.msra.mxu0 %v519
          %591 = vmatprep.subr.mxu0 0.0
          %592 = vmatpush1.msra.mxu0 %v520
          %593 = vmatprep.subr.mxu0 0.0
          %594 = vmatpush1.msra.mxu0 %v521
          %595 = vmatprep.subr.mxu0 0.0
          %596 = vmatpush1.msra.mxu0 0.0
          %597 = vmatprep.subr.mxu0 0.0
          %598 = vmatpush1.msra.mxu0 0.0
          %599 = vmatprep.subr.mxu0 0.0
          %600 = vmatpush1.msra.mxu0 0.0
          %601 = vmatprep.subr.mxu0 0.0
          %602 = vmatpush1.msra.mxu0 0.0
          %603 = vmatprep.subr.mxu0 0.0
          %604 = vmatpush1.msra.mxu0 0.0
          %605 = vmatprep.subr.mxu0 0.0
          %606 = vmatpush1.msra.mxu0 0.0
          %607 = vmatprep.subr.mxu0 0.0
          %608 = vmatpush1.msra.mxu0 0.0
          %609 = vmatprep.subr.mxu0 0.0
          %610 = vmatpush1.msra.mxu0 0.0
          %611 = vmatprep.subr.mxu0 0.0
          %612 = vmatpush1.msra.mxu0 0.0
          %613 = vmatprep.subr.mxu0 0.0
          %614 = vmatpush1.msra.mxu0 0.0
          %615 = vmatprep.subr.mxu0 0.0
          %616 = vmatpush1.msra.mxu0 0.0
          %617 = vmatprep.subr.mxu0 0.0
          %618 = vmatpush1.msra.mxu0 0.0
          %619 = vmatprep.subr.mxu0 0.0
          %620 = vmatpush1.msra.mxu0 0.0
          %621 = vmatprep.subr.mxu0 0.0
          %622 = vmatpush1.msra.mxu0 0.0
          %623 = vmatprep.subr.mxu0 0.0
          %624 = vmatpush1.msra.mxu0 0.0
          %625 = vmatprep.subr.mxu0 0.0
          %626 = vmatpush1.msra.mxu0 0.0
          %627 = vmatprep.subr.mxu0 0.0
          %628 = vmatpush1.msra.mxu0 0.0
          %629 = vmatprep.subr.mxu0 0.0
          %630 = vmatpush1.msra.mxu0 0.0
          %631 = vmatprep.subr.mxu0 0.0
          %632 = vmatpush1.msra.mxu0 0.0
          %633 = vmatprep.subr.mxu0 0.0
          %634 = vmatpush1.msra.mxu0 0.0
          %635 = vmatprep.subr.mxu0 0.0
          %636 = vmatpush1.msra.mxu0 0.0
          %637 = vmatprep.subr.mxu0 0.0
          %638 = vmatpush1.msra.mxu0 0.0
          %639 = vmatprep.subr.mxu0 0.0
          %640 = vmatpush1.msra.mxu0 0.0
          %641 = vmatprep.subr.mxu0 0.0
          %642 = vmatpush1.msra.mxu0 0.0
          %643 = vmatprep.subr.mxu0 0.0
          %644 = vmatpush1.msra.mxu0 0.0
          %645 = vmatprep.subr.mxu0 0.0
          %646 = vmatpush1.msra.mxu0 0.0
          %647 = vmatprep.subr.mxu0 0.0
          %648 = vmatpush1.msra.mxu0 0.0
          %649 = vmatprep.subr.mxu0 0.0
          %650 = vmatpush1.msra.mxu0 0.0
          %651 = vmatprep.mubr.f32.mxu0 0.0
          %652 = vmatmul.mubr.f32.gmra.mrb[0].mxu0 %v540
          %v653 = vpop.f32.mrb[0].mxu0
          %v654 = vadd.f32 0.0, %v653
          %v655 = vpop.f32.mrb[0].mxu0
          %656 = vmatprep.mubr.f32.mxu0 0.0
          %657 = vmatmul.mubr.f32.gmra.mrb[0].mxu0 %v543
          %v658 = vpop.f32.mrb[0].mxu0
          %v659 = vadd.f32 0.0, %v658
          %v660 = vpop.f32.mrb[0].mxu0
          %661 = vmatprep.mubr.f32.mxu0 0.0
          %662 = vmatmul.mubr.f32.gmra.mrb[0].mxu0 %v546
          %v663 = vpop.f32.mrb[0].mxu0
          %v664 = vadd.f32 0.0, %v663
          %v665 = vpop.f32.mrb[0].mxu0
          %666 = vmatprep.mubr.f32.mxu0 0.0
          %667 = vmatmul.mubr.f32.gmra.mrb[0].mxu0 %v549
          %v668 = vpop.f32.mrb[0].mxu0
          %v669 = vadd.f32 0.0, %v668
          %v670 = vpop.f32.mrb[0].mxu0
          %671 = vmatprep.mubr.f32.mxu0 0.0
          %672 = vmatmul.mubr.f32.gmra.mrb[0].mxu0 %v552
          %v673 = vpop.f32.mrb[0].mxu0
          %v674 = vadd.f32 0.0, %v673
          %v675 = vpop.f32.mrb[0].mxu0
          %676 = vmatprep.mubr.f32.mxu0 0.0
          %677 = vmatmul.mubr.f32.gmra.mrb[0].mxu0 %v555
          %v678 = vpop.f32.mrb[0].mxu0
          %v679 = vadd.f32 0.0, %v678
          %v680 = vpop.f32.mrb[0].mxu0
          %681 = vmatprep.mubr.f32.mxu0 0.0
          %682 = vmatmul.mubr.f32.gmra.mrb[0].mxu0 %v558
          %v683 = vpop.f32.mrb[0].mxu0
          %v684 = vadd.f32 0.0, %v683
          %v685 = vpop.f32.mrb[0].mxu0
          %686 = vmatprep.mubr.f32.mxu0 0.0
          %687 = vmatmul.mubr.f32.gmra.mrb[0].mxu0 %v561
          %v688 = vpop.f32.mrb[0].mxu0
          %v689 = vadd.f32 0.0, %v688
          %v690 = vpop.f32.mrb[0].mxu0
          %691 = vmatprep.mubr.f32.mxu0 0.0
          %692 = vmatmul.mubr.f32.gmra.mrb[0].mxu0 %v564
          %v693 = vpop.f32.mrb[0].mxu0
          %v694 = vadd.f32 0.0, %v693
          %v695 = vpop.f32.mrb[0].mxu0
          %696 = vmatprep.mubr.f32.mxu0 0.0
          %697 = vmatmul.mubr.f32.gmra.mrb[0].mxu0 %v567
          %v698 = vpop.f32.mrb[0].mxu0
          %v699 = vadd.f32 0.0, %v698
          %v700 = vpop.f32.mrb[0].mxu0
          %701 = vmatprep.mubr.f32.mxu0 0.0
          %702 = vmatmul.mubr.f32.gmra.mrb[0].mxu0 %v570
          %v703 = vpop.f32.mrb[0].mxu0
          %v704 = vadd.f32 0.0, %v703
          %v705 = vpop.f32.mrb[0].mxu0
          %706 = vmatprep.mubr.f32.mxu0 0.0
          %707 = vmatmul.mubr.f32.gmra.mrb[0].mxu0 %v573
          %v708 = vpop.f32.mrb[0].mxu0
          %v709 = vadd.f32 0.0, %v708
          %v710 = vpop.f32.mrb[0].mxu0
          %711 = vmatprep.mubr.f32.mxu0 0.0
          %712 = vmatmul.mubr.f32.gmra.mrb[0].mxu0 %v576
          %v713 = vpop.f32.mrb[0].mxu0
          %v714 = vadd.f32 0.0, %v713
          %v715 = vpop.f32.mrb[0].mxu0
          %716 = vmatprep.mubr.f32.mxu0 0.0
          %717 = vmatmul.mubr.f32.gmra.mrb[0].mxu0 %v579
          %v718 = vpop.f32.mrb[0].mxu0
          %v719 = vadd.f32 0.0, %v718
          %v720 = vpop.f32.mrb[0].mxu0
          %721 = vmatprep.mubr.f32.mxu0 0.0
          %722 = vmatmul.mubr.f32.gmra.mrb[0].mxu0 %v582
          %v723 = vpop.f32.mrb[0].mxu0
          %v724 = vadd.f32 0.0, %v723
          %v725 = vpop.f32.mrb[0].mxu0
          %726 = vmatprep.mubr.f32.mxu0 0.0
          %727 = vmatmul.mubr.f32.gmra.mrb[0].mxu0 %v585
          %v728 = vpop.f32.mrb[0].mxu0
          %v729 = vadd.f32 0.0, %v728
          %v730 = vpop.f32.mrb[0].mxu0
          %731 = vdwg.mxu0
          %733 = vset.pattern.permute.xlu0 0
          %734 = vperm.xlu0 %733, %v654
          %v735 = vpop.permute.xlu0 %734
          %738 = vset.pattern.permute.xlu0 0
          %739 = vperm.xlu0 %738, %v659
          %v740 = vpop.permute.xlu0 %739
          %743 = vset.pattern.permute.xlu0 0
          %744 = vperm.xlu0 %743, %v664
          %v745 = vpop.permute.xlu0 %744
          %748 = vset.pattern.permute.xlu0 0
          %749 = vperm.xlu0 %748, %v669
          %v750 = vpop.permute.xlu0 %749
          %753 = vset.pattern.permute.xlu0 0
          %754 = vperm.xlu0 %753, %v674
          %v755 = vpop.permute.xlu0 %754
          %758 = vset.pattern.permute.xlu0 0
          %759 = vperm.xlu0 %758, %v679
          %v760 = vpop.permute.xlu0 %759
          %763 = vset.pattern.permute.xlu0 0
          %764 = vperm.xlu0 %763, %v684
          %v765 = vpop.permute.xlu0 %764
          %768 = vset.pattern.permute.xlu0 0
          %769 = vperm.xlu0 %768, %v689
          %v770 = vpop.permute.xlu0 %769
          %773 = vset.pattern.permute.xlu0 0
          %774 = vperm.xlu0 %773, %v694
          %v775 = vpop.permute.xlu0 %774
          %778 = vset.pattern.permute.xlu0 0
          %779 = vperm.xlu0 %778, %v699
          %v780 = vpop.permute.xlu0 %779
          %783 = vset.pattern.permute.xlu0 0
          %784 = vperm.xlu0 %783, %v704
          %v785 = vpop.permute.xlu0 %784
          %788 = vset.pattern.permute.xlu0 0
          %789 = vperm.xlu0 %788, %v709
          %v790 = vpop.permute.xlu0 %789
          %793 = vset.pattern.permute.xlu0 0
          %794 = vperm.xlu0 %793, %v714
          %v795 = vpop.permute.xlu0 %794
          %798 = vset.pattern.permute.xlu0 0
          %799 = vperm.xlu0 %798, %v719
          %v800 = vpop.permute.xlu0 %799
          %803 = vset.pattern.permute.xlu0 0
          %804 = vperm.xlu0 %803, %v724
          %v805 = vpop.permute.xlu0 %804
          %808 = vset.pattern.permute.xlu0 0
          %809 = vperm.xlu0 %808, %v729
          %v810 = vpop.permute.xlu0 %809
          %v812 = vsub.f32 %v348, %v735
          %v813 = vsub.f32 %v349, %v735
          %v814 = vsub.f32 %v350, %v740
          %v815 = vsub.f32 %v351, %v740
          %v816 = vsub.f32 %v352, %v745
          %v817 = vsub.f32 %v353, %v745
          %v818 = vsub.f32 %v354, %v750
          %v819 = vsub.f32 %v355, %v750
          %v820 = vsub.f32 %v356, %v755
          %v821 = vsub.f32 %v357, %v755
          %v822 = vsub.f32 %v358, %v760
          %v823 = vsub.f32 %v359, %v760
          %v824 = vsub.f32 %v360, %v765
          %v825 = vsub.f32 %v361, %v765
          %v826 = vsub.f32 %v362, %v770
          %v827 = vsub.f32 %v363, %v770
          %v828 = vsub.f32 %v364, %v775
          %v829 = vsub.f32 %v365, %v775
          %v830 = vsub.f32 %v366, %v780
          %v831 = vsub.f32 %v367, %v780
          %v832 = vsub.f32 %v368, %v785
          %v833 = vsub.f32 %v369, %v785
          %v834 = vsub.f32 %v370, %v790
          %v835 = vsub.f32 %v371, %v790
          %v836 = vsub.f32 %v372, %v795
          %v837 = vsub.f32 %v373, %v795
          %v838 = vsub.f32 %v374, %v800
          %v839 = vsub.f32 %v375, %v800
          %v840 = vsub.f32 %v376, %v805
          %v841 = vsub.f32 %v377, %v805
          %v842 = vsub.f32 %v378, %v810
          %v843 = vsub.f32 %v379, %v810
          %v844 = vmul.f32 %v812, %v812
          %v845 = vmul.f32 %v813, %v813
          %v846 = vmul.f32 %v814, %v814
          %v847 = vmul.f32 %v815, %v815
          %v848 = vmul.f32 %v816, %v816
          %v849 = vmul.f32 %v817, %v817
          %v850 = vmul.f32 %v818, %v818
          %v851 = vmul.f32 %v819, %v819
          %v852 = vmul.f32 %v820, %v820
          %v853 = vmul.f32 %v821, %v821
          %v854 = vmul.f32 %v822, %v822
          %v855 = vmul.f32 %v823, %v823
          %v856 = vmul.f32 %v824, %v824
          %v857 = vmul.f32 %v825, %v825
          %v858 = vmul.f32 %v826, %v826
          %v859 = vmul.f32 %v827, %v827
          %v860 = vmul.f32 %v828, %v828
          %v861 = vmul.f32 %v829, %v829
          %v862 = vmul.f32 %v830, %v830
          %v863 = vmul.f32 %v831, %v831
          %v864 = vmul.f32 %v832, %v832
          %v865 = vmul.f32 %v833, %v833
          %v866 = vmul.f32 %v834, %v834
          %v867 = vmul.f32 %v835, %v835
          %v868 = vmul.f32 %v836, %v836
          %v869 = vmul.f32 %v837, %v837
          %v870 = vmul.f32 %v838, %v838
          %v871 = vmul.f32 %v839, %v839
          %v872 = vmul.f32 %v840, %v840
          %v873 = vmul.f32 %v841, %v841
          %v874 = vmul.f32 %v842, %v842
          %v875 = vmul.f32 %v843, %v843
          %v876 = vadd.f32 %v844, %v845
          %877 = vadd.xlane.f32.xlu0 %v876
          %v878 = vpop.xlane.xlu0 %877
          %v879 = vadd.f32 %v846, %v847
          %880 = vadd.xlane.f32.xlu0 %v879
          %v881 = vpop.xlane.xlu0 %880
          %v882 = vadd.f32 %v848, %v849
          %883 = vadd.xlane.f32.xlu0 %v882
          %v884 = vpop.xlane.xlu0 %883
          %v885 = vadd.f32 %v850, %v851
          %886 = vadd.xlane.f32.xlu0 %v885
          %v887 = vpop.xlane.xlu0 %886
          %v888 = vadd.f32 %v852, %v853
          %889 = vadd.xlane.f32.xlu0 %v888
          %v890 = vpop.xlane.xlu0 %889
          %v891 = vadd.f32 %v854, %v855
          %892 = vadd.xlane.f32.xlu0 %v891
          %v893 = vpop.xlane.xlu0 %892
          %v894 = vadd.f32 %v856, %v857
          %895 = vadd.xlane.f32.xlu0 %v894
          %v896 = vpop.xlane.xlu0 %895
          %v897 = vadd.f32 %v858, %v859
          %898 = vadd.xlane.f32.xlu0 %v897
          %v899 = vpop.xlane.xlu0 %898
          %v900 = vadd.f32 %v860, %v861
          %901 = vadd.xlane.f32.xlu0 %v900
          %v902 = vpop.xlane.xlu0 %901
          %v903 = vadd.f32 %v862, %v863
          %904 = vadd.xlane.f32.xlu0 %v903
          %v905 = vpop.xlane.xlu0 %904
          %v906 = vadd.f32 %v864, %v865
          %907 = vadd.xlane.f32.xlu0 %v906
          %v908 = vpop.xlane.xlu0 %907
          %v909 = vadd.f32 %v866, %v867
          %910 = vadd.xlane.f32.xlu0 %v909
          %v911 = vpop.xlane.xlu0 %910
          %v912 = vadd.f32 %v868, %v869
          %913 = vadd.xlane.f32.xlu0 %v912
          %v914 = vpop.xlane.xlu0 %913
          %v915 = vadd.f32 %v870, %v871
          %916 = vadd.xlane.f32.xlu0 %v915
          %v917 = vpop.xlane.xlu0 %916
          %v918 = vadd.f32 %v872, %v873
          %919 = vadd.xlane.f32.xlu0 %v918
          %v920 = vpop.xlane.xlu0 %919
          %v921 = vadd.f32 %v874, %v875
          %922 = vadd.xlane.f32.xlu0 %v921
          %v923 = vpop.xlane.xlu0 %922
          %924 = vmatprep.subr.mxu0 0.0
          %925 = vmatpush1.msra.mxu0 %v878
          %926 = vmatprep.subr.mxu0 0.0
          %927 = vmatpush1.msra.mxu0 %v881
          %928 = vmatprep.subr.mxu0 0.0
          %929 = vmatpush1.msra.mxu0 %v884
          %930 = vmatprep.subr.mxu0 0.0
          %931 = vmatpush1.msra.mxu0 %v887
          %932 = vmatprep.subr.mxu0 0.0
          %933 = vmatpush1.msra.mxu0 %v890
          %934 = vmatprep.subr.mxu0 0.0
          %935 = vmatpush1.msra.mxu0 %v893
          %936 = vmatprep.subr.mxu0 0.0
          %937 = vmatpush1.msra.mxu0 %v896
          %938 = vmatprep.subr.mxu0 0.0
          %939 = vmatpush1.msra.mxu0 %v899
          %940 = vmatprep.subr.mxu0 0.0
          %941 = vmatpush1.msra.mxu0 %v902
          %942 = vmatprep.subr.mxu0 0.0
          %943 = vmatpush1.msra.mxu0 %v905
          %944 = vmatprep.subr.mxu0 0.0
          %945 = vmatpush1.msra.mxu0 %v908
          %946 = vmatprep.subr.mxu0 0.0
          %947 = vmatpush1.msra.mxu0 %v911
          %948 = vmatprep.subr.mxu0 0.0
          %949 = vmatpush1.msra.mxu0 %v914
          %950 = vmatprep.subr.mxu0 0.0
          %951 = vmatpush1.msra.mxu0 %v917
          %952 = vmatprep.subr.mxu0 0.0
          %953 = vmatpush1.msra.mxu0 %v920
          %954 = vmatprep.subr.mxu0 0.0
          %955 = vmatpush1.msra.mxu0 %v923
          %956 = vmatprep.subr.mxu0 0.0
          %957 = vmatpush1.msra.mxu0 0.0
          %958 = vmatprep.subr.mxu0 0.0
          %959 = vmatpush1.msra.mxu0 0.0
          %960 = vmatprep.subr.mxu0 0.0
          %961 = vmatpush1.msra.mxu0 0.0
          %962 = vmatprep.subr.mxu0 0.0
          %963 = vmatpush1.msra.mxu0 0.0
          %964 = vmatprep.subr.mxu0 0.0
          %965 = vmatpush1.msra.mxu0 0.0
          %966 = vmatprep.subr.mxu0 0.0
          %967 = vmatpush1.msra.mxu0 0.0
          %968 = vmatprep.subr.mxu0 0.0
          %969 = vmatpush1.msra.mxu0 0.0
          %970 = vmatprep.subr.mxu0 0.0
          %971 = vmatpush1.msra.mxu0 0.0
          %972 = vmatprep.subr.mxu0 0.0
          %973 = vmatpush1.msra.mxu0 0.0
          %974 = vmatprep.subr.mxu0 0.0
          %975 = vmatpush1.msra.mxu0 0.0
          %976 = vmatprep.subr.mxu0 0.0
          %977 = vmatpush1.msra.mxu0 0.0
          %978 = vmatprep.subr.mxu0 0.0
          %979 = vmatpush1.msra.mxu0 0.0
          %980 = vmatprep.subr.mxu0 0.0
          %981 = vmatpush1.msra.mxu0 0.0
          %982 = vmatprep.subr.mxu0 0.0
          %983 = vmatpush1.msra.mxu0 0.0
          %984 = vmatprep.subr.mxu0 0.0
          %985 = vmatpush1.msra.mxu0 0.0
          %986 = vmatprep.subr.mxu0 0.0
          %987 = vmatpush1.msra.mxu0 0.0
          %988 = vmatprep.mubr.f32.mxu0 0.0
          %989 = vmatmul.mubr.f32.gmra.mrb[0].mxu0 %v428
          %v990 = vpop.f32.mrb[0].mxu0
          %v991 = vadd.f32 0.0, %v990
          %v992 = vpop.f32.mrb[0].mxu0
          %993 = vmatprep.mubr.f32.mxu0 0.0
          %994 = vmatmul.mubr.f32.gmra.mrb[0].mxu0 %v429
          %v995 = vpop.f32.mrb[0].mxu0
          %v996 = vadd.f32 0.0, %v995
          %v997 = vpop.f32.mrb[0].mxu0
          %998 = vmatprep.mubr.f32.mxu0 0.0
          %999 = vmatmul.mubr.f32.gmra.mrb[0].mxu0 %v430
          %v1000 = vpop.f32.mrb[0].mxu0
          %v1001 = vadd.f32 0.0, %v1000
          %v1002 = vpop.f32.mrb[0].mxu0
          %1003 = vmatprep.mubr.f32.mxu0 0.0
          %1004 = vmatmul.mubr.f32.gmra.mrb[0].mxu0 %v431
          %v1005 = vpop.f32.mrb[0].mxu0
          %v1006 = vadd.f32 0.0, %v1005
          %v1007 = vpop.f32.mrb[0].mxu0
          %1008 = vdwg.mxu0
          %v1009 = vmul.f32 %v991, %v517
          %v1010 = vmul.f32 %v996, %v517
          %v1011 = vmul.f32 %v1001, %v517
          %v1012 = vmul.f32 %v1006, %v517
          %1013 = vmatprep.subr.mxu0 0.0
          %1014 = vmatpush1.msra.mxu0 %v1009
          %1015 = vmatprep.subr.mxu0 0.0
          %1016 = vmatpush1.msra.mxu0 %v1010
          %1017 = vmatprep.subr.mxu0 0.0
          %1018 = vmatpush1.msra.mxu0 %v1011
          %1019 = vmatprep.subr.mxu0 0.0
          %1020 = vmatpush1.msra.mxu0 %v1012
          %1021 = vmatprep.subr.mxu0 0.0
          %1022 = vmatpush1.msra.mxu0 0.0
          %1023 = vmatprep.subr.mxu0 0.0
          %1024 = vmatpush1.msra.mxu0 0.0
          %1025 = vmatprep.subr.mxu0 0.0
          %1026 = vmatpush1.msra.mxu0 0.0
          %1027 = vmatprep.subr.mxu0 0.0
          %1028 = vmatpush1.msra.mxu0 0.0
          %1029 = vmatprep.subr.mxu0 0.0
          %1030 = vmatpush1.msra.mxu0 0.0
          %1031 = vmatprep.subr.mxu0 0.0
          %1032 = vmatpush1.msra.mxu0 0.0
          %1033 = vmatprep.subr.mxu0 0.0
          %1034 = vmatpush1.msra.mxu0 0.0
          %1035 = vmatprep.subr.mxu0 0.0
          %1036 = vmatpush1.msra.mxu0 0.0
          %1037 = vmatprep.subr.mxu0 0.0
          %1038 = vmatpush1.msra.mxu0 0.0
          %1039 = vmatprep.subr.mxu0 0.0
          %1040 = vmatpush1.msra.mxu0 0.0
          %1041 = vmatprep.subr.mxu0 0.0
          %1042 = vmatpush1.msra.mxu0 0.0
          %1043 = vmatprep.subr.mxu0 0.0
          %1044 = vmatpush1.msra.mxu0 0.0
          %1045 = vmatprep.subr.mxu0 0.0
          %1046 = vmatpush1.msra.mxu0 0.0
          %1047 = vmatprep.subr.mxu0 0.0
          %1048 = vmatpush1.msra.mxu0 0.0
          %1049 = vmatprep.subr.mxu0 0.0
          %1050 = vmatpush1.msra.mxu0 0.0
          %1051 = vmatprep.subr.mxu0 0.0
          %1052 = vmatpush1.msra.mxu0 0.0
          %1053 = vmatprep.subr.mxu0 0.0
          %1054 = vmatpush1.msra.mxu0 0.0
          %1055 = vmatprep.subr.mxu0 0.0
          %1056 = vmatpush1.msra.mxu0 0.0
          %1057 = vmatprep.subr.mxu0 0.0
          %1058 = vmatpush1.msra.mxu0 0.0
          %1059 = vmatprep.subr.mxu0 0.0
          %1060 = vmatpush1.msra.mxu0 0.0
          %1061 = vmatprep.subr.mxu0 0.0
          %1062 = vmatpush1.msra.mxu0 0.0
          %1063 = vmatprep.subr.mxu0 0.0
          %1064 = vmatpush1.msra.mxu0 0.0
          %1065 = vmatprep.subr.mxu0 0.0
          %1066 = vmatpush1.msra.mxu0 0.0
          %1067 = vmatprep.subr.mxu0 0.0
          %1068 = vmatpush1.msra.mxu0 0.0
          %1069 = vmatprep.subr.mxu0 0.0
          %1070 = vmatpush1.msra.mxu0 0.0
          %1071 = vmatprep.subr.mxu0 0.0
          %1072 = vmatpush1.msra.mxu0 0.0
          %1073 = vmatprep.subr.mxu0 0.0
          %1074 = vmatpush1.msra.mxu0 0.0
          %1075 = vmatprep.subr.mxu0 0.0
          %1076 = vmatpush1.msra.mxu0 0.0
          %1077 = vmatprep.mubr.f32.mxu0 0.0
          %1078 = vmatmul.mubr.f32.gmra.mrb[0].mxu0 %v540
          %v1079 = vpop.f32.mrb[0].mxu0
          %v1080 = vadd.f32 1e-06, %v1079
          %v1081 = vpop.f32.mrb[0].mxu0
          %1082 = vmatprep.mubr.f32.mxu0 0.0
          %1083 = vmatmul.mubr.f32.gmra.mrb[0].mxu0 %v543
          %v1084 = vpop.f32.mrb[0].mxu0
          %v1085 = vadd.f32 1e-06, %v1084
          %v1086 = vpop.f32.mrb[0].mxu0
          %1087 = vmatprep.mubr.f32.mxu0 0.0
          %1088 = vmatmul.mubr.f32.gmra.mrb[0].mxu0 %v546
          %v1089 = vpop.f32.mrb[0].mxu0
          %v1090 = vadd.f32 1e-06, %v1089
          %v1091 = vpop.f32.mrb[0].mxu0
          %1092 = vmatprep.mubr.f32.mxu0 0.0
          %1093 = vmatmul.mubr.f32.gmra.mrb[0].mxu0 %v549
          %v1094 = vpop.f32.mrb[0].mxu0
          %v1095 = vadd.f32 1e-06, %v1094
          %v1096 = vpop.f32.mrb[0].mxu0
          %1097 = vmatprep.mubr.f32.mxu0 0.0
          %1098 = vmatmul.mubr.f32.gmra.mrb[0].mxu0 %v552
          %v1099 = vpop.f32.mrb[0].mxu0
          %v1100 = vadd.f32 1e-06, %v1099
          %v1101 = vpop.f32.mrb[0].mxu0
          %1102 = vmatprep.mubr.f32.mxu0 0.0
          %1103 = vmatmul.mubr.f32.gmra.mrb[0].mxu0 %v555
          %v1104 = vpop.f32.mrb[0].mxu0
          %v1105 = vadd.f32 1e-06, %v1104
          %v1106 = vpop.f32.mrb[0].mxu0
          %1107 = vmatprep.mubr.f32.mxu0 0.0
          %1108 = vmatmul.mubr.f32.gmra.mrb[0].mxu0 %v558
          %v1109 = vpop.f32.mrb[0].mxu0
          %v1110 = vadd.f32 1e-06, %v1109
          %v1111 = vpop.f32.mrb[0].mxu0
          %1112 = vmatprep.mubr.f32.mxu0 0.0
          %1113 = vmatmul.mubr.f32.gmra.mrb[0].mxu0 %v561
          %v1114 = vpop.f32.mrb[0].mxu0
          %v1115 = vadd.f32 1e-06, %v1114
          %v1116 = vpop.f32.mrb[0].mxu0
          %1117 = vmatprep.mubr.f32.mxu0 0.0
          %1118 = vmatmul.mubr.f32.gmra.mrb[0].mxu0 %v564
          %v1119 = vpop.f32.mrb[0].mxu0
          %v1120 = vadd.f32 1e-06, %v1119
          %v1121 = vpop.f32.mrb[0].mxu0
          %1122 = vmatprep.mubr.f32.mxu0 0.0
          %1123 = vmatmul.mubr.f32.gmra.mrb[0].mxu0 %v567
          %v1124 = vpop.f32.mrb[0].mxu0
          %v1125 = vadd.f32 1e-06, %v1124
          %v1126 = vpop.f32.mrb[0].mxu0
          %1127 = vmatprep.mubr.f32.mxu0 0.0
          %1128 = vmatmul.mubr.f32.gmra.mrb[0].mxu0 %v570
          %v1129 = vpop.f32.mrb[0].mxu0
          %v1130 = vadd.f32 1e-06, %v1129
          %v1131 = vpop.f32.mrb[0].mxu0
          %1132 = vmatprep.mubr.f32.mxu0 0.0
          %1133 = vmatmul.mubr.f32.gmra.mrb[0].mxu0 %v573
          %v1134 = vpop.f32.mrb[0].mxu0
          %v1135 = vadd.f32 1e-06, %v1134
          %v1136 = vpop.f32.mrb[0].mxu0
          %1137 = vmatprep.mubr.f32.mxu0 0.0
          %1138 = vmatmul.mubr.f32.gmra.mrb[0].mxu0 %v576
          %v1139 = vpop.f32.mrb[0].mxu0
          %v1140 = vadd.f32 1e-06, %v1139
          %v1141 = vpop.f32.mrb[0].mxu0
          %1142 = vmatprep.mubr.f32.mxu0 0.0
          %1143 = vmatmul.mubr.f32.gmra.mrb[0].mxu0 %v579
          %v1144 = vpop.f32.mrb[0].mxu0
          %v1145 = vadd.f32 1e-06, %v1144
          %v1146 = vpop.f32.mrb[0].mxu0
          %1147 = vmatprep.mubr.f32.mxu0 0.0
          %1148 = vmatmul.mubr.f32.gmra.mrb[0].mxu0 %v582
          %v1149 = vpop.f32.mrb[0].mxu0
          %v1150 = vadd.f32 1e-06, %v1149
          %v1151 = vpop.f32.mrb[0].mxu0
          %1152 = vmatprep.mubr.f32.mxu0 0.0
          %1153 = vmatmul.mubr.f32.gmra.mrb[0].mxu0 %v585
          %v1154 = vpop.f32.mrb[0].mxu0
          %v1155 = vadd.f32 1e-06, %v1154
          %v1156 = vpop.f32.mrb[0].mxu0
          %1157 = vdwg.mxu0
          %v1158 = vrsqrt.pop %v1080
          %v1159 = vrsqrt.pop %v1085
          %v1160 = vrsqrt.pop %v1090
          %v1161 = vrsqrt.pop %v1095
          %v1162 = vrsqrt.pop %v1100
          %v1163 = vrsqrt.pop %v1105
          %v1164 = vrsqrt.pop %v1110
          %v1165 = vrsqrt.pop %v1115
          %v1166 = vrsqrt.pop %v1120
          %v1167 = vrsqrt.pop %v1125
          %v1168 = vrsqrt.pop %v1130
          %v1169 = vrsqrt.pop %v1135
          %v1170 = vrsqrt.pop %v1140
          %v1171 = vrsqrt.pop %v1145
          %v1172 = vrsqrt.pop %v1150
          %v1173 = vrsqrt.pop %v1155
          %1175 = vset.pattern.permute.xlu0 0
          %1176 = vperm.xlu0 %1175, %v1158
          %v1177 = vpop.permute.xlu0 %1176
          %1180 = vset.pattern.permute.xlu0 0
          %1181 = vperm.xlu0 %1180, %v1159
          %v1182 = vpop.permute.xlu0 %1181
          %1185 = vset.pattern.permute.xlu0 0
          %1186 = vperm.xlu0 %1185, %v1160
          %v1187 = vpop.permute.xlu0 %1186
          %1190 = vset.pattern.permute.xlu0 0
          %1191 = vperm.xlu0 %1190, %v1161
          %v1192 = vpop.permute.xlu0 %1191
          %1195 = vset.pattern.permute.xlu0 0
          %1196 = vperm.xlu0 %1195, %v1162
          %v1197 = vpop.permute.xlu0 %1196
          %1200 = vset.pattern.permute.xlu0 0
          %1201 = vperm.xlu0 %1200, %v1163
          %v1202 = vpop.permute.xlu0 %1201
          %1205 = vset.pattern.permute.xlu0 0
          %1206 = vperm.xlu0 %1205, %v1164
          %v1207 = vpop.permute.xlu0 %1206
          %1210 = vset.pattern.permute.xlu0 0
          %1211 = vperm.xlu0 %1210, %v1165
          %v1212 = vpop.permute.xlu0 %1211
          %1215 = vset.pattern.permute.xlu0 0
          %1216 = vperm.xlu0 %1215, %v1166
          %v1217 = vpop.permute.xlu0 %1216
          %1220 = vset.pattern.permute.xlu0 0
          %1221 = vperm.xlu0 %1220, %v1167
          %v1222 = vpop.permute.xlu0 %1221
          %1225 = vset.pattern.permute.xlu0 0
          %1226 = vperm.xlu0 %1225, %v1168
          %v1227 = vpop.permute.xlu0 %1226
          %1230 = vset.pattern.permute.xlu0 0
          %1231 = vperm.xlu0 %1230, %v1169
          %v1232 = vpop.permute.xlu0 %1231
          %1235 = vset.pattern.permute.xlu0 0
          %1236 = vperm.xlu0 %1235, %v1170
          %v1237 = vpop.permute.xlu0 %1236
          %1240 = vset.pattern.permute.xlu0 0
          %1241 = vperm.xlu0 %1240, %v1171
          %v1242 = vpop.permute.xlu0 %1241
          %1245 = vset.pattern.permute.xlu0 0
          %1246 = vperm.xlu0 %1245, %v1172
          %v1247 = vpop.permute.xlu0 %1246
          %1250 = vset.pattern.permute.xlu0 0
          %1251 = vperm.xlu0 %1250, %v1173
          %v1252 = vpop.permute.xlu0 %1251
          %v1254 = vmul.f32 %v812, %v1177
          %v1255 = vmul.f32 %v813, %v1177
          %v1256 = vmul.f32 %v814, %v1182
          %v1257 = vmul.f32 %v815, %v1182
          %v1258 = vmul.f32 %v816, %v1187
          %v1259 = vmul.f32 %v817, %v1187
          %v1260 = vmul.f32 %v818, %v1192
          %v1261 = vmul.f32 %v819, %v1192
          %v1262 = vmul.f32 %v820, %v1197
          %v1263 = vmul.f32 %v821, %v1197
          %v1264 = vmul.f32 %v822, %v1202
          %v1265 = vmul.f32 %v823, %v1202
          %v1266 = vmul.f32 %v824, %v1207
          %v1267 = vmul.f32 %v825, %v1207
          %v1268 = vmul.f32 %v826, %v1212
          %v1269 = vmul.f32 %v827, %v1212
          %v1270 = vmul.f32 %v828, %v1217
          %v1271 = vmul.f32 %v829, %v1217
          %v1272 = vmul.f32 %v830, %v1222
          %v1273 = vmul.f32 %v831, %v1222
          %v1274 = vmul.f32 %v832, %v1227
          %v1275 = vmul.f32 %v833, %v1227
          %v1276 = vmul.f32 %v834, %v1232
          %v1277 = vmul.f32 %v835, %v1232
          %v1278 = vmul.f32 %v836, %v1237
          %v1279 = vmul.f32 %v837, %v1237
          %v1280 = vmul.f32 %v838, %v1242
          %v1281 = vmul.f32 %v839, %v1242
          %v1282 = vmul.f32 %v840, %v1247
          %v1283 = vmul.f32 %v841, %v1247
          %v1284 = vmul.f32 %v842, %v1252
          %v1285 = vmul.f32 %v843, %v1252
          %v1286 = vld [vmem:[%s1] sm:$0xff]
          %v1287 = vld [vmem:[%s1 + $0x8] sm:$0xff]
          %v1288 = vld [vmem:[%s1 + $0x10] sm:$0xff]
          %v1289 = vld [vmem:[%s1 + $0x18] sm:$0xff]
          %v1290 = vld [vmem:[%s1 + $0x20] sm:$0xff]
          %v1291 = vld [vmem:[%s1 + $0x28] sm:$0xff]
          %v1292 = vld [vmem:[%s1 + $0x30] sm:$0xff]
          %v1293 = vld [vmem:[%s1 + $0x38] sm:$0xff]
          %v1294 = vld [vmem:[%s1 + $0x40] sm:$0xff]
          %v1295 = vld [vmem:[%s1 + $0x48] sm:$0xff]
          %v1296 = vld [vmem:[%s1 + $0x50] sm:$0xff]
          %v1297 = vld [vmem:[%s1 + $0x58] sm:$0xff]
          %v1298 = vld [vmem:[%s1 + $0x60] sm:$0xff]
          %v1299 = vld [vmem:[%s1 + $0x68] sm:$0xff]
          %v1300 = vld [vmem:[%s1 + $0x70] sm:$0xff]
          %v1301 = vld [vmem:[%s1 + $0x78] sm:$0xff]
          %1303 = vset.pattern.permute.xlu0 0
          %1304 = vperm.xlu0 %1303, %v1286
          %v1305 = vpop.permute.xlu0 %1304
          %1308 = vset.pattern.permute.xlu0 0
          %1309 = vperm.xlu0 %1308, %v1287
          %v1310 = vpop.permute.xlu0 %1309
          %1313 = vset.pattern.permute.xlu0 0
          %1314 = vperm.xlu0 %1313, %v1288
          %v1315 = vpop.permute.xlu0 %1314
          %1318 = vset.pattern.permute.xlu0 0
          %1319 = vperm.xlu0 %1318, %v1289
          %v1320 = vpop.permute.xlu0 %1319
          %1323 = vset.pattern.permute.xlu0 0
          %1324 = vperm.xlu0 %1323, %v1290
          %v1325 = vpop.permute.xlu0 %1324
          %1328 = vset.pattern.permute.xlu0 0
          %1329 = vperm.xlu0 %1328, %v1291
          %v1330 = vpop.permute.xlu0 %1329
          %1333 = vset.pattern.permute.xlu0 0
          %1334 = vperm.xlu0 %1333, %v1292
          %v1335 = vpop.permute.xlu0 %1334
          %1338 = vset.pattern.permute.xlu0 0
          %1339 = vperm.xlu0 %1338, %v1293
          %v1340 = vpop.permute.xlu0 %1339
          %1343 = vset.pattern.permute.xlu0 0
          %1344 = vperm.xlu0 %1343, %v1294
          %v1345 = vpop.permute.xlu0 %1344
          %1348 = vset.pattern.permute.xlu0 0
          %1349 = vperm.xlu0 %1348, %v1295
          %v1350 = vpop.permute.xlu0 %1349
          %1353 = vset.pattern.permute.xlu0 0
          %1354 = vperm.xlu0 %1353, %v1296
          %v1355 = vpop.permute.xlu0 %1354
          %1358 = vset.pattern.permute.xlu0 0
          %1359 = vperm.xlu0 %1358, %v1297
          %v1360 = vpop.permute.xlu0 %1359
          %1363 = vset.pattern.permute.xlu0 0
          %1364 = vperm.xlu0 %1363, %v1298
          %v1365 = vpop.permute.xlu0 %1364
          %1368 = vset.pattern.permute.xlu0 0
          %1369 = vperm.xlu0 %1368, %v1299
          %v1370 = vpop.permute.xlu0 %1369
          %1373 = vset.pattern.permute.xlu0 0
          %1374 = vperm.xlu0 %1373, %v1300
          %v1375 = vpop.permute.xlu0 %1374
          %1378 = vset.pattern.permute.xlu0 0
          %1379 = vperm.xlu0 %1378, %v1301
          %v1380 = vpop.permute.xlu0 %1379
          %v1382 = vmul.f32 %v1254, %v1305
          %v1383 = vmul.f32 %v1255, %v1305
          %v1384 = vmul.f32 %v1256, %v1310
          %v1385 = vmul.f32 %v1257, %v1310
          %v1386 = vmul.f32 %v1258, %v1315
          %v1387 = vmul.f32 %v1259, %v1315
          %v1388 = vmul.f32 %v1260, %v1320
          %v1389 = vmul.f32 %v1261, %v1320
          %v1390 = vmul.f32 %v1262, %v1325
          %v1391 = vmul.f32 %v1263, %v1325
          %v1392 = vmul.f32 %v1264, %v1330
          %v1393 = vmul.f32 %v1265, %v1330
          %v1394 = vmul.f32 %v1266, %v1335
          %v1395 = vmul.f32 %v1267, %v1335
          %v1396 = vmul.f32 %v1268, %v1340
          %v1397 = vmul.f32 %v1269, %v1340
          %v1398 = vmul.f32 %v1270, %v1345
          %v1399 = vmul.f32 %v1271, %v1345
          %v1400 = vmul.f32 %v1272, %v1350
          %v1401 = vmul.f32 %v1273, %v1350
          %v1402 = vmul.f32 %v1274, %v1355
          %v1403 = vmul.f32 %v1275, %v1355
          %v1404 = vmul.f32 %v1276, %v1360
          %v1405 = vmul.f32 %v1277, %v1360
          %v1406 = vmul.f32 %v1278, %v1365
          %v1407 = vmul.f32 %v1279, %v1365
          %v1408 = vmul.f32 %v1280, %v1370
          %v1409 = vmul.f32 %v1281, %v1370
          %v1410 = vmul.f32 %v1282, %v1375
          %v1411 = vmul.f32 %v1283, %v1375
          %v1412 = vmul.f32 %v1284, %v1380
          %v1413 = vmul.f32 %v1285, %v1380
          %v1414 = vld [vmem:[%s2] sm:$0xff]
          %v1415 = vld [vmem:[%s2 + $0x8] sm:$0xff]
          %v1416 = vld [vmem:[%s2 + $0x10] sm:$0xff]
          %v1417 = vld [vmem:[%s2 + $0x18] sm:$0xff]
          %v1418 = vld [vmem:[%s2 + $0x20] sm:$0xff]
          %v1419 = vld [vmem:[%s2 + $0x28] sm:$0xff]
          %v1420 = vld [vmem:[%s2 + $0x30] sm:$0xff]
          %v1421 = vld [vmem:[%s2 + $0x38] sm:$0xff]
          %v1422 = vld [vmem:[%s2 + $0x40] sm:$0xff]
          %v1423 = vld [vmem:[%s2 + $0x48] sm:$0xff]
          %v1424 = vld [vmem:[%s2 + $0x50] sm:$0xff]
          %v1425 = vld [vmem:[%s2 + $0x58] sm:$0xff]
          %v1426 = vld [vmem:[%s2 + $0x60] sm:$0xff]
          %v1427 = vld [vmem:[%s2 + $0x68] sm:$0xff]
          %v1428 = vld [vmem:[%s2 + $0x70] sm:$0xff]
          %v1429 = vld [vmem:[%s2 + $0x78] sm:$0xff]
          %1431 = vset.pattern.permute.xlu0 0
          %1432 = vperm.xlu0 %1431, %v1414
          %v1433 = vpop.permute.xlu0 %1432
          %1436 = vset.pattern.permute.xlu0 0
          %1437 = vperm.xlu0 %1436, %v1415
          %v1438 = vpop.permute.xlu0 %1437
          %1441 = vset.pattern.permute.xlu0 0
          %1442 = vperm.xlu0 %1441, %v1416
          %v1443 = vpop.permute.xlu0 %1442
          %1446 = vset.pattern.permute.xlu0 0
          %1447 = vperm.xlu0 %1446, %v1417
          %v1448 = vpop.permute.xlu0 %1447
          %1451 = vset.pattern.permute.xlu0 0
          %1452 = vperm.xlu0 %1451, %v1418
          %v1453 = vpop.permute.xlu0 %1452
          %1456 = vset.pattern.permute.xlu0 0
          %1457 = vperm.xlu0 %1456, %v1419
          %v1458 = vpop.permute.xlu0 %1457
          %1461 = vset.pattern.permute.xlu0 0
          %1462 = vperm.xlu0 %1461, %v1420
          %v1463 = vpop.permute.xlu0 %1462
          %1466 = vset.pattern.permute.xlu0 0
          %1467 = vperm.xlu0 %1466, %v1421
          %v1468 = vpop.permute.xlu0 %1467
          %1471 = vset.pattern.permute.xlu0 0
          %1472 = vperm.xlu0 %1471, %v1422
          %v1473 = vpop.permute.xlu0 %1472
          %1476 = vset.pattern.permute.xlu0 0
          %1477 = vperm.xlu0 %1476, %v1423
          %v1478 = vpop.permute.xlu0 %1477
          %1481 = vset.pattern.permute.xlu0 0
          %1482 = vperm.xlu0 %1481, %v1424
          %v1483 = vpop.permute.xlu0 %1482
          %1486 = vset.pattern.permute.xlu0 0
          %1487 = vperm.xlu0 %1486, %v1425
          %v1488 = vpop.permute.xlu0 %1487
          %1491 = vset.pattern.permute.xlu0 0
          %1492 = vperm.xlu0 %1491, %v1426
          %v1493 = vpop.permute.xlu0 %1492
          %1496 = vset.pattern.permute.xlu0 0
          %1497 = vperm.xlu0 %1496, %v1427
          %v1498 = vpop.permute.xlu0 %1497
          %1501 = vset.pattern.permute.xlu0 0
          %1502 = vperm.xlu0 %1501, %v1428
          %v1503 = vpop.permute.xlu0 %1502
          %1506 = vset.pattern.permute.xlu0 0
          %1507 = vperm.xlu0 %1506, %v1429
          %v1508 = vpop.permute.xlu0 %1507
          %v1510 = vadd.f32 %v1382, %v1433
          %v1511 = vadd.f32 %v1383, %v1433
          %v1512 = vadd.f32 %v1384, %v1438
          %v1513 = vadd.f32 %v1385, %v1438
          %v1514 = vadd.f32 %v1386, %v1443
          %v1515 = vadd.f32 %v1387, %v1443
          %v1516 = vadd.f32 %v1388, %v1448
          %v1517 = vadd.f32 %v1389, %v1448
          %v1518 = vadd.f32 %v1390, %v1453
          %v1519 = vadd.f32 %v1391, %v1453
          %v1520 = vadd.f32 %v1392, %v1458
          %v1521 = vadd.f32 %v1393, %v1458
          %v1522 = vadd.f32 %v1394, %v1463
          %v1523 = vadd.f32 %v1395, %v1463
          %v1524 = vadd.f32 %v1396, %v1468
          %v1525 = vadd.f32 %v1397, %v1468
          %v1526 = vadd.f32 %v1398, %v1473
          %v1527 = vadd.f32 %v1399, %v1473
          %v1528 = vadd.f32 %v1400, %v1478
          %v1529 = vadd.f32 %v1401, %v1478
          %v1530 = vadd.f32 %v1402, %v1483
          %v1531 = vadd.f32 %v1403, %v1483
          %v1532 = vadd.f32 %v1404, %v1488
          %v1533 = vadd.f32 %v1405, %v1488
          %v1534 = vadd.f32 %v1406, %v1493
          %v1535 = vadd.f32 %v1407, %v1493
          %v1536 = vadd.f32 %v1408, %v1498
          %v1537 = vadd.f32 %v1409, %v1498
          %v1538 = vadd.f32 %v1410, %v1503
          %v1539 = vadd.f32 %v1411, %v1503
          %v1540 = vadd.f32 %v1412, %v1508
          %v1541 = vadd.f32 %v1413, %v1508
          %v1542 = vld [vmem:[%s5] sm:$0xf]
          %v1543 = vld [vmem:[%s5 + $0x4] sm:$0xf]
          %v1544 = vld [vmem:[%s5 + $0x8] sm:$0xf]
          %v1545 = vld [vmem:[%s5 + $0xc] sm:$0xf]
          %v1546 = vld [vmem:[%s5 + $0x10] sm:$0xf]
          %v1547 = vld [vmem:[%s5 + $0x14] sm:$0xf]
          %v1548 = vld [vmem:[%s5 + $0x18] sm:$0xf]
          %v1549 = vld [vmem:[%s5 + $0x1c] sm:$0xf]
          %v1550 = vld [vmem:[%s5 + $0x20] sm:$0xf]
          %v1551 = vld [vmem:[%s5 + $0x24] sm:$0xf]
          %v1552 = vld [vmem:[%s5 + $0x28] sm:$0xf]
          %v1553 = vld [vmem:[%s5 + $0x2c] sm:$0xf]
          %v1554 = vld [vmem:[%s5 + $0x30] sm:$0xf]
          %v1555 = vld [vmem:[%s5 + $0x34] sm:$0xf]
          %v1556 = vld [vmem:[%s5 + $0x38] sm:$0xf]
          %v1557 = vld [vmem:[%s5 + $0x3c] sm:$0xf]
          %v1558 = vld [vmem:[%s5 + $0x40] sm:$0xf]
          %v1559 = vld [vmem:[%s5 + $0x44] sm:$0xf]
          %v1560 = vld [vmem:[%s5 + $0x48] sm:$0xf]
          %v1561 = vld [vmem:[%s5 + $0x4c] sm:$0xf]
          %v1562 = vld [vmem:[%s5 + $0x50] sm:$0xf]
          %v1563 = vld [vmem:[%s5 + $0x54] sm:$0xf]
          %v1564 = vld [vmem:[%s5 + $0x58] sm:$0xf]
          %v1565 = vld [vmem:[%s5 + $0x5c] sm:$0xf]
          %v1566 = vld [vmem:[%s5 + $0x60] sm:$0xf]
          %v1567 = vld [vmem:[%s5 + $0x64] sm:$0xf]
          %v1568 = vld [vmem:[%s5 + $0x68] sm:$0xf]
          %v1569 = vld [vmem:[%s5 + $0x6c] sm:$0xf]
          %v1570 = vld [vmem:[%s5 + $0x70] sm:$0xf]
          %v1571 = vld [vmem:[%s5 + $0x74] sm:$0xf]
          %v1572 = vld [vmem:[%s5 + $0x78] sm:$0xf]
          %v1573 = vld [vmem:[%s5 + $0x7c] sm:$0xf]
          %v1574 = vld [vmem:[%s5 + $0x80] sm:$0xf]
          %v1575 = vld [vmem:[%s5 + $0x84] sm:$0xf]
          %v1576 = vld [vmem:[%s5 + $0x88] sm:$0xf]
          %v1577 = vld [vmem:[%s5 + $0x8c] sm:$0xf]
          %v1578 = vld [vmem:[%s5 + $0x90] sm:$0xf]
          %v1579 = vld [vmem:[%s5 + $0x94] sm:$0xf]
          %v1580 = vld [vmem:[%s5 + $0x98] sm:$0xf]
          %v1581 = vld [vmem:[%s5 + $0x9c] sm:$0xf]
          %v1582 = vld [vmem:[%s5 + $0xa0] sm:$0xf]
          %v1583 = vld [vmem:[%s5 + $0xa4] sm:$0xf]
          %v1584 = vld [vmem:[%s5 + $0xa8] sm:$0xf]
          %v1585 = vld [vmem:[%s5 + $0xac] sm:$0xf]
          %v1586 = vld [vmem:[%s5 + $0xb0] sm:$0xf]
          %v1587 = vld [vmem:[%s5 + $0xb4] sm:$0xf]
          %v1588 = vld [vmem:[%s5 + $0xb8] sm:$0xf]
          %v1589 = vld [vmem:[%s5 + $0xbc] sm:$0xf]
          %v1590 = vpack.c.bf16 %v1512, %v1510
          %v1591 = vpack.c.bf16 %v1513, %v1511
          %v1592 = vpack.c.bf16 %v1516, %v1514
          %v1593 = vpack.c.bf16 %v1517, %v1515
          %v1594 = vpack.c.bf16 %v1520, %v1518
          %v1595 = vpack.c.bf16 %v1521, %v1519
          %v1596 = vpack.c.bf16 %v1524, %v1522
          %v1597 = vpack.c.bf16 %v1525, %v1523
          %v1598 = vpack.c.bf16 %v1528, %v1526
          %v1599 = vpack.c.bf16 %v1529, %v1527
          %v1600 = vpack.c.bf16 %v1532, %v1530
          %v1601 = vpack.c.bf16 %v1533, %v1531
          %v1602 = vpack.c.bf16 %v1536, %v1534
          %v1603 = vpack.c.bf16 %v1537, %v1535
          %v1604 = vpack.c.bf16 %v1540, %v1538
          %v1605 = vpack.c.bf16 %v1541, %v1539
          %v1606 = vld [vmem:[%s6] sm:$0xff]
          %v1607 = vld [vmem:[%s6 + $0x8] sm:$0xff]
          %v1608 = vld [vmem:[%s6 + $0x10] sm:$0xff]
          %v1609 = vld [vmem:[%s6 + $0x18] sm:$0xff]
          %v1610 = vld [vmem:[%s6 + $0x20] sm:$0xff]
          %v1611 = vld [vmem:[%s6 + $0x28] sm:$0xff]
          %v1612 = vld [vmem:[%s6 + $0x30] sm:$0xff]
          %v1613 = vld [vmem:[%s6 + $0x38] sm:$0xff]
          %v1614 = vld [vmem:[%s6 + $0x40] sm:$0xff]
          %v1615 = vld [vmem:[%s6 + $0x48] sm:$0xff]
          %v1616 = vld [vmem:[%s6 + $0x50] sm:$0xff]
          %v1617 = vld [vmem:[%s6 + $0x58] sm:$0xff]
          %v1618 = vld [vmem:[%s6 + $0x60] sm:$0xff]
          %v1619 = vld [vmem:[%s6 + $0x68] sm:$0xff]
          %v1620 = vld [vmem:[%s6 + $0x70] sm:$0xff]
          %v1621 = vld [vmem:[%s6 + $0x78] sm:$0xff]
          %v1622 = vld [vmem:[%s6 + $0x80] sm:$0xff]
          %v1623 = vld [vmem:[%s6 + $0x88] sm:$0xff]
          %v1624 = vld [vmem:[%s6 + $0x90] sm:$0xff]
          %v1625 = vld [vmem:[%s6 + $0x98] sm:$0xff]
          %v1626 = vld [vmem:[%s6 + $0xa0] sm:$0xff]
          %v1627 = vld [vmem:[%s6 + $0xa8] sm:$0xff]
          %v1628 = vld [vmem:[%s6 + $0xb0] sm:$0xff]
          %v1629 = vld [vmem:[%s6 + $0xb8] sm:$0xff]
          %v1630 = vld [vmem:[%s6 + $0xc0] sm:$0xff]
          %v1631 = vld [vmem:[%s6 + $0xc8] sm:$0xff]
          %v1632 = vld [vmem:[%s6 + $0xd0] sm:$0xff]
          %v1633 = vld [vmem:[%s6 + $0xd8] sm:$0xff]
          %v1634 = vld [vmem:[%s6 + $0xe0] sm:$0xff]
          %v1635 = vld [vmem:[%s6 + $0xe8] sm:$0xff]
          %v1636 = vld [vmem:[%s6 + $0xf0] sm:$0xff]
          %v1637 = vld [vmem:[%s6 + $0xf8] sm:$0xff]
          %v1638 = vld [vmem:[%s6 + $0x100] sm:$0xff]
          %v1639 = vld [vmem:[%s6 + $0x108] sm:$0xff]
          %v1640 = vld [vmem:[%s6 + $0x110] sm:$0xff]
          %v1641 = vld [vmem:[%s6 + $0x118] sm:$0xff]
          %v1642 = vld [vmem:[%s6 + $0x120] sm:$0xff]
          %v1643 = vld [vmem:[%s6 + $0x128] sm:$0xff]
          %v1644 = vld [vmem:[%s6 + $0x130] sm:$0xff]
          %v1645 = vld [vmem:[%s6 + $0x138] sm:$0xff]
          %v1646 = vld [vmem:[%s6 + $0x140] sm:$0xff]
          %v1647 = vld [vmem:[%s6 + $0x148] sm:$0xff]
          %v1648 = vld [vmem:[%s6 + $0x150] sm:$0xff]
          %v1649 = vld [vmem:[%s6 + $0x158] sm:$0xff]
          %v1650 = vld [vmem:[%s6 + $0x160] sm:$0xff]
          %v1651 = vld [vmem:[%s6 + $0x168] sm:$0xff]
          %v1652 = vld [vmem:[%s6 + $0x170] sm:$0xff]
          %v1653 = vld [vmem:[%s6 + $0x178] sm:$0xff]
          %1655 = vset.pattern.permute.xlu0 0
          %1656 = vperm.xlu0 %1655, %v1606
          %v1657 = vpop.permute.xlu0 %1656
          %1660 = vset.pattern.permute.xlu0 0
          %1661 = vperm.xlu0 %1660, %v1607
          %v1662 = vpop.permute.xlu0 %1661
          %1665 = vset.pattern.permute.xlu0 0
          %1666 = vperm.xlu0 %1665, %v1608
          %v1667 = vpop.permute.xlu0 %1666
          %1670 = vset.pattern.permute.xlu0 0
          %1671 = vperm.xlu0 %1670, %v1609
          %v1672 = vpop.permute.xlu0 %1671
          %1675 = vset.pattern.permute.xlu0 0
          %1676 = vperm.xlu0 %1675, %v1610
          %v1677 = vpop.permute.xlu0 %1676
          %1680 = vset.pattern.permute.xlu0 0
          %1681 = vperm.xlu0 %1680, %v1611
          %v1682 = vpop.permute.xlu0 %1681
          %1685 = vset.pattern.permute.xlu0 0
          %1686 = vperm.xlu0 %1685, %v1612
          %v1687 = vpop.permute.xlu0 %1686
          %1690 = vset.pattern.permute.xlu0 0
          %1691 = vperm.xlu0 %1690, %v1613
          %v1692 = vpop.permute.xlu0 %1691
          %1695 = vset.pattern.permute.xlu0 0
          %1696 = vperm.xlu0 %1695, %v1614
          %v1697 = vpop.permute.xlu0 %1696
          %1700 = vset.pattern.permute.xlu0 0
          %1701 = vperm.xlu0 %1700, %v1615
          %v1702 = vpop.permute.xlu0 %1701
          %1705 = vset.pattern.permute.xlu0 0
          %1706 = vperm.xlu0 %1705, %v1616
          %v1707 = vpop.permute.xlu0 %1706
          %1710 = vset.pattern.permute.xlu0 0
          %1711 = vperm.xlu0 %1710, %v1617
          %v1712 = vpop.permute.xlu0 %1711
          %1715 = vset.pattern.permute.xlu0 0
          %1716 = vperm.xlu0 %1715, %v1618
          %v1717 = vpop.permute.xlu0 %1716
          %1720 = vset.pattern.permute.xlu0 0
          %1721 = vperm.xlu0 %1720, %v1619
          %v1722 = vpop.permute.xlu0 %1721
          %1725 = vset.pattern.permute.xlu0 0
          %1726 = vperm.xlu0 %1725, %v1620
          %v1727 = vpop.permute.xlu0 %1726
          %1730 = vset.pattern.permute.xlu0 0
          %1731 = vperm.xlu0 %1730, %v1621
          %v1732 = vpop.permute.xlu0 %1731
          %1735 = vset.pattern.permute.xlu0 0
          %1736 = vperm.xlu0 %1735, %v1622
          %v1737 = vpop.permute.xlu0 %1736
          %1740 = vset.pattern.permute.xlu0 0
          %1741 = vperm.xlu0 %1740, %v1623
          %v1742 = vpop.permute.xlu0 %1741
          %1745 = vset.pattern.permute.xlu0 0
          %1746 = vperm.xlu0 %1745, %v1624
          %v1747 = vpop.permute.xlu0 %1746
          %1750 = vset.pattern.permute.xlu0 0
          %1751 = vperm.xlu0 %1750, %v1625
          %v1752 = vpop.permute.xlu0 %1751
          %1755 = vset.pattern.permute.xlu0 0
          %1756 = vperm.xlu0 %1755, %v1626
          %v1757 = vpop.permute.xlu0 %1756
          %1760 = vset.pattern.permute.xlu0 0
          %1761 = vperm.xlu0 %1760, %v1627
          %v1762 = vpop.permute.xlu0 %1761
          %1765 = vset.pattern.permute.xlu0 0
          %1766 = vperm.xlu0 %1765, %v1628
          %v1767 = vpop.permute.xlu0 %1766
          %1770 = vset.pattern.permute.xlu0 0
          %1771 = vperm.xlu0 %1770, %v1629
          %v1772 = vpop.permute.xlu0 %1771
          %1775 = vset.pattern.permute.xlu0 0
          %1776 = vperm.xlu0 %1775, %v1630
          %v1777 = vpop.permute.xlu0 %1776
          %1780 = vset.pattern.permute.xlu0 0
          %1781 = vperm.xlu0 %1780, %v1631
          %v1782 = vpop.permute.xlu0 %1781
          %1785 = vset.pattern.permute.xlu0 0
          %1786 = vperm.xlu0 %1785, %v1632
          %v1787 = vpop.permute.xlu0 %1786
          %1790 = vset.pattern.permute.xlu0 0
          %1791 = vperm.xlu0 %1790, %v1633
          %v1792 = vpop.permute.xlu0 %1791
          %1795 = vset.pattern.permute.xlu0 0
          %1796 = vperm.xlu0 %1795, %v1634
          %v1797 = vpop.permute.xlu0 %1796
          %1800 = vset.pattern.permute.xlu0 0
          %1801 = vperm.xlu0 %1800, %v1635
          %v1802 = vpop.permute.xlu0 %1801
          %1805 = vset.pattern.permute.xlu0 0
          %1806 = vperm.xlu0 %1805, %v1636
          %v1807 = vpop.permute.xlu0 %1806
          %1810 = vset.pattern.permute.xlu0 0
          %1811 = vperm.xlu0 %1810, %v1637
          %v1812 = vpop.permute.xlu0 %1811
          %1815 = vset.pattern.permute.xlu0 0
          %1816 = vperm.xlu0 %1815, %v1638
          %v1817 = vpop.permute.xlu0 %1816
          %1820 = vset.pattern.permute.xlu0 0
          %1821 = vperm.xlu0 %1820, %v1639
          %v1822 = vpop.permute.xlu0 %1821
          %1825 = vset.pattern.permute.xlu0 0
          %1826 = vperm.xlu0 %1825, %v1640
          %v1827 = vpop.permute.xlu0 %1826
          %1830 = vset.pattern.permute.xlu0 0
          %1831 = vperm.xlu0 %1830, %v1641
          %v1832 = vpop.permute.xlu0 %1831
          %1835 = vset.pattern.permute.xlu0 0
          %1836 = vperm.xlu0 %1835, %v1642
          %v1837 = vpop.permute.xlu0 %1836
          %1840 = vset.pattern.permute.xlu0 0
          %1841 = vperm.xlu0 %1840, %v1643
          %v1842 = vpop.permute.xlu0 %1841
          %1845 = vset.pattern.permute.xlu0 0
          %1846 = vperm.xlu0 %1845, %v1644
          %v1847 = vpop.permute.xlu0 %1846
          %1850 = vset.pattern.permute.xlu0 0
          %1851 = vperm.xlu0 %1850, %v1645
          %v1852 = vpop.permute.xlu0 %1851
          %1855 = vset.pattern.permute.xlu0 0
          %1856 = vperm.xlu0 %1855, %v1646
          %v1857 = vpop.permute.xlu0 %1856
          %1860 = vset.pattern.permute.xlu0 0
          %1861 = vperm.xlu0 %1860, %v1647
          %v1862 = vpop.permute.xlu0 %1861
          %1865 = vset.pattern.permute.xlu0 0
          %1866 = vperm.xlu0 %1865, %v1648
          %v1867 = vpop.permute.xlu0 %1866
          %1870 = vset.pattern.permute.xlu0 0
          %1871 = vperm.xlu0 %1870, %v1649
          %v1872 = vpop.permute.xlu0 %1871
          %1875 = vset.pattern.permute.xlu0 0
          %1876 = vperm.xlu0 %1875, %v1650
          %v1877 = vpop.permute.xlu0 %1876
          %1880 = vset.pattern.permute.xlu0 0
          %1881 = vperm.xlu0 %1880, %v1651
          %v1882 = vpop.permute.xlu0 %1881
          %1885 = vset.pattern.permute.xlu0 0
          %1886 = vperm.xlu0 %1885, %v1652
          %v1887 = vpop.permute.xlu0 %1886
          %1890 = vset.pattern.permute.xlu0 0
          %1891 = vperm.xlu0 %1890, %v1653
          %v1892 = vpop.permute.xlu0 %1891
          %v1942 = vunpack.c.l.b16 %v1542
          %v1943 = vunpack.c.l.b16 %v1543
          %v1944 = vunpack.c.l.b16 %v1544
          %v1945 = vunpack.c.l.b16 %v1545
          %v1946 = vunpack.c.l.b16 %v1546
          %v1947 = vunpack.c.l.b16 %v1547
          %v1948 = vunpack.c.l.b16 %v1548
          %v1949 = vunpack.c.l.b16 %v1549
          %v1950 = vunpack.c.l.b16 %v1550
          %v1951 = vunpack.c.l.b16 %v1551
          %v1952 = vunpack.c.l.b16 %v1552
          %v1953 = vunpack.c.l.b16 %v1553
          %v1954 = vunpack.c.l.b16 %v1554
          %v1955 = vunpack.c.l.b16 %v1555
          %v1956 = vunpack.c.l.b16 %v1556
          %v1957 = vunpack.c.l.b16 %v1557
          %v1958 = vunpack.c.l.b16 %v1558
          %v1959 = vunpack.c.l.b16 %v1559
          %v1960 = vunpack.c.l.b16 %v1560
          %v1961 = vunpack.c.l.b16 %v1561
          %v1962 = vunpack.c.l.b16 %v1562
          %v1963 = vunpack.c.l.b16 %v1563
          %v1964 = vunpack.c.l.b16 %v1564
          %v1965 = vunpack.c.l.b16 %v1565
          %v1966 = vunpack.c.l.b16 %v1566
          %v1967 = vunpack.c.l.b16 %v1567
          %v1968 = vunpack.c.l.b16 %v1568
          %v1969 = vunpack.c.l.b16 %v1569
          %v1970 = vunpack.c.l.b16 %v1570
          %v1971 = vunpack.c.l.b16 %v1571
          %v1972 = vunpack.c.l.b16 %v1572
          %v1973 = vunpack.c.l.b16 %v1573
          %v1974 = vunpack.c.l.b16 %v1574
          %v1975 = vunpack.c.l.b16 %v1575
          %v1976 = vunpack.c.l.b16 %v1576
          %v1977 = vunpack.c.l.b16 %v1577
          %v1978 = vunpack.c.l.b16 %v1578
          %v1979 = vunpack.c.l.b16 %v1579
          %v1980 = vunpack.c.l.b16 %v1580
          %v1981 = vunpack.c.l.b16 %v1581
          %v1982 = vunpack.c.l.b16 %v1582
          %v1983 = vunpack.c.l.b16 %v1583
          %v1984 = vunpack.c.l.b16 %v1584
          %v1985 = vunpack.c.l.b16 %v1585
          %v1986 = vunpack.c.l.b16 %v1586
          %v1987 = vunpack.c.l.b16 %v1587
          %v1988 = vunpack.c.l.b16 %v1588
          %v1989 = vunpack.c.l.b16 %v1589
          %v1990 = vpack.c.b16 %v1943, %v1942
          %v1991 = vpack.c.b16 %v1945, %v1944
          %v1992 = vpack.c.b16 %v1947, %v1946
          %v1993 = vpack.c.b16 %v1949, %v1948
          %v1994 = vpack.c.b16 %v1951, %v1950
          %v1995 = vpack.c.b16 %v1953, %v1952
          %v1996 = vpack.c.b16 %v1955, %v1954
          %v1997 = vpack.c.b16 %v1957, %v1956
          %v1998 = vpack.c.b16 %v1959, %v1958
          %v1999 = vpack.c.b16 %v1961, %v1960
          %v2000 = vpack.c.b16 %v1963, %v1962
          %v2001 = vpack.c.b16 %v1965, %v1964
          %v2002 = vpack.c.b16 %v1967, %v1966
          %v2003 = vpack.c.b16 %v1969, %v1968
          %v2004 = vpack.c.b16 %v1971, %v1970
          %v2005 = vpack.c.b16 %v1973, %v1972
          %v2006 = vpack.c.b16 %v1975, %v1974
          %v2007 = vpack.c.b16 %v1977, %v1976
          %v2008 = vpack.c.b16 %v1979, %v1978
          %v2009 = vpack.c.b16 %v1981, %v1980
          %v2010 = vpack.c.b16 %v1983, %v1982
          %v2011 = vpack.c.b16 %v1985, %v1984
          %v2012 = vpack.c.b16 %v1987, %v1986
          %v2013 = vpack.c.b16 %v1989, %v1988
          %2038 = vmatprep.subr.bf16.mxu0 %v1591
          %2039 = vmatpush1.bf16.msra.mxu0 %v1590
          %2040 = vmatprep.subr.bf16.mxu0 %v1593
          %2041 = vmatpush1.bf16.msra.mxu0 %v1592
          %2042 = vmatprep.subr.bf16.mxu0 %v1595
          %2043 = vmatpush1.bf16.msra.mxu0 %v1594
          %2044 = vmatprep.subr.bf16.mxu0 %v1597
          %2045 = vmatpush1.bf16.msra.mxu0 %v1596
          %2046 = vmatprep.subr.bf16.mxu0 %v1599
          %2047 = vmatpush1.bf16.msra.mxu0 %v1598
          %2048 = vmatprep.subr.bf16.mxu0 %v1601
          %2049 = vmatpush1.bf16.msra.mxu0 %v1600
          %2050 = vmatprep.subr.bf16.mxu0 %v1603
          %2051 = vmatpush1.bf16.msra.mxu0 %v1602
          %2052 = vmatprep.subr.bf16.mxu0 %v1605
          %2053 = vmatpush1.bf16.msra.mxu0 %v1604
          %2054 = vmatprep.subr.bf16.mxu0 0
          %2055 = vmatpush1.bf16.msra.mxu0 0
          %2056 = vmatprep.subr.bf16.mxu0 0
          %2057 = vmatpush1.bf16.msra.mxu0 0
          %2058 = vmatprep.subr.bf16.mxu0 0
          %2059 = vmatpush1.bf16.msra.mxu0 0
          %2060 = vmatprep.subr.bf16.mxu0 0
          %2061 = vmatpush1.bf16.msra.mxu0 0
          %2062 = vmatprep.subr.bf16.mxu0 0
          %2063 = vmatpush1.bf16.msra.mxu0 0
          %2064 = vmatprep.subr.bf16.mxu0 0
          %2065 = vmatpush1.bf16.msra.mxu0 0
          %2066 = vmatprep.subr.bf16.mxu0 0
          %2067 = vmatpush1.bf16.msra.mxu0 0
          %2068 = vmatprep.subr.bf16.mxu0 0
          %2069 = vmatpush1.bf16.msra.mxu0 0
          %2070 = vmatprep.mubr.bf16.mxu0 0
          %2071 = vmatmul.mubr.bf16.gmra.mrb[0].mxu0 %v1990
          %v2072 = vpop.f32.mrb[0].mxu0
          %v2073 = vadd.f32 %v1657, %v2072
          %v2074 = vpop.f32.mrb[0].mxu0
          %v2075 = vadd.f32 %v1657, %v2074
          %v2076 = vpop.f32.mrb[0].mxu0
          %v2077 = vadd.f32 %v1662, %v2076
          %v2078 = vpop.f32.mrb[0].mxu0
          %v2079 = vadd.f32 %v1662, %v2078
          %2080 = vmatprep.mubr.bf16.mxu0 0
          %2081 = vmatmul.mubr.bf16.gmra.mrb[0].mxu0 %v1991
          %v2082 = vpop.f32.mrb[0].mxu0
          %v2083 = vadd.f32 %v1667, %v2082
          %v2084 = vpop.f32.mrb[0].mxu0
          %v2085 = vadd.f32 %v1667, %v2084
          %v2086 = vpop.f32.mrb[0].mxu0
          %v2087 = vadd.f32 %v1672, %v2086
          %v2088 = vpop.f32.mrb[0].mxu0
          %v2089 = vadd.f32 %v1672, %v2088
          %2090 = vmatprep.mubr.bf16.mxu0 0
          %2091 = vmatmul.mubr.bf16.gmra.mrb[0].mxu0 %v1992
          %v2092 = vpop.f32.mrb[0].mxu0
          %v2093 = vadd.f32 %v1677, %v2092
          %v2094 = vpop.f32.mrb[0].mxu0
          %v2095 = vadd.f32 %v1677, %v2094
          %v2096 = vpop.f32.mrb[0].mxu0
          %v2097 = vadd.f32 %v1682, %v2096
          %v2098 = vpop.f32.mrb[0].mxu0
          %v2099 = vadd.f32 %v1682, %v2098
          %2100 = vmatprep.mubr.bf16.mxu0 0
          %2101 = vmatmul.mubr.bf16.gmra.mrb[0].mxu0 %v1993
          %v2102 = vpop.f32.mrb[0].mxu0
          %v2103 = vadd.f32 %v1687, %v2102
          %v2104 = vpop.f32.mrb[0].mxu0
          %v2105 = vadd.f32 %v1687, %v2104
          %v2106 = vpop.f32.mrb[0].mxu0
          %v2107 = vadd.f32 %v1692, %v2106
          %v2108 = vpop.f32.mrb[0].mxu0
          %v2109 = vadd.f32 %v1692, %v2108
          %2110 = vmatprep.mubr.bf16.mxu0 0
          %2111 = vmatmul.mubr.bf16.gmra.mrb[0].mxu0 %v1994
          %v2112 = vpop.f32.mrb[0].mxu0
          %v2113 = vadd.f32 %v1697, %v2112
          %v2114 = vpop.f32.mrb[0].mxu0
          %v2115 = vadd.f32 %v1697, %v2114
          %v2116 = vpop.f32.mrb[0].mxu0
          %v2117 = vadd.f32 %v1702, %v2116
          %v2118 = vpop.f32.mrb[0].mxu0
          %v2119 = vadd.f32 %v1702, %v2118
          %2120 = vmatprep.mubr.bf16.mxu0 0
          %2121 = vmatmul.mubr.bf16.gmra.mrb[0].mxu0 %v1995
          %v2122 = vpop.f32.mrb[0].mxu0
          %v2123 = vadd.f32 %v1707, %v2122
          %v2124 = vpop.f32.mrb[0].mxu0
          %v2125 = vadd.f32 %v1707, %v2124
          %v2126 = vpop.f32.mrb[0].mxu0
          %v2127 = vadd.f32 %v1712, %v2126
          %v2128 = vpop.f32.mrb[0].mxu0
          %v2129 = vadd.f32 %v1712, %v2128
          %2130 = vmatprep.mubr.bf16.mxu0 0
          %2131 = vmatmul.mubr.bf16.gmra.mrb[0].mxu0 %v1996
          %v2132 = vpop.f32.mrb[0].mxu0
          %v2133 = vadd.f32 %v1717, %v2132
          %v2134 = vpop.f32.mrb[0].mxu0
          %v2135 = vadd.f32 %v1717, %v2134
          %v2136 = vpop.f32.mrb[0].mxu0
          %v2137 = vadd.f32 %v1722, %v2136
          %v2138 = vpop.f32.mrb[0].mxu0
          %v2139 = vadd.f32 %v1722, %v2138
          %2140 = vmatprep.mubr.bf16.mxu0 0
          %2141 = vmatmul.mubr.bf16.gmra.mrb[0].mxu0 %v1997
          %v2142 = vpop.f32.mrb[0].mxu0
          %v2143 = vadd.f32 %v1727, %v2142
          %v2144 = vpop.f32.mrb[0].mxu0
          %v2145 = vadd.f32 %v1727, %v2144
          %v2146 = vpop.f32.mrb[0].mxu0
          %v2147 = vadd.f32 %v1732, %v2146
          %v2148 = vpop.f32.mrb[0].mxu0
          %v2149 = vadd.f32 %v1732, %v2148
          %2150 = vmatprep.mubr.bf16.mxu0 0
          %2151 = vmatmul.mubr.bf16.gmra.mrb[0].mxu0 %v1998
          %v2152 = vpop.f32.mrb[0].mxu0
          %v2153 = vadd.f32 %v1737, %v2152
          %v2154 = vpop.f32.mrb[0].mxu0
          %v2155 = vadd.f32 %v1737, %v2154
          %v2156 = vpop.f32.mrb[0].mxu0
          %v2157 = vadd.f32 %v1742, %v2156
          %v2158 = vpop.f32.mrb[0].mxu0
          %v2159 = vadd.f32 %v1742, %v2158
          %2160 = vmatprep.mubr.bf16.mxu0 0
          %2161 = vmatmul.mubr.bf16.gmra.mrb[0].mxu0 %v1999
          %v2162 = vpop.f32.mrb[0].mxu0
          %v2163 = vadd.f32 %v1747, %v2162
          %v2164 = vpop.f32.mrb[0].mxu0
          %v2165 = vadd.f32 %v1747, %v2164
          %v2166 = vpop.f32.mrb[0].mxu0
          %v2167 = vadd.f32 %v1752, %v2166
          %v2168 = vpop.f32.mrb[0].mxu0
          %v2169 = vadd.f32 %v1752, %v2168
          %2170 = vmatprep.mubr.bf16.mxu0 0
          %2171 = vmatmul.mubr.bf16.gmra.mrb[0].mxu0 %v2000
          %v2172 = vpop.f32.mrb[0].mxu0
          %v2173 = vadd.f32 %v1757, %v2172
          %v2174 = vpop.f32.mrb[0].mxu0
          %v2175 = vadd.f32 %v1757, %v2174
          %v2176 = vpop.f32.mrb[0].mxu0
          %v2177 = vadd.f32 %v1762, %v2176
          %v2178 = vpop.f32.mrb[0].mxu0
          %v2179 = vadd.f32 %v1762, %v2178
          %2180 = vmatprep.mubr.bf16.mxu0 0
          %2181 = vmatmul.mubr.bf16.gmra.mrb[0].mxu0 %v2001
          %v2182 = vpop.f32.mrb[0].mxu0
          %v2183 = vadd.f32 %v1767, %v2182
          %v2184 = vpop.f32.mrb[0].mxu0
          %v2185 = vadd.f32 %v1767, %v2184
          %v2186 = vpop.f32.mrb[0].mxu0
          %v2187 = vadd.f32 %v1772, %v2186
          %v2188 = vpop.f32.mrb[0].mxu0
          %v2189 = vadd.f32 %v1772, %v2188
          %2190 = vmatprep.mubr.bf16.mxu0 0
          %2191 = vmatmul.mubr.bf16.gmra.mrb[0].mxu0 %v2002
          %v2192 = vpop.f32.mrb[0].mxu0
          %v2193 = vadd.f32 %v1777, %v2192
          %v2194 = vpop.f32.mrb[0].mxu0
          %v2195 = vadd.f32 %v1777, %v2194
          %v2196 = vpop.f32.mrb[0].mxu0
          %v2197 = vadd.f32 %v1782, %v2196
          %v2198 = vpop.f32.mrb[0].mxu0
          %v2199 = vadd.f32 %v1782, %v2198
          %2200 = vmatprep.mubr.bf16.mxu0 0
          %2201 = vmatmul.mubr.bf16.gmra.mrb[0].mxu0 %v2003
          %v2202 = vpop.f32.mrb[0].mxu0
          %v2203 = vadd.f32 %v1787, %v2202
          %v2204 = vpop.f32.mrb[0].mxu0
          %v2205 = vadd.f32 %v1787, %v2204
          %v2206 = vpop.f32.mrb[0].mxu0
          %v2207 = vadd.f32 %v1792, %v2206
          %v2208 = vpop.f32.mrb[0].mxu0
          %v2209 = vadd.f32 %v1792, %v2208
          %2210 = vmatprep.mubr.bf16.mxu0 0
          %2211 = vmatmul.mubr.bf16.gmra.mrb[0].mxu0 %v2004
          %v2212 = vpop.f32.mrb[0].mxu0
          %v2213 = vadd.f32 %v1797, %v2212
          %v2214 = vpop.f32.mrb[0].mxu0
          %v2215 = vadd.f32 %v1797, %v2214
          %v2216 = vpop.f32.mrb[0].mxu0
          %v2217 = vadd.f32 %v1802, %v2216
          %v2218 = vpop.f32.mrb[0].mxu0
          %v2219 = vadd.f32 %v1802, %v2218
          %2220 = vmatprep.mubr.bf16.mxu0 0
          %2221 = vmatmul.mubr.bf16.gmra.mrb[0].mxu0 %v2005
          %v2222 = vpop.f32.mrb[0].mxu0
          %v2223 = vadd.f32 %v1807, %v2222
          %v2224 = vpop.f32.mrb[0].mxu0
          %v2225 = vadd.f32 %v1807, %v2224
          %v2226 = vpop.f32.mrb[0].mxu0
          %v2227 = vadd.f32 %v1812, %v2226
          %v2228 = vpop.f32.mrb[0].mxu0
          %v2229 = vadd.f32 %v1812, %v2228
          %2230 = vmatprep.mubr.bf16.mxu0 0
          %2231 = vmatmul.mubr.bf16.gmra.mrb[0].mxu0 %v2006
          %v2232 = vpop.f32.mrb[0].mxu0
          %v2233 = vadd.f32 %v1817, %v2232
          %v2234 = vpop.f32.mrb[0].mxu0
          %v2235 = vadd.f32 %v1817, %v2234
          %v2236 = vpop.f32.mrb[0].mxu0
          %v2237 = vadd.f32 %v1822, %v2236
          %v2238 = vpop.f32.mrb[0].mxu0
          %v2239 = vadd.f32 %v1822, %v2238
          %2240 = vmatprep.mubr.bf16.mxu0 0
          %2241 = vmatmul.mubr.bf16.gmra.mrb[0].mxu0 %v2007
          %v2242 = vpop.f32.mrb[0].mxu0
          %v2243 = vadd.f32 %v1827, %v2242
          %v2244 = vpop.f32.mrb[0].mxu0
          %v2245 = vadd.f32 %v1827, %v2244
          %v2246 = vpop.f32.mrb[0].mxu0
          %v2247 = vadd.f32 %v1832, %v2246
          %v2248 = vpop.f32.mrb[0].mxu0
          %v2249 = vadd.f32 %v1832, %v2248
          %2250 = vmatprep.mubr.bf16.mxu0 0
          %2251 = vmatmul.mubr.bf16.gmra.mrb[0].mxu0 %v2008
          %v2252 = vpop.f32.mrb[0].mxu0
          %v2253 = vadd.f32 %v1837, %v2252
          %v2254 = vpop.f32.mrb[0].mxu0
          %v2255 = vadd.f32 %v1837, %v2254
          %v2256 = vpop.f32.mrb[0].mxu0
          %v2257 = vadd.f32 %v1842, %v2256
          %v2258 = vpop.f32.mrb[0].mxu0
          %v2259 = vadd.f32 %v1842, %v2258
          %2260 = vmatprep.mubr.bf16.mxu0 0
          %2261 = vmatmul.mubr.bf16.gmra.mrb[0].mxu0 %v2009
          %v2262 = vpop.f32.mrb[0].mxu0
          %v2263 = vadd.f32 %v1847, %v2262
          %v2264 = vpop.f32.mrb[0].mxu0
          %v2265 = vadd.f32 %v1847, %v2264
          %v2266 = vpop.f32.mrb[0].mxu0
          %v2267 = vadd.f32 %v1852, %v2266
          %v2268 = vpop.f32.mrb[0].mxu0
          %v2269 = vadd.f32 %v1852, %v2268
          %2270 = vmatprep.mubr.bf16.mxu0 0
          %2271 = vmatmul.mubr.bf16.gmra.mrb[0].mxu0 %v2010
          %v2272 = vpop.f32.mrb[0].mxu0
          %v2273 = vadd.f32 %v1857, %v2272
          %v2274 = vpop.f32.mrb[0].mxu0
          %v2275 = vadd.f32 %v1857, %v2274
          %v2276 = vpop.f32.mrb[0].mxu0
          %v2277 = vadd.f32 %v1862, %v2276
          %v2278 = vpop.f32.mrb[0].mxu0
          %v2279 = vadd.f32 %v1862, %v2278
          %2280 = vmatprep.mubr.bf16.mxu0 0
          %2281 = vmatmul.mubr.bf16.gmra.mrb[0].mxu0 %v2011
          %v2282 = vpop.f32.mrb[0].mxu0
          %v2283 = vadd.f32 %v1867, %v2282
          %v2284 = vpop.f32.mrb[0].mxu0
          %v2285 = vadd.f32 %v1867, %v2284
          %v2286 = vpop.f32.mrb[0].mxu0
          %v2287 = vadd.f32 %v1872, %v2286
          %v2288 = vpop.f32.mrb[0].mxu0
          %v2289 = vadd.f32 %v1872, %v2288
          %2290 = vmatprep.mubr.bf16.mxu0 0
          %2291 = vmatmul.mubr.bf16.gmra.mrb[0].mxu0 %v2012
          %v2292 = vpop.f32.mrb[0].mxu0
          %v2293 = vadd.f32 %v1877, %v2292
          %v2294 = vpop.f32.mrb[0].mxu0
          %v2295 = vadd.f32 %v1877, %v2294
          %v2296 = vpop.f32.mrb[0].mxu0
          %v2297 = vadd.f32 %v1882, %v2296
          %v2298 = vpop.f32.mrb[0].mxu0
          %v2299 = vadd.f32 %v1882, %v2298
          %2300 = vmatprep.mubr.bf16.mxu0 0
          %2301 = vmatmul.mubr.bf16.gmra.mrb[0].mxu0 %v2013
          %v2302 = vpop.f32.mrb[0].mxu0
          %v2303 = vadd.f32 %v1887, %v2302
          %v2304 = vpop.f32.mrb[0].mxu0
          %v2305 = vadd.f32 %v1887, %v2304
          %v2306 = vpop.f32.mrb[0].mxu0
          %v2307 = vadd.f32 %v1892, %v2306
          %v2308 = vpop.f32.mrb[0].mxu0
          %v2309 = vadd.f32 %v1892, %v2308
          %2310 = vdwg.mxu0
          %v2311 = vpack.c.bf16 %v2077, %v2073
          %v2312 = vpack.c.bf16 %v2079, %v2075
          %v2313 = vpack.c.bf16 %v2087, %v2083
          %v2314 = vpack.c.bf16 %v2089, %v2085
          %v2315 = vpack.c.bf16 %v2097, %v2093
          %v2316 = vpack.c.bf16 %v2099, %v2095
          %v2317 = vpack.c.bf16 %v2107, %v2103
          %v2318 = vpack.c.bf16 %v2109, %v2105
          %v2319 = vpack.c.bf16 %v2117, %v2113
          %v2320 = vpack.c.bf16 %v2119, %v2115
          %v2321 = vpack.c.bf16 %v2127, %v2123
          %v2322 = vpack.c.bf16 %v2129, %v2125
          %v2323 = vpack.c.bf16 %v2137, %v2133
          %v2324 = vpack.c.bf16 %v2139, %v2135
          %v2325 = vpack.c.bf16 %v2147, %v2143
          %v2326 = vpack.c.bf16 %v2149, %v2145
          %v2327 = vpack.c.bf16 %v2157, %v2153
          %v2328 = vpack.c.bf16 %v2159, %v2155
          %v2329 = vpack.c.bf16 %v2167, %v2163
          %v2330 = vpack.c.bf16 %v2169, %v2165
          %v2331 = vpack.c.bf16 %v2177, %v2173
          %v2332 = vpack.c.bf16 %v2179, %v2175
          %v2333 = vpack.c.bf16 %v2187, %v2183
          %v2334 = vpack.c.bf16 %v2189, %v2185
          %v2335 = vpack.c.bf16 %v2197, %v2193
          %v2336 = vpack.c.bf16 %v2199, %v2195
          %v2337 = vpack.c.bf16 %v2207, %v2203
          %v2338 = vpack.c.bf16 %v2209, %v2205
          %v2339 = vpack.c.bf16 %v2217, %v2213
          %v2340 = vpack.c.bf16 %v2219, %v2215
          %v2341 = vpack.c.bf16 %v2227, %v2223
          %v2342 = vpack.c.bf16 %v2229, %v2225
          %v2343 = vpack.c.bf16 %v2237, %v2233
          %v2344 = vpack.c.bf16 %v2239, %v2235
          %v2345 = vpack.c.bf16 %v2247, %v2243
          %v2346 = vpack.c.bf16 %v2249, %v2245
          %v2347 = vpack.c.bf16 %v2257, %v2253
          %v2348 = vpack.c.bf16 %v2259, %v2255
          %v2349 = vpack.c.bf16 %v2267, %v2263
          %v2350 = vpack.c.bf16 %v2269, %v2265
          %v2351 = vpack.c.bf16 %v2277, %v2273
          %v2352 = vpack.c.bf16 %v2279, %v2275
          %v2353 = vpack.c.bf16 %v2287, %v2283
          %v2354 = vpack.c.bf16 %v2289, %v2285
          %v2355 = vpack.c.bf16 %v2297, %v2293
          %v2356 = vpack.c.bf16 %v2299, %v2295
          %v2357 = vpack.c.bf16 %v2307, %v2303
          %v2358 = vpack.c.bf16 %v2309, %v2305
          %2359 = vst [vmem:[#allocation2] sm:$0xff] %v2311
          %2360 = vst [vmem:[#allocation2 + $0x8] sm:$0xff] %v2312
          %2361 = vst [vmem:[#allocation2 + $0x10] sm:$0xff] %v2313
          %2362 = vst [vmem:[#allocation2 + $0x18] sm:$0xff] %v2314
          %2363 = vst [vmem:[#allocation2 + $0x20] sm:$0xff] %v2315
          %2364 = vst [vmem:[#allocation2 + $0x28] sm:$0xff] %v2316
          %2365 = vst [vmem:[#allocation2 + $0x30] sm:$0xff] %v2317
          %2366 = vst [vmem:[#allocation2 + $0x38] sm:$0xff] %v2318
          %2367 = vst [vmem:[#allocation2 + $0x40] sm:$0xff] %v2319
          %2368 = vst [vmem:[#allocation2 + $0x48] sm:$0xff] %v2320
          %2369 = vst [vmem:[#allocation2 + $0x50] sm:$0xff] %v2321
          %2370 = vst [vmem:[#allocation2 + $0x58] sm:$0xff] %v2322
          %2371 = vst [vmem:[#allocation2 + $0x60] sm:$0xff] %v2323
          %2372 = vst [vmem:[#allocation2 + $0x68] sm:$0xff] %v2324
          %2373 = vst [vmem:[#allocation2 + $0x70] sm:$0xff] %v2325
          %2374 = vst [vmem:[#allocation2 + $0x78] sm:$0xff] %v2326
          %2375 = vst [vmem:[#allocation2 + $0x80] sm:$0xff] %v2327
          %2376 = vst [vmem:[#allocation2 + $0x88] sm:$0xff] %v2328
          %2377 = vst [vmem:[#allocation2 + $0x90] sm:$0xff] %v2329
          %2378 = vst [vmem:[#allocation2 + $0x98] sm:$0xff] %v2330
          %2379 = vst [vmem:[#allocation2 + $0xa0] sm:$0xff] %v2331
          %2380 = vst [vmem:[#allocation2 + $0xa8] sm:$0xff] %v2332
          %2381 = vst [vmem:[#allocation2 + $0xb0] sm:$0xff] %v2333
          %2382 = vst [vmem:[#allocation2 + $0xb8] sm:$0xff] %v2334
          %2383 = vst [vmem:[#allocation2 + $0xc0] sm:$0xff] %v2335
          %2384 = vst [vmem:[#allocation2 + $0xc8] sm:$0xff] %v2336
          %2385 = vst [vmem:[#allocation2 + $0xd0] sm:$0xff] %v2337
          %2386 = vst [vmem:[#allocation2 + $0xd8] sm:$0xff] %v2338
          %2387 = vst [vmem:[#allocation2 + $0xe0] sm:$0xff] %v2339
          %2388 = vst [vmem:[#allocation2 + $0xe8] sm:$0xff] %v2340
          %2389 = vst [vmem:[#allocation2 + $0xf0] sm:$0xff] %v2341
          %2390 = vst [vmem:[#allocation2 + $0xf8] sm:$0xff] %v2342
          %2391 = vst [vmem:[#allocation2 + $0x100] sm:$0xff] %v2343
          %2392 = vst [vmem:[#allocation2 + $0x108] sm:$0xff] %v2344
          %2393 = vst [vmem:[#allocation2 + $0x110] sm:$0xff] %v2345
          %2394 = vst [vmem:[#allocation2 + $0x118] sm:$0xff] %v2346
          %2395 = vst [vmem:[#allocation2 + $0x120] sm:$0xff] %v2347
          %2396 = vst [vmem:[#allocation2 + $0x128] sm:$0xff] %v2348
          %2397 = vst [vmem:[#allocation2 + $0x130] sm:$0xff] %v2349
          %2398 = vst [vmem:[#allocation2 + $0x138] sm:$0xff] %v2350
          %2399 = vst [vmem:[#allocation2 + $0x140] sm:$0xff] %v2351
          %2400 = vst [vmem:[#allocation2 + $0x148] sm:$0xff] %v2352
          %2401 = vst [vmem:[#allocation2 + $0x150] sm:$0xff] %v2353
          %2402 = vst [vmem:[#allocation2 + $0x158] sm:$0xff] %v2354
          %2403 = vst [vmem:[#allocation2 + $0x160] sm:$0xff] %v2355
          %2404 = vst [vmem:[#allocation2 + $0x168] sm:$0xff] %v2356
          %2405 = vst [vmem:[#allocation2 + $0x170] sm:$0xff] %v2357
          %2406 = vst [vmem:[#allocation2 + $0x178] sm:$0xff] %v2358
          %2407 = vst [vmem:[%s337] sm:$0xff] 0.0
          %2408 = vst [vmem:[%s337 + $0x8] sm:$0xff] 0.0
          %2409 = vst [vmem:[%s337 + $0x10] sm:$0xff] 0.0
          %2410 = vst [vmem:[%s337 + $0x18] sm:$0xff] 0.0
          %2411 = vst [vmem:[%s337 + $0x20] sm:$0xff] 0.0
          %2412 = vst [vmem:[%s337 + $0x28] sm:$0xff] 0.0
          %2413 = vst [vmem:[%s337 + $0x30] sm:$0xff] 0.0
          %2414 = vst [vmem:[%s337 + $0x38] sm:$0xff] 0.0
          %2415 = vst [vmem:[%s337 + $0x40] sm:$0xff] 0.0
          %2416 = vst [vmem:[%s337 + $0x48] sm:$0xff] 0.0
          %2417 = vst [vmem:[%s337 + $0x50] sm:$0xff] 0.0
          %2418 = vst [vmem:[%s337 + $0x58] sm:$0xff] 0.0
          %2419 = vst [vmem:[%s337 + $0x60] sm:$0xff] 0.0
          %2420 = vst [vmem:[%s337 + $0x68] sm:$0xff] 0.0
          %2421 = vst [vmem:[%s337 + $0x70] sm:$0xff] 0.0
          %2422 = vst [vmem:[%s337 + $0x78] sm:$0xff] 0.0
          %2423 = vst [vmem:[%s337 + $0x80] sm:$0xff] 0.0
          %2424 = vst [vmem:[%s337 + $0x88] sm:$0xff] 0.0
          %2425 = vst [vmem:[%s337 + $0x90] sm:$0xff] 0.0
          %2426 = vst [vmem:[%s337 + $0x98] sm:$0xff] 0.0
          %2427 = vst [vmem:[%s337 + $0xa0] sm:$0xff] 0.0
          %2428 = vst [vmem:[%s337 + $0xa8] sm:$0xff] 0.0
          %2429 = vst [vmem:[%s337 + $0xb0] sm:$0xff] 0.0
          %2430 = vst [vmem:[%s337 + $0xb8] sm:$0xff] 0.0
          %2431 = vst [vmem:[%s337 + $0xc0] sm:$0xff] 0.0
          %2432 = vst [vmem:[%s337 + $0xc8] sm:$0xff] 0.0
          %2433 = vst [vmem:[%s337 + $0xd0] sm:$0xff] 0.0
          %2434 = vst [vmem:[%s337 + $0xd8] sm:$0xff] 0.0
          %2435 = vst [vmem:[%s337 + $0xe0] sm:$0xff] 0.0
          %2436 = vst [vmem:[%s337 + $0xe8] sm:$0xff] 0.0
          %2437 = vst [vmem:[%s337 + $0xf0] sm:$0xff] 0.0
          %2438 = vst [vmem:[%s337 + $0xf8] sm:$0xff] 0.0
        $region60: #{tpu_custom_call.1} parent=55 // pred_fallthru
          _
        %s2439 = smul.u32 %s28, 128
        %s2440 = sshra.s32 %s2439, 7
        %s2441 = sand.u32 %s2439, 127
        %s2442 = smul.addr %s2440, 8
        %s2443 = scalar_lea.vmem [#allocation2], %s2442
        %v2444 = vld [vmem:[%s2443] sm:$0xff]
        %v2445 = vld [vmem:[%s2443 + $0x10] sm:$0xff]
        %v2446 = vld [vmem:[%s2443 + $0x20] sm:$0xff]
        %v2447 = vld [vmem:[%s2443 + $0x30] sm:$0xff]
        %v2448 = vld [vmem:[%s2443 + $0x40] sm:$0xff]
        %v2449 = vld [vmem:[%s2443 + $0x50] sm:$0xff]
        %v2450 = vld [vmem:[%s2443 + $0x60] sm:$0xff]
        %v2451 = vld [vmem:[%s2443 + $0x70] sm:$0xff]
        %v2452 = vld [vmem:[#allocation2 + $0x80] sm:$0xff]
        %v2453 = vld [vmem:[#allocation2 + $0x88] sm:$0xff]
        %v2454 = vld [vmem:[#allocation2 + $0x90] sm:$0xff]
        %v2455 = vld [vmem:[#allocation2 + $0x98] sm:$0xff]
        %v2456 = vld [vmem:[#allocation2 + $0xa0] sm:$0xff]
        %v2457 = vld [vmem:[#allocation2 + $0xa8] sm:$0xff]
        %v2458 = vld [vmem:[#allocation2 + $0xb0] sm:$0xff]
        %v2459 = vld [vmem:[#allocation2 + $0xb8] sm:$0xff]
        %v2460 = vld [vmem:[#allocation2 + $0xc0] sm:$0xff]
        %v2461 = vld [vmem:[#allocation2 + $0xc8] sm:$0xff]
        %v2462 = vld [vmem:[#allocation2 + $0xd0] sm:$0xff]
        %v2463 = vld [vmem:[#allocation2 + $0xd8] sm:$0xff]
        %v2464 = vld [vmem:[#allocation2 + $0xe0] sm:$0xff]
        %v2465 = vld [vmem:[#allocation2 + $0xe8] sm:$0xff]
        %v2466 = vld [vmem:[#allocation2 + $0xf0] sm:$0xff]
        %v2467 = vld [vmem:[#allocation2 + $0xf8] sm:$0xff]
        %v2468 = vld [vmem:[%s2443 + $0x100] sm:$0xff]
        %v2469 = vld [vmem:[%s2443 + $0x110] sm:$0xff]
        %v2470 = vld [vmem:[%s2443 + $0x120] sm:$0xff]
        %v2471 = vld [vmem:[%s2443 + $0x130] sm:$0xff]
        %v2472 = vld [vmem:[%s2443 + $0x140] sm:$0xff]
        %v2473 = vld [vmem:[%s2443 + $0x150] sm:$0xff]
        %v2474 = vld [vmem:[%s2443 + $0x160] sm:$0xff]
        %v2475 = vld [vmem:[%s2443 + $0x170] sm:$0xff]
        %2476 = vxpose.xlu0.c.b16.start [1/8] %v2444, 128
        %2477 = vxpose.xlu0.c.b16.cont [2/8] %v2445, 128
        %2478 = vxpose.xlu0.c.b16.cont [3/8] %v2446, 128
        %2479 = vxpose.xlu0.c.b16.cont [4/8] %v2447, 128
        %2480 = vxpose.xlu0.c.b16.cont [5/8] %v2448, 128
        %2481 = vxpose.xlu0.c.b16.cont [6/8] %v2449, 128
        %2482 = vxpose.xlu0.c.b16.cont [7/8] %v2450, 128
        %2483 = vxpose.xlu0.c.b16.end [8/8] %v2451, 128
        %v2484 = vpop.trf.xlu0
        %v2485 = vpop.trf.xlu0
        %v2486 = vpop.trf.xlu0
        %v2487 = vpop.trf.xlu0
        %v2488 = vpop.trf.xlu0
        %v2489 = vpop.trf.xlu0
        %v2490 = vpop.trf.xlu0
        %v2491 = vpop.trf.xlu0
        %2492 = vmatprep.subr.bf16.mxu0 %v2453
        %2493 = vmatpush1.bf16.msra.mxu0 %v2452
        %2494 = vmatprep.subr.bf16.mxu0 %v2455
        %2495 = vmatpush1.bf16.msra.mxu0 %v2454
        %2496 = vmatprep.subr.bf16.mxu0 %v2457
        %2497 = vmatpush1.bf16.msra.mxu0 %v2456
        %2498 = vmatprep.subr.bf16.mxu0 %v2459
        %2499 = vmatpush1.bf16.msra.mxu0 %v2458
        %2500 = vmatprep.subr.bf16.mxu0 %v2461
        %2501 = vmatpush1.bf16.msra.mxu0 %v2460
        %2502 = vmatprep.subr.bf16.mxu0 %v2463
        %2503 = vmatpush1.bf16.msra.mxu0 %v2462
        %2504 = vmatprep.subr.bf16.mxu0 %v2465
        %2505 = vmatpush1.bf16.msra.mxu0 %v2464
        %2506 = vmatprep.subr.bf16.mxu0 %v2467
        %2507 = vmatpush1.bf16.msra.mxu0 %v2466
        %2508 = vmatprep.subr.bf16.mxu0 0
        %2509 = vmatpush1.bf16.msra.mxu0 0
        %2510 = vmatprep.subr.bf16.mxu0 0
        %2511 = vmatpush1.bf16.msra.mxu0 0
        %2512 = vmatprep.subr.bf16.mxu0 0
        %2513 = vmatpush1.bf16.msra.mxu0 0
        %2514 = vmatprep.subr.bf16.mxu0 0
        %2515 = vmatpush1.bf16.msra.mxu0 0
        %2516 = vmatprep.subr.bf16.mxu0 0
        %2517 = vmatpush1.bf16.msra.mxu0 0
        %2518 = vmatprep.subr.bf16.mxu0 0
        %2519 = vmatpush1.bf16.msra.mxu0 0
        %2520 = vmatprep.subr.bf16.mxu0 0
        %2521 = vmatpush1.bf16.msra.mxu0 0
        %2522 = vmatprep.subr.bf16.mxu0 0
        %2523 = vmatpush1.bf16.msra.mxu0 0
        %2524 = vmatprep.mubr.bf16.mxu0 0
        %2525 = vmatmul.mubr.bf16.gmra.mrb[0].mxu0 %v2484
        %v2526 = vpop.f32.mrb[0].mxu0
        %v2527 = vadd.f32 0.0, %v2526
        %v2528 = vpop.f32.mrb[0].mxu0
        %v2529 = vadd.f32 0.0, %v2528
        %v2530 = vpop.f32.mrb[0].mxu0
        %v2531 = vadd.f32 0.0, %v2530
        %v2532 = vpop.f32.mrb[0].mxu0
        %v2533 = vadd.f32 0.0, %v2532
        %2534 = vmatprep.mubr.bf16.mxu0 0
        %2535 = vmatmul.mubr.bf16.gmra.mrb[0].mxu0 %v2485
        %v2536 = vpop.f32.mrb[0].mxu0
        %v2537 = vadd.f32 0.0, %v2536
        %v2538 = vpop.f32.mrb[0].mxu0
        %v2539 = vadd.f32 0.0, %v2538
        %v2540 = vpop.f32.mrb[0].mxu0
        %v2541 = vadd.f32 0.0, %v2540
        %v2542 = vpop.f32.mrb[0].mxu0
        %v2543 = vadd.f32 0.0, %v2542
        %2544 = vmatprep.mubr.bf16.mxu0 0
        %2545 = vmatmul.mubr.bf16.gmra.mrb[0].mxu0 %v2486
        %v2546 = vpop.f32.mrb[0].mxu0
        %v2547 = vadd.f32 0.0, %v2546
        %v2548 = vpop.f32.mrb[0].mxu0
        %v2549 = vadd.f32 0.0, %v2548
        %v2550 = vpop.f32.mrb[0].mxu0
        %v2551 = vadd.f32 0.0, %v2550
        %v2552 = vpop.f32.mrb[0].mxu0
        %v2553 = vadd.f32 0.0, %v2552
        %2554 = vmatprep.mubr.bf16.mxu0 0
        %2555 = vmatmul.mubr.bf16.gmra.mrb[0].mxu0 %v2487
        %v2556 = vpop.f32.mrb[0].mxu0
        %v2557 = vadd.f32 0.0, %v2556
        %v2558 = vpop.f32.mrb[0].mxu0
        %v2559 = vadd.f32 0.0, %v2558
        %v2560 = vpop.f32.mrb[0].mxu0
        %v2561 = vadd.f32 0.0, %v2560
        %v2562 = vpop.f32.mrb[0].mxu0
        %v2563 = vadd.f32 0.0, %v2562
        %2564 = vmatprep.mubr.bf16.mxu0 0
        %2565 = vmatmul.mubr.bf16.gmra.mrb[0].mxu0 %v2488
        %v2566 = vpop.f32.mrb[0].mxu0
        %v2567 = vadd.f32 0.0, %v2566
        %v2568 = vpop.f32.mrb[0].mxu0
        %v2569 = vadd.f32 0.0, %v2568
        %v2570 = vpop.f32.mrb[0].mxu0
        %v2571 = vadd.f32 0.0, %v2570
        %v2572 = vpop.f32.mrb[0].mxu0
        %v2573 = vadd.f32 0.0, %v2572
        %2574 = vmatprep.mubr.bf16.mxu0 0
        %2575 = vmatmul.mubr.bf16.gmra.mrb[0].mxu0 %v2489
        %v2576 = vpop.f32.mrb[0].mxu0
        %v2577 = vadd.f32 0.0, %v2576
        %v2578 = vpop.f32.mrb[0].mxu0
        %v2579 = vadd.f32 0.0, %v2578
        %v2580 = vpop.f32.mrb[0].mxu0
        %v2581 = vadd.f32 0.0, %v2580
        %v2582 = vpop.f32.mrb[0].mxu0
        %v2583 = vadd.f32 0.0, %v2582
        %2584 = vmatprep.mubr.bf16.mxu0 0
        %2585 = vmatmul.mubr.bf16.gmra.mrb[0].mxu0 %v2490
        %v2586 = vpop.f32.mrb[0].mxu0
        %v2587 = vadd.f32 0.0, %v2586
        %v2588 = vpop.f32.mrb[0].mxu0
        %v2589 = vadd.f32 0.0, %v2588
        %v2590 = vpop.f32.mrb[0].mxu0
        %v2591 = vadd.f32 0.0, %v2590
        %v2592 = vpop.f32.mrb[0].mxu0
        %v2593 = vadd.f32 0.0, %v2592
        %2594 = vmatprep.mubr.bf16.mxu0 0
        %2595 = vmatmul.mubr.bf16.gmra.mrb[0].mxu0 %v2491
        %v2596 = vpop.f32.mrb[0].mxu0
        %v2597 = vadd.f32 0.0, %v2596
        %v2598 = vpop.f32.mrb[0].mxu0
        %v2599 = vadd.f32 0.0, %v2598
        %v2600 = vpop.f32.mrb[0].mxu0
        %v2601 = vadd.f32 0.0, %v2600
        %v2602 = vpop.f32.mrb[0].mxu0
        %v2603 = vadd.f32 0.0, %v2602
        %2604 = vdwg.mxu0
        %v2605 = vmax.f32 %v2527, %v2529
        %2606 = vmax.xlane.f32.xlu0 %v2605
        %v2607 = vpop.xlane.xlu0 %2606
        %v2608 = vmax.f32 %v2531, %v2533
        %2609 = vmax.xlane.f32.xlu0 %v2608
        %v2610 = vpop.xlane.xlu0 %2609
        %v2611 = vmax.f32 %v2537, %v2539
        %2612 = vmax.xlane.f32.xlu0 %v2611
        %v2613 = vpop.xlane.xlu0 %2612
        %v2614 = vmax.f32 %v2541, %v2543
        %2615 = vmax.xlane.f32.xlu0 %v2614
        %v2616 = vpop.xlane.xlu0 %2615
        %v2617 = vmax.f32 %v2547, %v2549
        %2618 = vmax.xlane.f32.xlu0 %v2617
        %v2619 = vpop.xlane.xlu0 %2618
        %v2620 = vmax.f32 %v2551, %v2553
        %2621 = vmax.xlane.f32.xlu0 %v2620
        %v2622 = vpop.xlane.xlu0 %2621
        %v2623 = vmax.f32 %v2557, %v2559
        %2624 = vmax.xlane.f32.xlu0 %v2623
        %v2625 = vpop.xlane.xlu0 %2624
        %v2626 = vmax.f32 %v2561, %v2563
        %2627 = vmax.xlane.f32.xlu0 %v2626
        %v2628 = vpop.xlane.xlu0 %2627
        %v2629 = vmax.f32 %v2567, %v2569
        %2630 = vmax.xlane.f32.xlu0 %v2629
        %v2631 = vpop.xlane.xlu0 %2630
        %v2632 = vmax.f32 %v2571, %v2573
        %2633 = vmax.xlane.f32.xlu0 %v2632
        %v2634 = vpop.xlane.xlu0 %2633
        %v2635 = vmax.f32 %v2577, %v2579
        %2636 = vmax.xlane.f32.xlu0 %v2635
        %v2637 = vpop.xlane.xlu0 %2636
        %v2638 = vmax.f32 %v2581, %v2583
        %2639 = vmax.xlane.f32.xlu0 %v2638
        %v2640 = vpop.xlane.xlu0 %2639
        %v2641 = vmax.f32 %v2587, %v2589
        %2642 = vmax.xlane.f32.xlu0 %v2641
        %v2643 = vpop.xlane.xlu0 %2642
        %v2644 = vmax.f32 %v2591, %v2593
        %2645 = vmax.xlane.f32.xlu0 %v2644
        %v2646 = vpop.xlane.xlu0 %2645
        %v2647 = vmax.f32 %v2597, %v2599
        %2648 = vmax.xlane.f32.xlu0 %v2647
        %v2649 = vpop.xlane.xlu0 %2648
        %v2650 = vmax.f32 %v2601, %v2603
        %2651 = vmax.xlane.f32.xlu0 %v2650
        %v2652 = vpop.xlane.xlu0 %2651
        %v2653 = vsub.f32 %v2527, %v2607
        %v2654 = vsub.f32 %v2529, %v2607
        %v2655 = vsub.f32 %v2531, %v2610
        %v2656 = vsub.f32 %v2533, %v2610
        %v2657 = vsub.f32 %v2537, %v2613
        %v2658 = vsub.f32 %v2539, %v2613
        %v2659 = vsub.f32 %v2541, %v2616
        %v2660 = vsub.f32 %v2543, %v2616
        %v2661 = vsub.f32 %v2547, %v2619
        %v2662 = vsub.f32 %v2549, %v2619
        %v2663 = vsub.f32 %v2551, %v2622
        %v2664 = vsub.f32 %v2553, %v2622
        %v2665 = vsub.f32 %v2557, %v2625
        %v2666 = vsub.f32 %v2559, %v2625
        %v2667 = vsub.f32 %v2561, %v2628
        %v2668 = vsub.f32 %v2563, %v2628
        %v2669 = vsub.f32 %v2567, %v2631
        %v2670 = vsub.f32 %v2569, %v2631
        %v2671 = vsub.f32 %v2571, %v2634
        %v2672 = vsub.f32 %v2573, %v2634
        %v2673 = vsub.f32 %v2577, %v2637
        %v2674 = vsub.f32 %v2579, %v2637
        %v2675 = vsub.f32 %v2581, %v2640
        %v2676 = vsub.f32 %v2583, %v2640
        %v2677 = vsub.f32 %v2587, %v2643
        %v2678 = vsub.f32 %v2589, %v2643
        %v2679 = vsub.f32 %v2591, %v2646
        %v2680 = vsub.f32 %v2593, %v2646
        %v2681 = vsub.f32 %v2597, %v2649
        %v2682 = vsub.f32 %v2599, %v2649
        %v2683 = vsub.f32 %v2601, %v2652
        %v2684 = vsub.f32 %v2603, %v2652
        %v2685 = vmul.f32 %v2653, 1.442695
        %v2686 = vpow.pop %v2685
        %v2687 = vmul.f32 %v2654, 1.442695
        %v2688 = vpow.pop %v2687
        %v2689 = vmul.f32 %v2655, 1.442695
        %v2690 = vpow.pop %v2689
        %v2691 = vmul.f32 %v2656, 1.442695
        %v2692 = vpow.pop %v2691
        %v2693 = vmul.f32 %v2657, 1.442695
        %v2694 = vpow.pop %v2693
        %v2695 = vmul.f32 %v2658, 1.442695
        %v2696 = vpow.pop %v2695
        %v2697 = vmul.f32 %v2659, 1.442695
        %v2698 = vpow.pop %v2697
        %v2699 = vmul.f32 %v2660, 1.442695
        %v2700 = vpow.pop %v2699
        %v2701 = vmul.f32 %v2661, 1.442695
        %v2702 = vpow.pop %v2701
        %v2703 = vmul.f32 %v2662, 1.442695
        %v2704 = vpow.pop %v2703
        %v2705 = vmul.f32 %v2663, 1.442695
        %v2706 = vpow.pop %v2705
        %v2707 = vmul.f32 %v2664, 1.442695
        %v2708 = vpow.pop %v2707
        %v2709 = vmul.f32 %v2665, 1.442695
        %v2710 = vpow.pop %v2709
        %v2711 = vmul.f32 %v2666, 1.442695
        %v2712 = vpow.pop %v2711
        %v2713 = vmul.f32 %v2667, 1.442695
        %v2714 = vpow.pop %v2713
        %v2715 = vmul.f32 %v2668, 1.442695
        %v2716 = vpow.pop %v2715
        %v2717 = vmul.f32 %v2669, 1.442695
        %v2718 = vpow.pop %v2717
        %v2719 = vmul.f32 %v2670, 1.442695
        %v2720 = vpow.pop %v2719
        %v2721 = vmul.f32 %v2671, 1.442695
        %v2722 = vpow.pop %v2721
        %v2723 = vmul.f32 %v2672, 1.442695
        %v2724 = vpow.pop %v2723
        %v2725 = vmul.f32 %v2673, 1.442695
        %v2726 = vpow.pop %v2725
        %v2727 = vmul.f32 %v2674, 1.442695
        %v2728 = vpow.pop %v2727
        %v2729 = vmul.f32 %v2675, 1.442695
        %v2730 = vpow.pop %v2729
        %v2731 = vmul.f32 %v2676, 1.442695
        %v2732 = vpow.pop %v2731
        %v2733 = vmul.f32 %v2677, 1.442695
        %v2734 = vpow.pop %v2733
        %v2735 = vmul.f32 %v2678, 1.442695
        %v2736 = vpow.pop %v2735
        %v2737 = vmul.f32 %v2679, 1.442695
        %v2738 = vpow.pop %v2737
        %v2739 = vmul.f32 %v2680, 1.442695
        %v2740 = vpow.pop %v2739
        %v2741 = vmul.f32 %v2681, 1.442695
        %v2742 = vpow.pop %v2741
        %v2743 = vmul.f32 %v2682, 1.442695
        %v2744 = vpow.pop %v2743
        %v2745 = vmul.f32 %v2683, 1.442695
        %v2746 = vpow.pop %v2745
        %v2747 = vmul.f32 %v2684, 1.442695
        %v2748 = vpow.pop %v2747
        %v2749 = vadd.f32 %v2686, %v2688
        %2750 = vadd.xlane.f32.xlu0 %v2749
        %v2751 = vpop.xlane.xlu0 %2750
        %v2752 = vadd.f32 %v2690, %v2692
        %2753 = vadd.xlane.f32.xlu0 %v2752
        %v2754 = vpop.xlane.xlu0 %2753
        %v2755 = vadd.f32 %v2694, %v2696
        %2756 = vadd.xlane.f32.xlu0 %v2755
        %v2757 = vpop.xlane.xlu0 %2756
        %v2758 = vadd.f32 %v2698, %v2700
        %2759 = vadd.xlane.f32.xlu0 %v2758
        %v2760 = vpop.xlane.xlu0 %2759
        %v2761 = vadd.f32 %v2702, %v2704
        %2762 = vadd.xlane.f32.xlu0 %v2761
        %v2763 = vpop.xlane.xlu0 %2762
        %v2764 = vadd.f32 %v2706, %v2708
        %2765 = vadd.xlane.f32.xlu0 %v2764
        %v2766 = vpop.xlane.xlu0 %2765
        %v2767 = vadd.f32 %v2710, %v2712
        %2768 = vadd.xlane.f32.xlu0 %v2767
        %v2769 = vpop.xlane.xlu0 %2768
        %v2770 = vadd.f32 %v2714, %v2716
        %2771 = vadd.xlane.f32.xlu0 %v2770
        %v2772 = vpop.xlane.xlu0 %2771
        %v2773 = vadd.f32 %v2718, %v2720
        %2774 = vadd.xlane.f32.xlu0 %v2773
        %v2775 = vpop.xlane.xlu0 %2774
        %v2776 = vadd.f32 %v2722, %v2724
        %2777 = vadd.xlane.f32.xlu0 %v2776
        %v2778 = vpop.xlane.xlu0 %2777
        %v2779 = vadd.f32 %v2726, %v2728
        %2780 = vadd.xlane.f32.xlu0 %v2779
        %v2781 = vpop.xlane.xlu0 %2780
        %v2782 = vadd.f32 %v2730, %v2732
        %2783 = vadd.xlane.f32.xlu0 %v2782
        %v2784 = vpop.xlane.xlu0 %2783
        %v2785 = vadd.f32 %v2734, %v2736
        %2786 = vadd.xlane.f32.xlu0 %v2785
        %v2787 = vpop.xlane.xlu0 %2786
        %v2788 = vadd.f32 %v2738, %v2740
        %2789 = vadd.xlane.f32.xlu0 %v2788
        %v2790 = vpop.xlane.xlu0 %2789
        %v2791 = vadd.f32 %v2742, %v2744
        %2792 = vadd.xlane.f32.xlu0 %v2791
        %v2793 = vpop.xlane.xlu0 %2792
        %v2794 = vadd.f32 %v2746, %v2748
        %2795 = vadd.xlane.f32.xlu0 %v2794
        %v2796 = vpop.xlane.xlu0 %2795
        %v2797 = vrcp.pop %v2751
        %v2798 = vrcp.pop %v2754
        %v2799 = vrcp.pop %v2757
        %v2800 = vrcp.pop %v2760
        %v2801 = vrcp.pop %v2763
        %v2802 = vrcp.pop %v2766
        %v2803 = vrcp.pop %v2769
        %v2804 = vrcp.pop %v2772
        %v2805 = vrcp.pop %v2775
        %v2806 = vrcp.pop %v2778
        %v2807 = vrcp.pop %v2781
        %v2808 = vrcp.pop %v2784
        %v2809 = vrcp.pop %v2787
        %v2810 = vrcp.pop %v2790
        %v2811 = vrcp.pop %v2793
        %v2812 = vrcp.pop %v2796
        %v2813 = vmul.f32 %v2686, %v2797
        %v2814 = vmul.f32 %v2688, %v2797
        %v2815 = vmul.f32 %v2690, %v2798
        %v2816 = vmul.f32 %v2692, %v2798
        %v2817 = vmul.f32 %v2694, %v2799
        %v2818 = vmul.f32 %v2696, %v2799
        %v2819 = vmul.f32 %v2698, %v2800
        %v2820 = vmul.f32 %v2700, %v2800
        %v2821 = vmul.f32 %v2702, %v2801
        %v2822 = vmul.f32 %v2704, %v2801
        %v2823 = vmul.f32 %v2706, %v2802
        %v2824 = vmul.f32 %v2708, %v2802
        %v2825 = vmul.f32 %v2710, %v2803
        %v2826 = vmul.f32 %v2712, %v2803
        %v2827 = vmul.f32 %v2714, %v2804
        %v2828 = vmul.f32 %v2716, %v2804
        %v2829 = vmul.f32 %v2718, %v2805
        %v2830 = vmul.f32 %v2720, %v2805
        %v2831 = vmul.f32 %v2722, %v2806
        %v2832 = vmul.f32 %v2724, %v2806
        %v2833 = vmul.f32 %v2726, %v2807
        %v2834 = vmul.f32 %v2728, %v2807
        %v2835 = vmul.f32 %v2730, %v2808
        %v2836 = vmul.f32 %v2732, %v2808
        %v2837 = vmul.f32 %v2734, %v2809
        %v2838 = vmul.f32 %v2736, %v2809
        %v2839 = vmul.f32 %v2738, %v2810
        %v2840 = vmul.f32 %v2740, %v2810
        %v2841 = vmul.f32 %v2742, %v2811
        %v2842 = vmul.f32 %v2744, %v2811
        %v2843 = vmul.f32 %v2746, %v2812
        %v2844 = vmul.f32 %v2748, %v2812
        %v2845 = vld [vmem:[%s337] sm:$0xff]
        %v2846 = vld [vmem:[%s337 + $0x8] sm:$0xff]
        %v2847 = vld [vmem:[%s337 + $0x10] sm:$0xff]
        %v2848 = vld [vmem:[%s337 + $0x18] sm:$0xff]
        %v2849 = vld [vmem:[%s337 + $0x20] sm:$0xff]
        %v2850 = vld [vmem:[%s337 + $0x28] sm:$0xff]
        %v2851 = vld [vmem:[%s337 + $0x30] sm:$0xff]
        %v2852 = vld [vmem:[%s337 + $0x38] sm:$0xff]
        %v2853 = vld [vmem:[%s337 + $0x40] sm:$0xff]
        %v2854 = vld [vmem:[%s337 + $0x48] sm:$0xff]
        %v2855 = vld [vmem:[%s337 + $0x50] sm:$0xff]
        %v2856 = vld [vmem:[%s337 + $0x58] sm:$0xff]
        %v2857 = vld [vmem:[%s337 + $0x60] sm:$0xff]
        %v2858 = vld [vmem:[%s337 + $0x68] sm:$0xff]
        %v2859 = vld [vmem:[%s337 + $0x70] sm:$0xff]
        %v2860 = vld [vmem:[%s337 + $0x78] sm:$0xff]
        %v2861 = vld [vmem:[%s337 + $0x80] sm:$0xff]
        %v2862 = vld [vmem:[%s337 + $0x88] sm:$0xff]
        %v2863 = vld [vmem:[%s337 + $0x90] sm:$0xff]
        %v2864 = vld [vmem:[%s337 + $0x98] sm:$0xff]
        %v2865 = vld [vmem:[%s337 + $0xa0] sm:$0xff]
        %v2866 = vld [vmem:[%s337 + $0xa8] sm:$0xff]
        %v2867 = vld [vmem:[%s337 + $0xb0] sm:$0xff]
        %v2868 = vld [vmem:[%s337 + $0xb8] sm:$0xff]
        %v2869 = vld [vmem:[%s337 + $0xc0] sm:$0xff]
        %v2870 = vld [vmem:[%s337 + $0xc8] sm:$0xff]
        %v2871 = vld [vmem:[%s337 + $0xd0] sm:$0xff]
        %v2872 = vld [vmem:[%s337 + $0xd8] sm:$0xff]
        %v2873 = vld [vmem:[%s337 + $0xe0] sm:$0xff]
        %v2874 = vld [vmem:[%s337 + $0xe8] sm:$0xff]
        %v2875 = vld [vmem:[%s337 + $0xf0] sm:$0xff]
        %v2876 = vld [vmem:[%s337 + $0xf8] sm:$0xff]
        %v2877 = vpack.c.bf16 %v2815, %v2813
        %v2878 = vpack.c.bf16 %v2816, %v2814
        %v2879 = vpack.c.bf16 %v2819, %v2817
        %v2880 = vpack.c.bf16 %v2820, %v2818
        %v2881 = vpack.c.bf16 %v2823, %v2821
        %v2882 = vpack.c.bf16 %v2824, %v2822
        %v2883 = vpack.c.bf16 %v2827, %v2825
        %v2884 = vpack.c.bf16 %v2828, %v2826
        %v2885 = vpack.c.bf16 %v2831, %v2829
        %v2886 = vpack.c.bf16 %v2832, %v2830
        %v2887 = vpack.c.bf16 %v2835, %v2833
        %v2888 = vpack.c.bf16 %v2836, %v2834
        %v2889 = vpack.c.bf16 %v2839, %v2837
        %v2890 = vpack.c.bf16 %v2840, %v2838
        %v2891 = vpack.c.bf16 %v2843, %v2841
        %v2892 = vpack.c.bf16 %v2844, %v2842
        %2893 = vmatprep.subr.bf16.mxu0 %v2878
        %2894 = vmatpush1.bf16.msra.mxu0 %v2877
        %2895 = vmatprep.subr.bf16.mxu0 %v2880
        %2896 = vmatpush1.bf16.msra.mxu0 %v2879
        %2897 = vmatprep.subr.bf16.mxu0 %v2882
        %2898 = vmatpush1.bf16.msra.mxu0 %v2881
        %2899 = vmatprep.subr.bf16.mxu0 %v2884
        %2900 = vmatpush1.bf16.msra.mxu0 %v2883
        %2901 = vmatprep.subr.bf16.mxu0 %v2886
        %2902 = vmatpush1.bf16.msra.mxu0 %v2885
        %2903 = vmatprep.subr.bf16.mxu0 %v2888
        %2904 = vmatpush1.bf16.msra.mxu0 %v2887
        %2905 = vmatprep.subr.bf16.mxu0 %v2890
        %2906 = vmatpush1.bf16.msra.mxu0 %v2889
        %2907 = vmatprep.subr.bf16.mxu0 %v2892
        %2908 = vmatpush1.bf16.msra.mxu0 %v2891
        %2909 = vmatprep.subr.bf16.mxu0 0
        %2910 = vmatpush1.bf16.msra.mxu0 0
        %2911 = vmatprep.subr.bf16.mxu0 0
        %2912 = vmatpush1.bf16.msra.mxu0 0
        %2913 = vmatprep.subr.bf16.mxu0 0
        %2914 = vmatpush1.bf16.msra.mxu0 0
        %2915 = vmatprep.subr.bf16.mxu0 0
        %2916 = vmatpush1.bf16.msra.mxu0 0
        %2917 = vmatprep.subr.bf16.mxu0 0
        %2918 = vmatpush1.bf16.msra.mxu0 0
        %2919 = vmatprep.subr.bf16.mxu0 0
        %2920 = vmatpush1.bf16.msra.mxu0 0
        %2921 = vmatprep.subr.bf16.mxu0 0
        %2922 = vmatpush1.bf16.msra.mxu0 0
        %2923 = vmatprep.subr.bf16.mxu0 0
        %2924 = vmatpush1.bf16.msra.mxu0 0
        %2925 = vmatprep.mubr.bf16.mxu0 0
        %2926 = vmatmul.mubr.bf16.gmra.mrb[0].mxu0 %v2468
        %v2927 = vpop.f32.mrb[0].mxu0
        %v2928 = vadd.f32 0.0, %v2927
        %v2929 = vpop.f32.mrb[0].mxu0
        %v2930 = vadd.f32 0.0, %v2929
        %v2931 = vpop.f32.mrb[0].mxu0
        %v2932 = vadd.f32 0.0, %v2931
        %v2933 = vpop.f32.mrb[0].mxu0
        %v2934 = vadd.f32 0.0, %v2933
        %2935 = vmatprep.mubr.bf16.mxu0 0
        %2936 = vmatmul.mubr.bf16.gmra.mrb[0].mxu0 %v2469
        %v2937 = vpop.f32.mrb[0].mxu0
        %v2938 = vadd.f32 0.0, %v2937
        %v2939 = vpop.f32.mrb[0].mxu0
        %v2940 = vadd.f32 0.0, %v2939
        %v2941 = vpop.f32.mrb[0].mxu0
        %v2942 = vadd.f32 0.0, %v2941
        %v2943 = vpop.f32.mrb[0].mxu0
        %v2944 = vadd.f32 0.0, %v2943
        %2945 = vmatprep.mubr.bf16.mxu0 0
        %2946 = vmatmul.mubr.bf16.gmra.mrb[0].mxu0 %v2470
        %v2947 = vpop.f32.mrb[0].mxu0
        %v2948 = vadd.f32 0.0, %v2947
        %v2949 = vpop.f32.mrb[0].mxu0
        %v2950 = vadd.f32 0.0, %v2949
        %v2951 = vpop.f32.mrb[0].mxu0
        %v2952 = vadd.f32 0.0, %v2951
        %v2953 = vpop.f32.mrb[0].mxu0
        %v2954 = vadd.f32 0.0, %v2953
        %2955 = vmatprep.mubr.bf16.mxu0 0
        %2956 = vmatmul.mubr.bf16.gmra.mrb[0].mxu0 %v2471
        %v2957 = vpop.f32.mrb[0].mxu0
        %v2958 = vadd.f32 0.0, %v2957
        %v2959 = vpop.f32.mrb[0].mxu0
        %v2960 = vadd.f32 0.0, %v2959
        %v2961 = vpop.f32.mrb[0].mxu0
        %v2962 = vadd.f32 0.0, %v2961
        %v2963 = vpop.f32.mrb[0].mxu0
        %v2964 = vadd.f32 0.0, %v2963
        %2965 = vmatprep.mubr.bf16.mxu0 0
        %2966 = vmatmul.mubr.bf16.gmra.mrb[0].mxu0 %v2472
        %v2967 = vpop.f32.mrb[0].mxu0
        %v2968 = vadd.f32 0.0, %v2967
        %v2969 = vpop.f32.mrb[0].mxu0
        %v2970 = vadd.f32 0.0, %v2969
        %v2971 = vpop.f32.mrb[0].mxu0
        %v2972 = vadd.f32 0.0, %v2971
        %v2973 = vpop.f32.mrb[0].mxu0
        %v2974 = vadd.f32 0.0, %v2973
        %2975 = vmatprep.mubr.bf16.mxu0 0
        %2976 = vmatmul.mubr.bf16.gmra.mrb[0].mxu0 %v2473
        %v2977 = vpop.f32.mrb[0].mxu0
        %v2978 = vadd.f32 0.0, %v2977
        %v2979 = vpop.f32.mrb[0].mxu0
        %v2980 = vadd.f32 0.0, %v2979
        %v2981 = vpop.f32.mrb[0].mxu0
        %v2982 = vadd.f32 0.0, %v2981
        %v2983 = vpop.f32.mrb[0].mxu0
        %v2984 = vadd.f32 0.0, %v2983
        %2985 = vmatprep.mubr.bf16.mxu0 0
        %2986 = vmatmul.mubr.bf16.gmra.mrb[0].mxu0 %v2474
        %v2987 = vpop.f32.mrb[0].mxu0
        %v2988 = vadd.f32 0.0, %v2987
        %v2989 = vpop.f32.mrb[0].mxu0
        %v2990 = vadd.f32 0.0, %v2989
        %v2991 = vpop.f32.mrb[0].mxu0
        %v2992 = vadd.f32 0.0, %v2991
        %v2993 = vpop.f32.mrb[0].mxu0
        %v2994 = vadd.f32 0.0, %v2993
        %2995 = vmatprep.mubr.bf16.mxu0 0
        %2996 = vmatmul.mubr.bf16.gmra.mrb[0].mxu0 %v2475
        %v2997 = vpop.f32.mrb[0].mxu0
        %v2998 = vadd.f32 0.0, %v2997
        %v2999 = vpop.f32.mrb[0].mxu0
        %v3000 = vadd.f32 0.0, %v2999
        %v3001 = vpop.f32.mrb[0].mxu0
        %v3002 = vadd.f32 0.0, %v3001
        %v3003 = vpop.f32.mrb[0].mxu0
        %v3004 = vadd.f32 0.0, %v3003
        %3005 = vdwg.mxu0
        %v3006 = vadd.f32 %v2845, %v2928
        %v3007 = vadd.f32 %v2846, %v2930
        %v3008 = vadd.f32 %v2847, %v2932
        %v3009 = vadd.f32 %v2848, %v2934
        %v3010 = vadd.f32 %v2849, %v2938
        %v3011 = vadd.f32 %v2850, %v2940
        %v3012 = vadd.f32 %v2851, %v2942
        %v3013 = vadd.f32 %v2852, %v2944
        %v3014 = vadd.f32 %v2853, %v2948
        %v3015 = vadd.f32 %v2854, %v2950
        %v3016 = vadd.f32 %v2855, %v2952
        %v3017 = vadd.f32 %v2856, %v2954
        %v3018 = vadd.f32 %v2857, %v2958
        %v3019 = vadd.f32 %v2858, %v2960
        %v3020 = vadd.f32 %v2859, %v2962
        %v3021 = vadd.f32 %v2860, %v2964
        %v3022 = vadd.f32 %v2861, %v2968
        %v3023 = vadd.f32 %v2862, %v2970
        %v3024 = vadd.f32 %v2863, %v2972
        %v3025 = vadd.f32 %v2864, %v2974
        %v3026 = vadd.f32 %v2865, %v2978
        %v3027 = vadd.f32 %v2866, %v2980
        %v3028 = vadd.f32 %v2867, %v2982
        %v3029 = vadd.f32 %v2868, %v2984
        %v3030 = vadd.f32 %v2869, %v2988
        %v3031 = vadd.f32 %v2870, %v2990
        %v3032 = vadd.f32 %v2871, %v2992
        %v3033 = vadd.f32 %v2872, %v2994
        %v3034 = vadd.f32 %v2873, %v2998
        %v3035 = vadd.f32 %v2874, %v3000
        %v3036 = vadd.f32 %v2875, %v3002
        %v3037 = vadd.f32 %v2876, %v3004
        %3038 = vst [vmem:[%s337] sm:$0xff] %v3006
        %3039 = vst [vmem:[%s337 + $0x8] sm:$0xff] %v3007
        %3040 = vst [vmem:[%s337 + $0x10] sm:$0xff] %v3008
        %3041 = vst [vmem:[%s337 + $0x18] sm:$0xff] %v3009
        %3042 = vst [vmem:[%s337 + $0x20] sm:$0xff] %v3010
        %3043 = vst [vmem:[%s337 + $0x28] sm:$0xff] %v3011
        %3044 = vst [vmem:[%s337 + $0x30] sm:$0xff] %v3012
        %3045 = vst [vmem:[%s337 + $0x38] sm:$0xff] %v3013
        %3046 = vst [vmem:[%s337 + $0x40] sm:$0xff] %v3014
        %3047 = vst [vmem:[%s337 + $0x48] sm:$0xff] %v3015
        %3048 = vst [vmem:[%s337 + $0x50] sm:$0xff] %v3016
        %3049 = vst [vmem:[%s337 + $0x58] sm:$0xff] %v3017
        %3050 = vst [vmem:[%s337 + $0x60] sm:$0xff] %v3018
        %3051 = vst [vmem:[%s337 + $0x68] sm:$0xff] %v3019
        %3052 = vst [vmem:[%s337 + $0x70] sm:$0xff] %v3020
        %3053 = vst [vmem:[%s337 + $0x78] sm:$0xff] %v3021
        %3054 = vst [vmem:[%s337 + $0x80] sm:$0xff] %v3022
        %3055 = vst [vmem:[%s337 + $0x88] sm:$0xff] %v3023
        %3056 = vst [vmem:[%s337 + $0x90] sm:$0xff] %v3024
        %3057 = vst [vmem:[%s337 + $0x98] sm:$0xff] %v3025
        %3058 = vst [vmem:[%s337 + $0xa0] sm:$0xff] %v3026
        %3059 = vst [vmem:[%s337 + $0xa8] sm:$0xff] %v3027
        %3060 = vst [vmem:[%s337 + $0xb0] sm:$0xff] %v3028
        %3061 = vst [vmem:[%s337 + $0xb8] sm:$0xff] %v3029
        %3062 = vst [vmem:[%s337 + $0xc0] sm:$0xff] %v3030
        %3063 = vst [vmem:[%s337 + $0xc8] sm:$0xff] %v3031
        %3064 = vst [vmem:[%s337 + $0xd0] sm:$0xff] %v3032
        %3065 = vst [vmem:[%s337 + $0xd8] sm:$0xff] %v3033
        %3066 = vst [vmem:[%s337 + $0xe0] sm:$0xff] %v3034
        %3067 = vst [vmem:[%s337 + $0xe8] sm:$0xff] %v3035
        %3068 = vst [vmem:[%s337 + $0xf0] sm:$0xff] %v3036
        %3069 = vst [vmem:[%s337 + $0xf8] sm:$0xff] %v3037
        %p3070 = scmp.eq.s32.totalorder %s28, 1
        // Predicated region
        $region61: #{tpu_custom_call.1} parent=55 // pred_check
          %p3071 = pneg %p3070
        $region62: #{tpu_custom_call.1} parent=55 // pred_check_branch
          %3073 = sbr.rel (%p3071) target = $region64
        $region63: #{tpu_custom_call.1} parent=55 // pred_region
          %v3074 = vld [vmem:[%s337] sm:$0xff]
          %v3075 = vld [vmem:[%s337 + $0x8] sm:$0xff]
          %v3076 = vld [vmem:[%s337 + $0x10] sm:$0xff]
          %v3077 = vld [vmem:[%s337 + $0x18] sm:$0xff]
          %v3078 = vld [vmem:[%s337 + $0x20] sm:$0xff]
          %v3079 = vld [vmem:[%s337 + $0x28] sm:$0xff]
          %v3080 = vld [vmem:[%s337 + $0x30] sm:$0xff]
          %v3081 = vld [vmem:[%s337 + $0x38] sm:$0xff]
          %v3082 = vld [vmem:[%s337 + $0x40] sm:$0xff]
          %v3083 = vld [vmem:[%s337 + $0x48] sm:$0xff]
          %v3084 = vld [vmem:[%s337 + $0x50] sm:$0xff]
          %v3085 = vld [vmem:[%s337 + $0x58] sm:$0xff]
          %v3086 = vld [vmem:[%s337 + $0x60] sm:$0xff]
          %v3087 = vld [vmem:[%s337 + $0x68] sm:$0xff]
          %v3088 = vld [vmem:[%s337 + $0x70] sm:$0xff]
          %v3089 = vld [vmem:[%s337 + $0x78] sm:$0xff]
          %v3090 = vld [vmem:[%s337 + $0x80] sm:$0xff]
          %v3091 = vld [vmem:[%s337 + $0x88] sm:$0xff]
          %v3092 = vld [vmem:[%s337 + $0x90] sm:$0xff]
          %v3093 = vld [vmem:[%s337 + $0x98] sm:$0xff]
          %v3094 = vld [vmem:[%s337 + $0xa0] sm:$0xff]
          %v3095 = vld [vmem:[%s337 + $0xa8] sm:$0xff]
          %v3096 = vld [vmem:[%s337 + $0xb0] sm:$0xff]
          %v3097 = vld [vmem:[%s337 + $0xb8] sm:$0xff]
          %v3098 = vld [vmem:[%s337 + $0xc0] sm:$0xff]
          %v3099 = vld [vmem:[%s337 + $0xc8] sm:$0xff]
          %v3100 = vld [vmem:[%s337 + $0xd0] sm:$0xff]
          %v3101 = vld [vmem:[%s337 + $0xd8] sm:$0xff]
          %v3102 = vld [vmem:[%s337 + $0xe0] sm:$0xff]
          %v3103 = vld [vmem:[%s337 + $0xe8] sm:$0xff]
          %v3104 = vld [vmem:[%s337 + $0xf0] sm:$0xff]
          %v3105 = vld [vmem:[%s337 + $0xf8] sm:$0xff]
          %v3106 = vld [vmem:[%s7] sm:$0xf]
          %v3107 = vld [vmem:[%s7 + $0x4] sm:$0xf]
          %v3108 = vld [vmem:[%s7 + $0x8] sm:$0xf]
          %v3109 = vld [vmem:[%s7 + $0xc] sm:$0xf]
          %v3110 = vld [vmem:[%s7 + $0x10] sm:$0xf]
          %v3111 = vld [vmem:[%s7 + $0x14] sm:$0xf]
          %v3112 = vld [vmem:[%s7 + $0x18] sm:$0xf]
          %v3113 = vld [vmem:[%s7 + $0x1c] sm:$0xf]
          %v3114 = vld [vmem:[%s7 + $0x20] sm:$0xf]
          %v3115 = vld [vmem:[%s7 + $0x24] sm:$0xf]
          %v3116 = vld [vmem:[%s7 + $0x28] sm:$0xf]
          %v3117 = vld [vmem:[%s7 + $0x2c] sm:$0xf]
          %v3118 = vld [vmem:[%s7 + $0x30] sm:$0xf]
          %v3119 = vld [vmem:[%s7 + $0x34] sm:$0xf]
          %v3120 = vld [vmem:[%s7 + $0x38] sm:$0xf]
          %v3121 = vld [vmem:[%s7 + $0x3c] sm:$0xf]
          %v3122 = vpack.c.bf16 %v3076, %v3074
          %v3123 = vpack.c.bf16 %v3077, %v3075
          %v3124 = vpack.c.bf16 %v3080, %v3078
          %v3125 = vpack.c.bf16 %v3081, %v3079
          %v3126 = vpack.c.bf16 %v3084, %v3082
          %v3127 = vpack.c.bf16 %v3085, %v3083
          %v3128 = vpack.c.bf16 %v3088, %v3086
          %v3129 = vpack.c.bf16 %v3089, %v3087
          %v3130 = vpack.c.bf16 %v3092, %v3090
          %v3131 = vpack.c.bf16 %v3093, %v3091
          %v3132 = vpack.c.bf16 %v3096, %v3094
          %v3133 = vpack.c.bf16 %v3097, %v3095
          %v3134 = vpack.c.bf16 %v3100, %v3098
          %v3135 = vpack.c.bf16 %v3101, %v3099
          %v3136 = vpack.c.bf16 %v3104, %v3102
          %v3137 = vpack.c.bf16 %v3105, %v3103
          %v3138 = vld [vmem:[%s8] sm:$0xff]
          %v3139 = vld [vmem:[%s8 + $0x8] sm:$0xff]
          %v3140 = vld [vmem:[%s8 + $0x10] sm:$0xff]
          %v3141 = vld [vmem:[%s8 + $0x18] sm:$0xff]
          %v3142 = vld [vmem:[%s8 + $0x20] sm:$0xff]
          %v3143 = vld [vmem:[%s8 + $0x28] sm:$0xff]
          %v3144 = vld [vmem:[%s8 + $0x30] sm:$0xff]
          %v3145 = vld [vmem:[%s8 + $0x38] sm:$0xff]
          %v3146 = vld [vmem:[%s8 + $0x40] sm:$0xff]
          %v3147 = vld [vmem:[%s8 + $0x48] sm:$0xff]
          %v3148 = vld [vmem:[%s8 + $0x50] sm:$0xff]
          %v3149 = vld [vmem:[%s8 + $0x58] sm:$0xff]
          %v3150 = vld [vmem:[%s8 + $0x60] sm:$0xff]
          %v3151 = vld [vmem:[%s8 + $0x68] sm:$0xff]
          %v3152 = vld [vmem:[%s8 + $0x70] sm:$0xff]
          %v3153 = vld [vmem:[%s8 + $0x78] sm:$0xff]
          %3155 = vset.pattern.permute.xlu0 0
          %3156 = vperm.xlu0 %3155, %v3138
          %v3157 = vpop.permute.xlu0 %3156
          %3160 = vset.pattern.permute.xlu0 0
          %3161 = vperm.xlu0 %3160, %v3139
          %v3162 = vpop.permute.xlu0 %3161
          %3165 = vset.pattern.permute.xlu0 0
          %3166 = vperm.xlu0 %3165, %v3140
          %v3167 = vpop.permute.xlu0 %3166
          %3170 = vset.pattern.permute.xlu0 0
          %3171 = vperm.xlu0 %3170, %v3141
          %v3172 = vpop.permute.xlu0 %3171
          %3175 = vset.pattern.permute.xlu0 0
          %3176 = vperm.xlu0 %3175, %v3142
          %v3177 = vpop.permute.xlu0 %3176
          %3180 = vset.pattern.permute.xlu0 0
          %3181 = vperm.xlu0 %3180, %v3143
          %v3182 = vpop.permute.xlu0 %3181
          %3185 = vset.pattern.permute.xlu0 0
          %3186 = vperm.xlu0 %3185, %v3144
          %v3187 = vpop.permute.xlu0 %3186
          %3190 = vset.pattern.permute.xlu0 0
          %3191 = vperm.xlu0 %3190, %v3145
          %v3192 = vpop.permute.xlu0 %3191
          %3195 = vset.pattern.permute.xlu0 0
          %3196 = vperm.xlu0 %3195, %v3146
          %v3197 = vpop.permute.xlu0 %3196
          %3200 = vset.pattern.permute.xlu0 0
          %3201 = vperm.xlu0 %3200, %v3147
          %v3202 = vpop.permute.xlu0 %3201
          %3205 = vset.pattern.permute.xlu0 0
          %3206 = vperm.xlu0 %3205, %v3148
          %v3207 = vpop.permute.xlu0 %3206
          %3210 = vset.pattern.permute.xlu0 0
          %3211 = vperm.xlu0 %3210, %v3149
          %v3212 = vpop.permute.xlu0 %3211
          %3215 = vset.pattern.permute.xlu0 0
          %3216 = vperm.xlu0 %3215, %v3150
          %v3217 = vpop.permute.xlu0 %3216
          %3220 = vset.pattern.permute.xlu0 0
          %3221 = vperm.xlu0 %3220, %v3151
          %v3222 = vpop.permute.xlu0 %3221
          %3225 = vset.pattern.permute.xlu0 0
          %3226 = vperm.xlu0 %3225, %v3152
          %v3227 = vpop.permute.xlu0 %3226
          %3230 = vset.pattern.permute.xlu0 0
          %3231 = vperm.xlu0 %3230, %v3153
          %v3232 = vpop.permute.xlu0 %3231
          %v3250 = vunpack.c.l.b16 %v3106
          %v3251 = vunpack.c.l.b16 %v3107
          %v3252 = vunpack.c.l.b16 %v3108
          %v3253 = vunpack.c.l.b16 %v3109
          %v3254 = vunpack.c.l.b16 %v3110
          %v3255 = vunpack.c.l.b16 %v3111
          %v3256 = vunpack.c.l.b16 %v3112
          %v3257 = vunpack.c.l.b16 %v3113
          %v3258 = vunpack.c.l.b16 %v3114
          %v3259 = vunpack.c.l.b16 %v3115
          %v3260 = vunpack.c.l.b16 %v3116
          %v3261 = vunpack.c.l.b16 %v3117
          %v3262 = vunpack.c.l.b16 %v3118
          %v3263 = vunpack.c.l.b16 %v3119
          %v3264 = vunpack.c.l.b16 %v3120
          %v3265 = vunpack.c.l.b16 %v3121
          %v3266 = vpack.c.b16 %v3251, %v3250
          %v3267 = vpack.c.b16 %v3253, %v3252
          %v3268 = vpack.c.b16 %v3255, %v3254
          %v3269 = vpack.c.b16 %v3257, %v3256
          %v3270 = vpack.c.b16 %v3259, %v3258
          %v3271 = vpack.c.b16 %v3261, %v3260
          %v3272 = vpack.c.b16 %v3263, %v3262
          %v3273 = vpack.c.b16 %v3265, %v3264
          %3282 = vmatprep.subr.bf16.mxu0 %v3123
          %3283 = vmatpush1.bf16.msra.mxu0 %v3122
          %3284 = vmatprep.subr.bf16.mxu0 %v3125
          %3285 = vmatpush1.bf16.msra.mxu0 %v3124
          %3286 = vmatprep.subr.bf16.mxu0 %v3127
          %3287 = vmatpush1.bf16.msra.mxu0 %v3126
          %3288 = vmatprep.subr.bf16.mxu0 %v3129
          %3289 = vmatpush1.bf16.msra.mxu0 %v3128
          %3290 = vmatprep.subr.bf16.mxu0 %v3131
          %3291 = vmatpush1.bf16.msra.mxu0 %v3130
          %3292 = vmatprep.subr.bf16.mxu0 %v3133
          %3293 = vmatpush1.bf16.msra.mxu0 %v3132
          %3294 = vmatprep.subr.bf16.mxu0 %v3135
          %3295 = vmatpush1.bf16.msra.mxu0 %v3134
          %3296 = vmatprep.subr.bf16.mxu0 %v3137
          %3297 = vmatpush1.bf16.msra.mxu0 %v3136
          %3298 = vmatprep.subr.bf16.mxu0 0
          %3299 = vmatpush1.bf16.msra.mxu0 0
          %3300 = vmatprep.subr.bf16.mxu0 0
          %3301 = vmatpush1.bf16.msra.mxu0 0
          %3302 = vmatprep.subr.bf16.mxu0 0
          %3303 = vmatpush1.bf16.msra.mxu0 0
          %3304 = vmatprep.subr.bf16.mxu0 0
          %3305 = vmatpush1.bf16.msra.mxu0 0
          %3306 = vmatprep.subr.bf16.mxu0 0
          %3307 = vmatpush1.bf16.msra.mxu0 0
          %3308 = vmatprep.subr.bf16.mxu0 0
          %3309 = vmatpush1.bf16.msra.mxu0 0
          %3310 = vmatprep.subr.bf16.mxu0 0
          %3311 = vmatpush1.bf16.msra.mxu0 0
          %3312 = vmatprep.subr.bf16.mxu0 0
          %3313 = vmatpush1.bf16.msra.mxu0 0
          %3314 = vmatprep.mubr.bf16.mxu0 0
          %3315 = vmatmul.mubr.bf16.gmra.mrb[0].mxu0 %v3266
          %v3316 = vpop.f32.mrb[0].mxu0
          %v3317 = vadd.f32 %v3157, %v3316
          %v3318 = vpop.f32.mrb[0].mxu0
          %v3319 = vadd.f32 %v3157, %v3318
          %v3320 = vpop.f32.mrb[0].mxu0
          %v3321 = vadd.f32 %v3162, %v3320
          %v3322 = vpop.f32.mrb[0].mxu0
          %v3323 = vadd.f32 %v3162, %v3322
          %3324 = vmatprep.mubr.bf16.mxu0 0
          %3325 = vmatmul.mubr.bf16.gmra.mrb[0].mxu0 %v3267
          %v3326 = vpop.f32.mrb[0].mxu0
          %v3327 = vadd.f32 %v3167, %v3326
          %v3328 = vpop.f32.mrb[0].mxu0
          %v3329 = vadd.f32 %v3167, %v3328
          %v3330 = vpop.f32.mrb[0].mxu0
          %v3331 = vadd.f32 %v3172, %v3330
          %v3332 = vpop.f32.mrb[0].mxu0
          %v3333 = vadd.f32 %v3172, %v3332
          %3334 = vmatprep.mubr.bf16.mxu0 0
          %3335 = vmatmul.mubr.bf16.gmra.mrb[0].mxu0 %v3268
          %v3336 = vpop.f32.mrb[0].mxu0
          %v3337 = vadd.f32 %v3177, %v3336
          %v3338 = vpop.f32.mrb[0].mxu0
          %v3339 = vadd.f32 %v3177, %v3338
          %v3340 = vpop.f32.mrb[0].mxu0
          %v3341 = vadd.f32 %v3182, %v3340
          %v3342 = vpop.f32.mrb[0].mxu0
          %v3343 = vadd.f32 %v3182, %v3342
          %3344 = vmatprep.mubr.bf16.mxu0 0
          %3345 = vmatmul.mubr.bf16.gmra.mrb[0].mxu0 %v3269
          %v3346 = vpop.f32.mrb[0].mxu0
          %v3347 = vadd.f32 %v3187, %v3346
          %v3348 = vpop.f32.mrb[0].mxu0
          %v3349 = vadd.f32 %v3187, %v3348
          %v3350 = vpop.f32.mrb[0].mxu0
          %v3351 = vadd.f32 %v3192, %v3350
          %v3352 = vpop.f32.mrb[0].mxu0
          %v3353 = vadd.f32 %v3192, %v3352
          %3354 = vmatprep.mubr.bf16.mxu0 0
          %3355 = vmatmul.mubr.bf16.gmra.mrb[0].mxu0 %v3270
          %v3356 = vpop.f32.mrb[0].mxu0
          %v3357 = vadd.f32 %v3197, %v3356
          %v3358 = vpop.f32.mrb[0].mxu0
          %v3359 = vadd.f32 %v3197, %v3358
          %v3360 = vpop.f32.mrb[0].mxu0
          %v3361 = vadd.f32 %v3202, %v3360
          %v3362 = vpop.f32.mrb[0].mxu0
          %v3363 = vadd.f32 %v3202, %v3362
          %3364 = vmatprep.mubr.bf16.mxu0 0
          %3365 = vmatmul.mubr.bf16.gmra.mrb[0].mxu0 %v3271
          %v3366 = vpop.f32.mrb[0].mxu0
          %v3367 = vadd.f32 %v3207, %v3366
          %v3368 = vpop.f32.mrb[0].mxu0
          %v3369 = vadd.f32 %v3207, %v3368
          %v3370 = vpop.f32.mrb[0].mxu0
          %v3371 = vadd.f32 %v3212, %v3370
          %v3372 = vpop.f32.mrb[0].mxu0
          %v3373 = vadd.f32 %v3212, %v3372
          %3374 = vmatprep.mubr.bf16.mxu0 0
          %3375 = vmatmul.mubr.bf16.gmra.mrb[0].mxu0 %v3272
          %v3376 = vpop.f32.mrb[0].mxu0
          %v3377 = vadd.f32 %v3217, %v3376
          %v3378 = vpop.f32.mrb[0].mxu0
          %v3379 = vadd.f32 %v3217, %v3378
          %v3380 = vpop.f32.mrb[0].mxu0
          %v3381 = vadd.f32 %v3222, %v3380
          %v3382 = vpop.f32.mrb[0].mxu0
          %v3383 = vadd.f32 %v3222, %v3382
          %3384 = vmatprep.mubr.bf16.mxu0 0
          %3385 = vmatmul.mubr.bf16.gmra.mrb[0].mxu0 %v3273
          %v3386 = vpop.f32.mrb[0].mxu0
          %v3387 = vadd.f32 %v3227, %v3386
          %v3388 = vpop.f32.mrb[0].mxu0
          %v3389 = vadd.f32 %v3227, %v3388
          %v3390 = vpop.f32.mrb[0].mxu0
          %v3391 = vadd.f32 %v3232, %v3390
          %v3392 = vpop.f32.mrb[0].mxu0
          %v3393 = vadd.f32 %v3232, %v3392
          %3394 = vdwg.mxu0
          %v3395 = vld [vmem:[%s342] sm:$0xff]
          %v3396 = vld [vmem:[%s342 + $0x8] sm:$0xff]
          %v3397 = vld [vmem:[%s342 + $0x10] sm:$0xff]
          %v3398 = vld [vmem:[%s342 + $0x18] sm:$0xff]
          %v3399 = vld [vmem:[%s342 + $0x20] sm:$0xff]
          %v3400 = vld [vmem:[%s342 + $0x28] sm:$0xff]
          %v3401 = vld [vmem:[%s342 + $0x30] sm:$0xff]
          %v3402 = vld [vmem:[%s342 + $0x38] sm:$0xff]
          %v3403 = vld [vmem:[%s342 + $0x40] sm:$0xff]
          %v3404 = vld [vmem:[%s342 + $0x48] sm:$0xff]
          %v3405 = vld [vmem:[%s342 + $0x50] sm:$0xff]
          %v3406 = vld [vmem:[%s342 + $0x58] sm:$0xff]
          %v3407 = vld [vmem:[%s342 + $0x60] sm:$0xff]
          %v3408 = vld [vmem:[%s342 + $0x68] sm:$0xff]
          %v3409 = vld [vmem:[%s342 + $0x70] sm:$0xff]
          %v3410 = vld [vmem:[%s342 + $0x78] sm:$0xff]
          %v3411 = vld [vmem:[%s342 + $0x80] sm:$0xff]
          %v3412 = vld [vmem:[%s342 + $0x88] sm:$0xff]
          %v3413 = vld [vmem:[%s342 + $0x90] sm:$0xff]
          %v3414 = vld [vmem:[%s342 + $0x98] sm:$0xff]
          %v3415 = vld [vmem:[%s342 + $0xa0] sm:$0xff]
          %v3416 = vld [vmem:[%s342 + $0xa8] sm:$0xff]
          %v3417 = vld [vmem:[%s342 + $0xb0] sm:$0xff]
          %v3418 = vld [vmem:[%s342 + $0xb8] sm:$0xff]
          %v3419 = vld [vmem:[%s342 + $0xc0] sm:$0xff]
          %v3420 = vld [vmem:[%s342 + $0xc8] sm:$0xff]
          %v3421 = vld [vmem:[%s342 + $0xd0] sm:$0xff]
          %v3422 = vld [vmem:[%s342 + $0xd8] sm:$0xff]
          %v3423 = vld [vmem:[%s342 + $0xe0] sm:$0xff]
          %v3424 = vld [vmem:[%s342 + $0xe8] sm:$0xff]
          %v3425 = vld [vmem:[%s342 + $0xf0] sm:$0xff]
          %v3426 = vld [vmem:[%s342 + $0xf8] sm:$0xff]
          %v3427 = vadd.f32 %v3395, %v3317
          %v3428 = vadd.f32 %v3396, %v3319
          %v3429 = vadd.f32 %v3397, %v3321
          %v3430 = vadd.f32 %v3398, %v3323
          %v3431 = vadd.f32 %v3399, %v3327
          %v3432 = vadd.f32 %v3400, %v3329
          %v3433 = vadd.f32 %v3401, %v3331
          %v3434 = vadd.f32 %v3402, %v3333
          %v3435 = vadd.f32 %v3403, %v3337
          %v3436 = vadd.f32 %v3404, %v3339
          %v3437 = vadd.f32 %v3405, %v3341
          %v3438 = vadd.f32 %v3406, %v3343
          %v3439 = vadd.f32 %v3407, %v3347
          %v3440 = vadd.f32 %v3408, %v3349
          %v3441 = vadd.f32 %v3409, %v3351
          %v3442 = vadd.f32 %v3410, %v3353
          %v3443 = vadd.f32 %v3411, %v3357
          %v3444 = vadd.f32 %v3412, %v3359
          %v3445 = vadd.f32 %v3413, %v3361
          %v3446 = vadd.f32 %v3414, %v3363
          %v3447 = vadd.f32 %v3415, %v3367
          %v3448 = vadd.f32 %v3416, %v3369
          %v3449 = vadd.f32 %v3417, %v3371
          %v3450 = vadd.f32 %v3418, %v3373
          %v3451 = vadd.f32 %v3419, %v3377
          %v3452 = vadd.f32 %v3420, %v3379
          %v3453 = vadd.f32 %v3421, %v3381
          %v3454 = vadd.f32 %v3422, %v3383
          %v3455 = vadd.f32 %v3423, %v3387
          %v3456 = vadd.f32 %v3424, %v3389
          %v3457 = vadd.f32 %v3425, %v3391
          %v3458 = vadd.f32 %v3426, %v3393
          %3459 = vst [vmem:[%s337] sm:$0xff] %v3427
          %3460 = vst [vmem:[%s337 + $0x8] sm:$0xff] %v3428
          %3461 = vst [vmem:[%s337 + $0x10] sm:$0xff] %v3429
          %3462 = vst [vmem:[%s337 + $0x18] sm:$0xff] %v3430
          %3463 = vst [vmem:[%s337 + $0x20] sm:$0xff] %v3431
          %3464 = vst [vmem:[%s337 + $0x28] sm:$0xff] %v3432
          %3465 = vst [vmem:[%s337 + $0x30] sm:$0xff] %v3433
          %3466 = vst [vmem:[%s337 + $0x38] sm:$0xff] %v3434
          %3467 = vst [vmem:[%s337 + $0x40] sm:$0xff] %v3435
          %3468 = vst [vmem:[%s337 + $0x48] sm:$0xff] %v3436
          %3469 = vst [vmem:[%s337 + $0x50] sm:$0xff] %v3437
          %3470 = vst [vmem:[%s337 + $0x58] sm:$0xff] %v3438
          %3471 = vst [vmem:[%s337 + $0x60] sm:$0xff] %v3439
          %3472 = vst [vmem:[%s337 + $0x68] sm:$0xff] %v3440
          %3473 = vst [vmem:[%s337 + $0x70] sm:$0xff] %v3441
          %3474 = vst [vmem:[%s337 + $0x78] sm:$0xff] %v3442
          %3475 = vst [vmem:[%s337 + $0x80] sm:$0xff] %v3443
          %3476 = vst [vmem:[%s337 + $0x88] sm:$0xff] %v3444
          %3477 = vst [vmem:[%s337 + $0x90] sm:$0xff] %v3445
          %3478 = vst [vmem:[%s337 + $0x98] sm:$0xff] %v3446
          %3479 = vst [vmem:[%s337 + $0xa0] sm:$0xff] %v3447
          %3480 = vst [vmem:[%s337 + $0xa8] sm:$0xff] %v3448
          %3481 = vst [vmem:[%s337 + $0xb0] sm:$0xff] %v3449
          %3482 = vst [vmem:[%s337 + $0xb8] sm:$0xff] %v3450
          %3483 = vst [vmem:[%s337 + $0xc0] sm:$0xff] %v3451
          %3484 = vst [vmem:[%s337 + $0xc8] sm:$0xff] %v3452
          %3485 = vst [vmem:[%s337 + $0xd0] sm:$0xff] %v3453
          %3486 = vst [vmem:[%s337 + $0xd8] sm:$0xff] %v3454
          %3487 = vst [vmem:[%s337 + $0xe0] sm:$0xff] %v3455
          %3488 = vst [vmem:[%s337 + $0xe8] sm:$0xff] %v3456
          %3489 = vst [vmem:[%s337 + $0xf0] sm:$0xff] %v3457
          %3490 = vst [vmem:[%s337 + $0xf8] sm:$0xff] %v3458
        $region64: #{tpu_custom_call.1} parent=55 // pred_fallthru
          _
        %s3491 = sand.u32 %s237, 1
        %s3492 = scalar_lea.sflag [#allocation4], %s3491
        %s3493 = sand.u32 %s237, 1
        %s3494 = smul.addr %s3493, 256
        %s3495 = scalar_lea.vmem [#allocation3], %s3494
        // Predicated region
        $region65: #{tpu_custom_call.1} parent=55 // pred_check
          %p3496 = pneg %p247
        $region66: #{tpu_custom_call.1} parent=55 // pred_check_branch
          %3498 = sbr.rel (%p3496) target = $region68
        $region67: #{tpu_custom_call.1} parent=55 // pred_region
          %s3500 = ssub.s32 4096, 4096
          %3501 = vsyncadd %s3492, %s3500
          %s3502 = smul.addr %s27, 32
          %s3503 = smul.addr %s3502, 128
          %s3504 = scalar_lea.hbm %s9, %s3503
          %s3505 = sshll.u32 %s3495, 4
          %s3506 = int_to_ptr.vmem [resolvable:$true] %s3505
          %3511 = dma.vmem_to_hbm [thread:$0]  %s3506, 4096, %s3504, %s3492, 256, 256, 16
        $region68: #{tpu_custom_call.1} parent=55 // pred_fallthru
          _
      $region56: #{tpu_custom_call.1} parent=5 // pred_fallthru
        _
      %p3512 = scmp.le.s32.totalorder 2, %s18
      // Predicated region
      $region69: #{tpu_custom_call.1} parent=5 // pred_check
        %p3513 = pneg %p3512
      $region70: #{tpu_custom_call.1} parent=5 // pred_check_branch
        %3515 = sbr.rel (%p3513) target = $region72
      $region71: #{tpu_custom_call.1} parent=5 // pred_region
        %s3516 = ssub.s32 %s18, 2
        // Predicated region
        $region73: #{tpu_custom_call.1} parent=71 // pred_check
          %p3517 = pneg %p253
        $region74: #{tpu_custom_call.1} parent=71 // pred_check_branch
          %3519 = sbr.rel (%p3517) target = $region76
        $region75: #{tpu_custom_call.1} parent=71 // pred_region
          %s3520 = sand.u32 %s238, 1
          %s3521 = scalar_lea.sflag [#allocation4], %s3520
          %s3522 = sand.u32 %s238, 1
          %s3523 = smul.addr %s3522, 256
          %s3524 = scalar_lea.vmem [#allocation3], %s3523
          %3525 = dma.done %s3521, 4096
        $region76: #{tpu_custom_call.1} parent=71 // pred_fallthru
          _
      $region72: #{tpu_custom_call.1} parent=5 // pred_fallthru
        _
    $region6: #{tpu_custom_call.1} parent=1 // loop_footer
      %s22 = sadd.s32 1, %s18
    $region7: #{tpu_custom_call.1} parent=1 // loop_footer_branch
      %17 = sbr.rel target = $region3
    $region8: #{tpu_custom_call.1} parent=1 // loop_exit
      _
    %3526 = vsyncpa [#allocation4], 1
    %s3527 = scalar_lea.sflag [#allocation4], 1
    %3528 = vsyncpa %s3527, 1

</llo_original>
